<compile_context>
chip_gen: v6e
topology: v6e:2x2x1
jax: 0.10.0
libtpu: 0.0.40
codegen_flags: <defaults>
</compile_context>

<pallas_src>
import functools

import jax
import jax.numpy as jnp
from jax import lax
from jax.experimental import pallas as pl
from jax.experimental.pallas import tpu as pltpu

ALPHA = 0.5
_VMEM_LIMIT = 32 * 1024 * 1024   # safe on v5e/v6e (128 MiB) and v7x (64 MiB)
_TM = 1024                       # LPIPS matmul row tile (per review: 256 -> 1024)
_ROW_TILE = 2048                 # reduction row tile (per review: 512 -> 2048)


def _round_up(n, m):
    return ((n + m - 1) // m) * m


# ----------------------------------------------------------------------------
# Kernel A: image L1 — per-block (8,128) vector partials, "parallel" grid axis
# ----------------------------------------------------------------------------
def _img_l1_partial_kernel(rows, tile, a_ref, b_ref, out_ref):
    d = jnp.abs(a_ref[...] - b_ref[...])
    if rows % tile != 0:
        # Ragged last block: garbage rows from the boundary DMA are masked out.
        rid = pl.program_id(0) * tile + lax.broadcasted_iota(jnp.int32, (tile, 1), 0)
        d = jnp.where(rid < rows, d, 0.0)
    # Sublane-aligned fold (tile,128) -> (8,128): pure VPU vreg adds.
    out_ref[...] = jnp.sum(d.reshape(tile // 8, 8, 128), axis=0).reshape(1, 8, 128)


def _l1_mean_images(a, b):
    n = a.size
    af = a.astype(jnp.float32).reshape(-1)
    bf = b.astype(jnp.float32).reshape(-1)
    if n % 128 != 0:
        # TODO(synk): lane-ragged tail falls back to a padding copy; the common
        #             (multiple-of-128) path is a free bitcast reshape.
        pad = 128 - n % 128
        af = jnp.pad(af, (0, pad))
        bf = jnp.pad(bf, (0, pad))
    rows = af.shape[0] // 128
    a2 = af.reshape(rows, 128)
    b2 = bf.reshape(rows, 128)

    tile = min(_ROW_TILE, _round_up(rows, 8))
    grid_m = pl.cdiv(rows, tile)

    partials = pl.pallas_call(
        functools.partial(_img_l1_partial_kernel, rows, tile),
        out_shape=jax.ShapeDtypeStruct((grid_m, 8, 128), jnp.float32),
        grid=(grid_m,),
        in_specs=[
            pl.BlockSpec((tile, 128), lambda i: (i, 0)),
            pl.BlockSpec((tile, 128), lambda i: (i, 0)),
        ],
        out_specs=pl.BlockSpec((1, 8, 128), lambda i: (i, 0, 0)),
        compiler_params=pltpu.CompilerParams(
            dimension_semantics=("parallel",),   # v7x: shard row blocks across 2 TCs
            vmem_limit_bytes=_VMEM_LIMIT,
        ),
    )(a2, b2)
    return jnp.sum(partials) / n


# ----------------------------------------------------------------------------
# Kernel B: tiny reductions (variable L1 sum + KL sum), single step, unpadded
# ----------------------------------------------------------------------------
def _small_sums_kernel(pv_ref, tv_ref, mu_ref, lv_ref, var_ref, kl_ref):
    var_ref[0, 0] = jnp.sum(jnp.abs(pv_ref[...] - tv_ref[...]))
    lv = lv_ref[...]
    mu = mu_ref[...]
    kl_ref[0, 0] = jnp.sum(1.0 + lv - mu * mu - jnp.exp(lv))


def _small_sums(pred_vars, true_vars, mu, logvar):
    pv = pred_vars.astype(jnp.float32).reshape(1, -1)
    tv = true_vars.astype(jnp.float32).reshape(1, -1)
    mus = mu.astype(jnp.float32).reshape(1, -1)
    lvs = logvar.astype(jnp.float32).reshape(1, -1)

    smem = pltpu.MemorySpace.SMEM
    var_s, kl_s = pl.pallas_call(
        _small_sums_kernel,
        out_shape=(jax.ShapeDtypeStruct((1, 1), jnp.float32),
                   jax.ShapeDtypeStruct((1, 1), jnp.float32)),
        grid=(1,),
        in_specs=[
            pl.BlockSpec(pv.shape, lambda i: (0, 0)),
            pl.BlockSpec(tv.shape, lambda i: (0, 0)),
            pl.BlockSpec(mus.shape, lambda i: (0, 0)),
            pl.BlockSpec(lvs.shape, lambda i: (0, 0)),
        ],
        out_specs=(
            pl.BlockSpec((1, 1), lambda i: (0, 0), memory_space=smem),
            pl.BlockSpec((1, 1), lambda i: (0, 0), memory_space=smem),
        ),
        compiler_params=pltpu.CompilerParams(
            dimension_semantics=("arbitrary",),
            vmem_limit_bytes=_VMEM_LIMIT,
        ),
    )(pv, tv, mus, lvs)
    return var_s[0, 0], kl_s[0, 0]


# ----------------------------------------------------------------------------
# Kernel C: LPIPS backbone layer (conv+ReLU for rec AND orig, shared resident
#           weights) fused with the LPIPS per-layer distance epilogue.
#           Exact (M,K)/(M,N) shapes -> no padded-slab HBM round trips.
# ----------------------------------------------------------------------------
def _lpips_conv_dist_kernel(M, tm, pr_ref, po_ref, w_ref, b_ref, lw_ref,
                            fr_ref, fo_ref, dist_ref, acc_ref):
    step = pl.program_id(0)

    @pl.when(step == 0)
    def _():
        acc_ref[...] = jnp.zeros_like(acc_ref)

    w = w_ref[...]
    bias = b_ref[...]
    # TODO(synk): MXU micro-opt — stack pr/po tiles into one (2*tm,K) LHS per
    #             held RHS; skipped (MXU is not the binding unit here).
    fr = jnp.maximum(
        jnp.dot(pr_ref[...], w, preferred_element_type=jnp.float32) + bias, 0.0)
    fo = jnp.maximum(
        jnp.dot(po_ref[...], w, preferred_element_type=jnp.float32) + bias, 0.0)
    fr_ref[...] = fr.astype(fr_ref.dtype)
    fo_ref[...] = fo.astype(fo_ref.dtype)

    # LPIPS distance epilogue: unit-normalize along channels, squared diff,
    # non-negative per-channel weights, accumulate into a VMEM vector acc.
    nr = fr * lax.rsqrt(jnp.sum(fr * fr, axis=-1, keepdims=True) + 1e-12)
    no = fo * lax.rsqrt(jnp.sum(fo * fo, axis=-1, keepdims=True) + 1e-12)
    d2w = ((nr - no) ** 2) * lw_ref[...]
    if M % tm != 0:
        rid = step * tm + lax.broadcasted_iota(jnp.int32, (tm, 1), 0)
        d2w = jnp.where(rid < M, d2w, 0.0)
    n_out = d2w.shape[-1]
    acc_ref[...] += jnp.sum(d2w.reshape(tm // 8, 8, n_out), axis=0)

    @pl.when(step == pl.num_programs(0) - 1)
    def _():
        dist_ref[0, 0] = jnp.sum(acc_ref[...])


def _lpips_layer(pr, po, w2d, bias, lin_w):
    M, K = pr.shape
    N = w2d.shape[1]
    tm = min(_TM, _round_up(M, 8))
    grid_m = pl.cdiv(M, tm)

    w = w2d.astype(jnp.bfloat16)
    b2 = bias.astype(jnp.float32).reshape(1, N)
    lw2 = lin_w.astype(jnp.float32).reshape(1, N)

    smem = pltpu.MemorySpace.SMEM
    fr, fo, dist = pl.pallas_call(
        functools.partial(_lpips_conv_dist_kernel, M, tm),
        out_shape=(
            jax.ShapeDtypeStruct((M, N), jnp.bfloat16),
            jax.ShapeDtypeStruct((M, N), jnp.bfloat16),
            jax.ShapeDtypeStruct((1, 1), jnp.float32),
        ),
        grid=(grid_m,),
        in_specs=[
            pl.BlockSpec((tm, K), lambda i: (i, 0)),
            pl.BlockSpec((tm, K), lambda i: (i, 0)),
            pl.BlockSpec((K, N), lambda i: (0, 0)),   # weights resident
            pl.BlockSpec((1, N), lambda i: (0, 0)),
            pl.BlockSpec((1, N), lambda i: (0, 0)),
        ],
        out_specs=(
            pl.BlockSpec((tm, N), lambda i: (i, 0)),
            pl.BlockSpec((tm, N), lambda i: (i, 0)),
            pl.BlockSpec((1, 1), lambda i: (0, 0), memory_space=smem),
        ),
        scratch_shapes=[pltpu.VMEM((8, N), jnp.float32)],
        compiler_params=pltpu.CompilerParams(
            dimension_semantics=("arbitrary",),
            vmem_limit_bytes=_VMEM_LIMIT,
        ),
    )(pr, po, w, b2, lw2)
    return fr, fo, dist[0, 0]


# ----------------------------------------------------------------------------
# LPIPS (reduced AlexNet-style backbone, NHWC / bf16 end-to-end)
# ----------------------------------------------------------------------------
_LPIPS_SHIFT = jnp.array([-0.030, -0.088, -0.188], jnp.float32)
_LPIPS_SCALE = jnp.array([0.458, 0.448, 0.450], jnp.float32)
_LPIPS_STRIDES = (1, 2, 2)


def _im2col_nhwc(x, kh, kw, stride, pad):
    """x: (B, H, W, C) -> bf16 (B*Ho*Wo, kh*kw*C) patches, plus Ho, Wo."""
    B, H, W, C = x.shape
    xp = jnp.pad(x, ((0, 0), (pad, pad), (pad, pad), (0, 0)))
    Ho = (H + 2 * pad - kh) // stride + 1
    Wo = (W + 2 * pad - kw) // stride + 1
    cols = []
    for i in range(kh):
        for j in range(kw):
            cols.append(xp[:, i:i + stride * Ho:stride, j:j + stride * Wo:stride, :])
    col = jnp.stack(cols, axis=3)               # (B, Ho, Wo, kh*kw, C)
    # bf16 cast fused into the patch producer -> single HBM write of the slab.
    return col.reshape(B * Ho * Wo, kh * kw * C).astype(jnp.bfloat16), Ho, Wo


def pallas_lpips(rec, orig, conv_ws, conv_bs, lin_ws):
    B = rec.shape[0]
    # Single NCHW -> NHWC transpose per image + LPIPS input scaling layer.
    xr = (rec.transpose(0, 2, 3, 1) - _LPIPS_SHIFT) / _LPIPS_SCALE
    xo = (orig.transpose(0, 2, 3, 1) - _LPIPS_SHIFT) / _LPIPS_SCALE

    total = jnp.float32(0.0)
    for w, b, lw, stride in zip(conv_ws, conv_bs, lin_ws, _LPIPS_STRIDES):
        Cout, Cin, kh, kw = w.shape
        pr, Ho, Wo = _im2col_nhwc(xr, kh, kw, stride, pad=1)
        po, _, _ = _im2col_nhwc(xo, kh, kw, stride, pad=1)
        w2d = w.transpose(2, 3, 1, 0).reshape(kh * kw * Cin, Cout)
        fr, fo, dist = _lpips_layer(pr, po, w2d, b, lw)
        total = total + dist / (B * Ho * Wo)     # spatial mean then batch mean
        xr = fr.reshape(B, Ho, Wo, Cout)         # exact shape: free reshape, no slice
        xo = fo.reshape(B, Ho, Wo, Cout)
    return total


# ----------------------------------------------------------------------------
# myLoss forward
# ----------------------------------------------------------------------------
@functools.partial(jax.jit, static_argnames=("alpha",))
def my_loss(rec, orig, pred_vars, true_vars, mu, logvar,
            conv_ws, conv_bs, lin_ws, alpha=ALPHA):
    loss_images = _l1_mean_images(rec, orig)
    var_sum, kl_sum = _small_sums(pred_vars, true_vars, mu, logvar)
    loss_variables = var_sum / pred_vars.size
    kl_divergence = -0.5 * (kl_sum / mu.size) * 0.01
    lpips_loss = pallas_lpips(rec, orig, conv_ws, conv_bs, lin_ws)
    total_loss = ((1.0 - alpha) * (loss_images + kl_divergence + lpips_loss)
                  + alpha * loss_variables)
    return loss_images, lpips_loss, kl_divergence, loss_variables, total_loss


def _init_lpips_params(key):
    """Deterministic stand-in for LPIPS(net='alex') parameters."""
    chans = [(3, 8), (8, 16), (16, 32)]          # (Cin, Cout); strides in _LPIPS_STRIDES
    conv_ws, conv_bs, lin_ws = [], [], []
    for cin, cout in chans:
        key, kw_, kb, kl = jax.random.split(key, 4)
        fan_in = cin * 9
        w = jax.random.normal(kw_, (cout, cin, 3, 3), jnp.float32) / jnp.sqrt(fan_in)
        b = 0.01 * jax.random.normal(kb, (cout,), jnp.float32)
        lw = jnp.abs(jax.random.normal(kl, (cout,), jnp.float32)) / cout
        conv_ws.append(w)
        conv_bs.append(b)
        lin_ws.append(lw)
    return tuple(conv_ws), tuple(conv_bs), tuple(lin_ws)


if __name__ == "__main__":
    key = jax.random.PRNGKey(0)
    k_rec, k_org, k_pv, k_tv, k_mu, k_lv, k_par = jax.random.split(key, 7)

    B, C, H, W = 2, 3, 16, 16
    n_vars, latent = 8, 32

    reconstructed_images = jax.random.uniform(k_rec, (B, C, H, W), jnp.float32,
                                              minval=-1.0, maxval=1.0)
    original_images = jax.random.uniform(k_org, (B, C, H, W), jnp.float32,
                                         minval=-1.0, maxval=1.0)
    predicted_variables = jax.random.normal(k_pv, (B, n_vars), jnp.float32)
    true_variables = jax.random.normal(k_tv, (B, n_vars), jnp.float32)
    mu = jax.random.normal(k_mu, (B, latent), jnp.float32)
    logvar = 0.1 * jax.random.normal(k_lv, (B, latent), jnp.float32)

    conv_ws, conv_bs, lin_ws = _init_lpips_params(k_par)

    outs = my_loss(reconstructed_images, original_images,
                   predicted_variables, true_variables, mu, logvar,
                   conv_ws, conv_bs, lin_ws, alpha=ALPHA)
    outs = jax.block_until_ready(outs)

    assert all(bool(jnp.isfinite(o)) for o in outs)
    print("KERNEL_OK")
</pallas_src>

<mosaic_0001>
module attributes {stable_mosaic.version = 11 : i64} {
  func.func @_lpips_conv_dist_kernel(%arg0: i32, %arg1: memref<512x27xbf16, #tpu.memory_space<vmem>>, %arg2: memref<512x27xbf16, #tpu.memory_space<vmem>>, %arg3: memref<27x8xbf16, #tpu.memory_space<vmem>>, %arg4: memref<1x8xf32, #tpu.memory_space<vmem>>, %arg5: memref<1x8xf32, #tpu.memory_space<vmem>>, %arg6: memref<512x8xbf16, #tpu.memory_space<vmem>>, %arg7: memref<512x8xbf16, #tpu.memory_space<vmem>>, %arg8: memref<1x1xf32, #tpu.memory_space<smem>>, %arg9: memref<8x8xf32, #tpu.memory_space<vmem>>) attributes {dimension_semantics = [#tpu.dimension_semantics<arbitrary>], iteration_bounds = array<i64: 1>, scalar_prefetch = 0 : i64, scratch_operands = 1 : i64, tpu.core_type = #tpu.core_type<tc>, window_params = [{transform_indices = @transform_0, window_bounds = array<i64: 512, 27>}, {transform_indices = @transform_1, window_bounds = array<i64: 512, 27>}, {pipeline_mode = #tpu.pipeline_mode<synchronous>, transform_indices = @transform_2, window_bounds = array<i64: 27, 8>}, {pipeline_mode = #tpu.pipeline_mode<synchronous>, transform_indices = @transform_3, window_bounds = array<i64: 1, 8>}, {pipeline_mode = #tpu.pipeline_mode<synchronous>, transform_indices = @transform_4, window_bounds = array<i64: 1, 8>}, {transform_indices = @transform_5, window_bounds = array<i64: 512, 8>}, {transform_indices = @transform_6, window_bounds = array<i64: 512, 8>}, {transform_indices = @transform_7, window_bounds = array<i64: 1, 1>}]} {
    %c0_i32 = arith.constant 0 : i32
    %0 = arith.cmpi eq, %arg0, %c0_i32 : i32
    %1 = arith.extui %0 : i1 to i32
    %c0_i32_0 = arith.constant 0 : i32
    %2 = arith.cmpi ne, %1, %c0_i32_0 : i32
    scf.if %2 {
      %cst_28 = arith.constant 0.000000e+00 : f32
      %50 = vector.broadcast %cst_28 : f32 to vector<8x8xf32>
      %c0_29 = arith.constant 0 : index
      %c0_30 = arith.constant 0 : index
      %51 = vector.load %arg9[%c0_29, %c0_30] : memref<8x8xf32, #tpu.memory_space<vmem>>, vector<8x8xf32>
      tpu.vector_store %arg9[%c0_29, %c0_30], %50 {strides = array<i32>} : memref<8x8xf32, #tpu.memory_space<vmem>>, vector<8x8xf32>,
    } else {
    }
    %c0 = arith.constant 0 : index
    %c0_1 = arith.constant 0 : index
    %3 = vector.load %arg3[%c0, %c0_1] : memref<27x8xbf16, #tpu.memory_space<vmem>>, vector<27x8xbf16>
    %c0_2 = arith.constant 0 : index
    %c0_3 = arith.constant 0 : index
    %4 = vector.load %arg4[%c0_2, %c0_3] : memref<1x8xf32, #tpu.memory_space<vmem>>, vector<1x8xf32>
    %c0_4 = arith.constant 0 : index
    %c0_5 = arith.constant 0 : index
    %5 = vector.load %arg1[%c0_4, %c0_5] : memref<512x27xbf16, #tpu.memory_space<vmem>>, vector<512x27xbf16>
    %cst = arith.constant dense<0.000000e+00> : vector<512x8xf32>
    %6 = tpu.matmul %5, %3, %cst {dimension_numbers = #tpu.dot_dimension_numbers<[1], [0], [0], [1], [0, 0, 1, 1], [], []>} : vector<512x27xbf16>, vector<27x8xbf16>, vector<512x8xf32> -> vector<512x8xf32>
    %7 = vector.broadcast %4 : vector<1x8xf32> to vector<512x8xf32>
    %8 = arith.addf %6, %7 : vector<512x8xf32>
    %cst_6 = arith.constant 0.000000e+00 : f32
    %9 = vector.broadcast %cst_6 : f32 to vector<512x8xf32>
    %10 = arith.maximumf %8, %9 : vector<512x8xf32>
    %c0_7 = arith.constant 0 : index
    %c0_8 = arith.constant 0 : index
    %11 = vector.load %arg2[%c0_7, %c0_8] : memref<512x27xbf16, #tpu.memory_space<vmem>>, vector<512x27xbf16>
    %cst_9 = arith.constant dense<0.000000e+00> : vector<512x8xf32>
    %12 = tpu.matmul %11, %3, %cst_9 {dimension_numbers = #tpu.dot_dimension_numbers<[1], [0], [0], [1], [0, 0, 1, 1], [], []>} : vector<512x27xbf16>, vector<27x8xbf16>, vector<512x8xf32> -> vector<512x8xf32>
    %13 = vector.broadcast %4 : vector<1x8xf32> to vector<512x8xf32>
    %14 = arith.addf %12, %13 : vector<512x8xf32>
    %cst_10 = arith.constant 0.000000e+00 : f32
    %15 = vector.broadcast %cst_10 : f32 to vector<512x8xf32>
    %16 = arith.maximumf %14, %15 : vector<512x8xf32>
    %17 = arith.truncf %10 : vector<512x8xf32> to vector<512x8xbf16>
    %c0_11 = arith.constant 0 : index
    %c0_12 = arith.constant 0 : index
    %18 = vector.load %arg6[%c0_11, %c0_12] : memref<512x8xbf16, #tpu.memory_space<vmem>>, vector<512x8xbf16>
    tpu.vector_store %arg6[%c0_11, %c0_12], %17 {strides = array<i32>} : memref<512x8xbf16, #tpu.memory_space<vmem>>, vector<512x8xbf16>,
    %19 = arith.truncf %16 : vector<512x8xf32> to vector<512x8xbf16>
    %c0_13 = arith.constant 0 : index
    %c0_14 = arith.constant 0 : index
    %20 = vector.load %arg7[%c0_13, %c0_14] : memref<512x8xbf16, #tpu.memory_space<vmem>>, vector<512x8xbf16>
    tpu.vector_store %arg7[%c0_13, %c0_14], %19 {strides = array<i32>} : memref<512x8xbf16, #tpu.memory_space<vmem>>, vector<512x8xbf16>,
    %21 = arith.mulf %10, %10 : vector<512x8xf32>
    %cst_15 = arith.constant dense<0.000000e+00> : vector<512xf32>
    %22 = vector.multi_reduction <add>, %21, %cst_15 [1] : vector<512x8xf32> to vector<512xf32>
    %23 = vector.shape_cast %22 : vector<512xf32> to vector<512x1xf32>
    %cst_16 = arith.constant 9.99999996E-13 : f32
    %24 = vector.broadcast %cst_16 : f32 to vector<512x1xf32>
    %25 = arith.addf %23, %24 : vector<512x1xf32>
    %26 = math.rsqrt %25 : vector<512x1xf32>
    %27 = vector.broadcast %26 : vector<512x1xf32> to vector<512x8xf32>
    %28 = arith.mulf %10, %27 : vector<512x8xf32>
    %29 = arith.mulf %16, %16 : vector<512x8xf32>
    %cst_17 = arith.constant dense<0.000000e+00> : vector<512xf32>
    %30 = vector.multi_reduction <add>, %29, %cst_17 [1] : vector<512x8xf32> to vector<512xf32>
    %31 = vector.shape_cast %30 : vector<512xf32> to vector<512x1xf32>
    %cst_18 = arith.constant 9.99999996E-13 : f32
    %32 = vector.broadcast %cst_18 : f32 to vector<512x1xf32>
    %33 = arith.addf %31, %32 : vector<512x1xf32>
    %34 = math.rsqrt %33 : vector<512x1xf32>
    %35 = vector.broadcast %34 : vector<512x1xf32> to vector<512x8xf32>
    %36 = arith.mulf %16, %35 : vector<512x8xf32>
    %37 = arith.subf %28, %36 : vector<512x8xf32>
    %38 = arith.mulf %37, %37 : vector<512x8xf32>
    %c0_19 = arith.constant 0 : index
    %c0_20 = arith.constant 0 : index
    %39 = vector.load %arg5[%c0_19, %c0_20] : memref<1x8xf32, #tpu.memory_space<vmem>>, vector<1x8xf32>
    %40 = vector.broadcast %39 : vector<1x8xf32> to vector<512x8xf32>
    %41 = arith.mulf %38, %40 : vector<512x8xf32>
    %c0_21 = arith.constant 0 : index
    %c0_22 = arith.constant 0 : index
    %42 = vector.load %arg9[%c0_21, %c0_22] : memref<8x8xf32, #tpu.memory_space<vmem>>, vector<8x8xf32>
    %43 = vector.shape_cast %41 : vector<512x8xf32> to vector<64x8x8xf32>
    %cst_23 = arith.constant dense<0.000000e+00> : vector<8x8xf32>
    %44 = vector.multi_reduction <add>, %43, %cst_23 [0] : vector<64x8x8xf32> to vector<8x8xf32>
    %45 = arith.addf %42, %44 : vector<8x8xf32>
    %c0_24 = arith.constant 0 : index
    %c0_25 = arith.constant 0 : index
    %46 = vector.load %arg9[%c0_24, %c0_25] : memref<8x8xf32, #tpu.memory_space<vmem>>, vector<8x8xf32>
    tpu.vector_store %arg9[%c0_24, %c0_25], %45 {strides = array<i32>} : memref<8x8xf32, #tpu.memory_space<vmem>>, vector<8x8xf32>,
    %c0_i32_26 = arith.constant 0 : i32
    %47 = arith.cmpi eq, %arg0, %c0_i32_26 : i32
    %48 = arith.extui %47 : i1 to i32
    %c0_i32_27 = arith.constant 0 : i32
    %49 = arith.cmpi ne, %48, %c0_i32_27 : i32
    scf.if %49 {
      %c0_28 = arith.constant 0 : index
      %c0_29 = arith.constant 0 : index
      %50 = vector.load %arg9[%c0_28, %c0_29] : memref<8x8xf32, #tpu.memory_space<vmem>>, vector<8x8xf32>
      %51 = vector.shape_cast %50 : vector<8x8xf32> to vector<1x8x8xf32>
      %cst_30 = arith.constant dense<0.000000e+00> : vector<1xf32>
      %52 = vector.multi_reduction <add>, %51, %cst_30 [1, 2] : vector<1x8x8xf32> to vector<1xf32>
      %53 = vector.shape_cast %52 : vector<1xf32> to vector<1x1x1xf32>
      %54 = vector.extract %53[0, 0, 0] : f32 from vector<1x1x1xf32>
      %c0_31 = arith.constant 0 : index
      %c0_32 = arith.constant 0 : index
      %55 = memref.load %arg8[%c0_31, %c0_32] : memref<1x1xf32, #tpu.memory_space<smem>>
      memref.store %54, %arg8[%c0_31, %c0_32] : memref<1x1xf32, #tpu.memory_space<smem>>
    } else {
    }
    return
  }
  func.func @transform_0(%arg0: i32) -> (i32, i32) {
    %c0_i32 = arith.constant 0 : i32
    %c0_i32_0 = arith.constant 0 : i32
    return %arg0, %c0_i32 : i32, i32
  }
  func.func @transform_1(%arg0: i32) -> (i32, i32) {
    %c0_i32 = arith.constant 0 : i32
    %c0_i32_0 = arith.constant 0 : i32
    return %arg0, %c0_i32 : i32, i32
  }
  func.func @transform_2(%arg0: i32) -> (i32, i32) {
    %c0_i32 = arith.constant 0 : i32
    %c0_i32_0 = arith.constant 0 : i32
    %c0_i32_1 = arith.constant 0 : i32
    return %c0_i32, %c0_i32_0 : i32, i32
  }
  func.func @transform_3(%arg0: i32) -> (i32, i32) {
    %c0_i32 = arith.constant 0 : i32
    %c0_i32_0 = arith.constant 0 : i32
    %c0_i32_1 = arith.constant 0 : i32
    return %c0_i32, %c0_i32_0 : i32, i32
  }
  func.func @transform_4(%arg0: i32) -> (i32, i32) {
    %c0_i32 = arith.constant 0 : i32
    %c0_i32_0 = arith.constant 0 : i32
    %c0_i32_1 = arith.constant 0 : i32
    return %c0_i32, %c0_i32_0 : i32, i32
  }
  func.func @transform_5(%arg0: i32) -> (i32, i32) {
    %c0_i32 = arith.constant 0 : i32
    %c0_i32_0 = arith.constant 0 : i32
    return %arg0, %c0_i32 : i32, i32
  }
  func.func @transform_6(%arg0: i32) -> (i32, i32) {
    %c0_i32 = arith.constant 0 : i32
    %c0_i32_0 = arith.constant 0 : i32
    return %arg0, %c0_i32 : i32, i32
  }
  func.func @transform_7(%arg0: i32) -> (i32, i32) {
    %c0_i32 = arith.constant 0 : i32
    %c0_i32_0 = arith.constant 0 : i32
    %c0_i32_1 = arith.constant 0 : i32
    return %c0_i32, %c0_i32_0 : i32, i32
  }
}

module attributes {stable_mosaic.version = 11 : i64} {
  func.func @_lpips_conv_dist_kernel(%arg0: i32, %arg1: memref<128x72xbf16, #tpu.memory_space<vmem>>, %arg2: memref<128x72xbf16, #tpu.memory_space<vmem>>, %arg3: memref<72x16xbf16, #tpu.memory_space<vmem>>, %arg4: memref<1x16xf32, #tpu.memory_space<vmem>>, %arg5: memref<1x16xf32, #tpu.memory_space<vmem>>, %arg6: memref<128x16xbf16, #tpu.memory_space<vmem>>, %arg7: memref<128x16xbf16, #tpu.memory_space<vmem>>, %arg8: memref<1x1xf32, #tpu.memory_space<smem>>, %arg9: memref<8x16xf32, #tpu.memory_space<vmem>>) attributes {dimension_semantics = [#tpu.dimension_semantics<arbitrary>], iteration_bounds = array<i64: 1>, scalar_prefetch = 0 : i64, scratch_operands = 1 : i64, tpu.core_type = #tpu.core_type<tc>, window_params = [{transform_indices = @transform_0, window_bounds = array<i64: 128, 72>}, {transform_indices = @transform_1, window_bounds = array<i64: 128, 72>}, {pipeline_mode = #tpu.pipeline_mode<synchronous>, transform_indices = @transform_2, window_bounds = array<i64: 72, 16>}, {pipeline_mode = #tpu.pipeline_mode<synchronous>, transform_indices = @transform_3, window_bounds = array<i64: 1, 16>}, {pipeline_mode = #tpu.pipeline_mode<synchronous>, transform_indices = @transform_4, window_bounds = array<i64: 1, 16>}, {transform_indices = @transform_5, window_bounds = array<i64: 128, 16>}, {transform_indices = @transform_6, window_bounds = array<i64: 128, 16>}, {transform_indices = @transform_7, window_bounds = array<i64: 1, 1>}]} {
    %c0_i32 = arith.constant 0 : i32
    %0 = arith.cmpi eq, %arg0, %c0_i32 : i32
    %1 = arith.extui %0 : i1 to i32
    %c0_i32_0 = arith.constant 0 : i32
    %2 = arith.cmpi ne, %1, %c0_i32_0 : i32
    scf.if %2 {
      %cst_28 = arith.constant 0.000000e+00 : f32
      %50 = vector.broadcast %cst_28 : f32 to vector<8x16xf32>
      %c0_29 = arith.constant 0 : index
      %c0_30 = arith.constant 0 : index
      %51 = vector.load %arg9[%c0_29, %c0_30] : memref<8x16xf32, #tpu.memory_space<vmem>>, vector<8x16xf32>
      tpu.vector_store %arg9[%c0_29, %c0_30], %50 {strides = array<i32>} : memref<8x16xf32, #tpu.memory_space<vmem>>, vector<8x16xf32>,
    } else {
    }
    %c0 = arith.constant 0 : index
    %c0_1 = arith.constant 0 : index
    %3 = vector.load %arg3[%c0, %c0_1] : memref<72x16xbf16, #tpu.memory_space<vmem>>, vector<72x16xbf16>
    %c0_2 = arith.constant 0 : index
    %c0_3 = arith.constant 0 : index
    %4 = vector.load %arg4[%c0_2, %c0_3] : memref<1x16xf32, #tpu.memory_space<vmem>>, vector<1x16xf32>
    %c0_4 = arith.constant 0 : index
    %c0_5 = arith.constant 0 : index
    %5 = vector.load %arg1[%c0_4, %c0_5] : memref<128x72xbf16, #tpu.memory_space<vmem>>, vector<128x72xbf16>
    %cst = arith.constant dense<0.000000e+00> : vector<128x16xf32>
    %6 = tpu.matmul %5, %3, %cst {dimension_numbers = #tpu.dot_dimension_numbers<[1], [0], [0], [1], [0, 0, 1, 1], [], []>} : vector<128x72xbf16>, vector<72x16xbf16>, vector<128x16xf32> -> vector<128x16xf32>
    %7 = vector.broadcast %4 : vector<1x16xf32> to vector<128x16xf32>
    %8 = arith.addf %6, %7 : vector<128x16xf32>
    %cst_6 = arith.constant 0.000000e+00 : f32
    %9 = vector.broadcast %cst_6 : f32 to vector<128x16xf32>
    %10 = arith.maximumf %8, %9 : vector<128x16xf32>
    %c0_7 = arith.constant 0 : index
    %c0_8 = arith.constant 0 : index
    %11 = vector.load %arg2[%c0_7, %c0_8] : memref<128x72xbf16, #tpu.memory_space<vmem>>, vector<128x72xbf16>
    %cst_9 = arith.constant dense<0.000000e+00> : vector<128x16xf32>
    %12 = tpu.matmul %11, %3, %cst_9 {dimension_numbers = #tpu.dot_dimension_numbers<[1], [0], [0], [1], [0, 0, 1, 1], [], []>} : vector<128x72xbf16>, vector<72x16xbf16>, vector<128x16xf32> -> vector<128x16xf32>
    %13 = vector.broadcast %4 : vector<1x16xf32> to vector<128x16xf32>
    %14 = arith.addf %12, %13 : vector<128x16xf32>
    %cst_10 = arith.constant 0.000000e+00 : f32
    %15 = vector.broadcast %cst_10 : f32 to vector<128x16xf32>
    %16 = arith.maximumf %14, %15 : vector<128x16xf32>
    %17 = arith.truncf %10 : vector<128x16xf32> to vector<128x16xbf16>
    %c0_11 = arith.constant 0 : index
    %c0_12 = arith.constant 0 : index
    %18 = vector.load %arg6[%c0_11, %c0_12] : memref<128x16xbf16, #tpu.memory_space<vmem>>, vector<128x16xbf16>
    tpu.vector_store %arg6[%c0_11, %c0_12], %17 {strides = array<i32>} : memref<128x16xbf16, #tpu.memory_space<vmem>>, vector<128x16xbf16>,
    %19 = arith.truncf %16 : vector<128x16xf32> to vector<128x16xbf16>
    %c0_13 = arith.constant 0 : index
    %c0_14 = arith.constant 0 : index
    %20 = vector.load %arg7[%c0_13, %c0_14] : memref<128x16xbf16, #tpu.memory_space<vmem>>, vector<128x16xbf16>
    tpu.vector_store %arg7[%c0_13, %c0_14], %19 {strides = array<i32>} : memref<128x16xbf16, #tpu.memory_space<vmem>>, vector<128x16xbf16>,
    %21 = arith.mulf %10, %10 : vector<128x16xf32>
    %cst_15 = arith.constant dense<0.000000e+00> : vector<128xf32>
    %22 = vector.multi_reduction <add>, %21, %cst_15 [1] : vector<128x16xf32> to vector<128xf32>
    %23 = vector.shape_cast %22 : vector<128xf32> to vector<128x1xf32>
    %cst_16 = arith.constant 9.99999996E-13 : f32
    %24 = vector.broadcast %cst_16 : f32 to vector<128x1xf32>
    %25 = arith.addf %23, %24 : vector<128x1xf32>
    %26 = math.rsqrt %25 : vector<128x1xf32>
    %27 = vector.broadcast %26 : vector<128x1xf32> to vector<128x16xf32>
    %28 = arith.mulf %10, %27 : vector<128x16xf32>
    %29 = arith.mulf %16, %16 : vector<128x16xf32>
    %cst_17 = arith.constant dense<0.000000e+00> : vector<128xf32>
    %30 = vector.multi_reduction <add>, %29, %cst_17 [1] : vector<128x16xf32> to vector<128xf32>
    %31 = vector.shape_cast %30 : vector<128xf32> to vector<128x1xf32>
    %cst_18 = arith.constant 9.99999996E-13 : f32
    %32 = vector.broadcast %cst_18 : f32 to vector<128x1xf32>
    %33 = arith.addf %31, %32 : vector<128x1xf32>
    %34 = math.rsqrt %33 : vector<128x1xf32>
    %35 = vector.broadcast %34 : vector<128x1xf32> to vector<128x16xf32>
    %36 = arith.mulf %16, %35 : vector<128x16xf32>
    %37 = arith.subf %28, %36 : vector<128x16xf32>
    %38 = arith.mulf %37, %37 : vector<128x16xf32>
    %c0_19 = arith.constant 0 : index
    %c0_20 = arith.constant 0 : index
    %39 = vector.load %arg5[%c0_19, %c0_20] : memref<1x16xf32, #tpu.memory_space<vmem>>, vector<1x16xf32>
    %40 = vector.broadcast %39 : vector<1x16xf32> to vector<128x16xf32>
    %41 = arith.mulf %38, %40 : vector<128x16xf32>
    %c0_21 = arith.constant 0 : index
    %c0_22 = arith.constant 0 : index
    %42 = vector.load %arg9[%c0_21, %c0_22] : memref<8x16xf32, #tpu.memory_space<vmem>>, vector<8x16xf32>
    %43 = vector.shape_cast %41 : vector<128x16xf32> to vector<16x8x16xf32>
    %cst_23 = arith.constant dense<0.000000e+00> : vector<8x16xf32>
    %44 = vector.multi_reduction <add>, %43, %cst_23 [0] : vector<16x8x16xf32> to vector<8x16xf32>
    %45 = arith.addf %42, %44 : vector<8x16xf32>
    %c0_24 = arith.constant 0 : index
    %c0_25 = arith.constant 0 : index
    %46 = vector.load %arg9[%c0_24, %c0_25] : memref<8x16xf32, #tpu.memory_space<vmem>>, vector<8x16xf32>
    tpu.vector_store %arg9[%c0_24, %c0_25], %45 {strides = array<i32>} : memref<8x16xf32, #tpu.memory_space<vmem>>, vector<8x16xf32>,
    %c0_i32_26 = arith.constant 0 : i32
    %47 = arith.cmpi eq, %arg0, %c0_i32_26 : i32
    %48 = arith.extui %47 : i1 to i32
    %c0_i32_27 = arith.constant 0 : i32
    %49 = arith.cmpi ne, %48, %c0_i32_27 : i32
    scf.if %49 {
      %c0_28 = arith.constant 0 : index
      %c0_29 = arith.constant 0 : index
      %50 = vector.load %arg9[%c0_28, %c0_29] : memref<8x16xf32, #tpu.memory_space<vmem>>, vector<8x16xf32>
      %51 = vector.shape_cast %50 : vector<8x16xf32> to vector<1x8x16xf32>
      %cst_30 = arith.constant dense<0.000000e+00> : vector<1xf32>
      %52 = vector.multi_reduction <add>, %51, %cst_30 [1, 2] : vector<1x8x16xf32> to vector<1xf32>
      %53 = vector.shape_cast %52 : vector<1xf32> to vector<1x1x1xf32>
      %54 = vector.extract %53[0, 0, 0] : f32 from vector<1x1x1xf32>
      %c0_31 = arith.constant 0 : index
      %c0_32 = arith.constant 0 : index
      %55 = memref.load %arg8[%c0_31, %c0_32] : memref<1x1xf32, #tpu.memory_space<smem>>
      memref.store %54, %arg8[%c0_31, %c0_32] : memref<1x1xf32, #tpu.memory_space<smem>>
    } else {
    }
    return
  }
  func.func @transform_0(%arg0: i32) -> (i32, i32) {
    %c0_i32 = arith.constant 0 : i32
    %c0_i32_0 = arith.constant 0 : i32
    return %arg0, %c0_i32 : i32, i32
  }
  func.func @transform_1(%arg0: i32) -> (i32, i32) {
    %c0_i32 = arith.constant 0 : i32
    %c0_i32_0 = arith.constant 0 : i32
    return %arg0, %c0_i32 : i32, i32
  }
  func.func @transform_2(%arg0: i32) -> (i32, i32) {
    %c0_i32 = arith.constant 0 : i32
    %c0_i32_0 = arith.constant 0 : i32
    %c0_i32_1 = arith.constant 0 : i32
    return %c0_i32, %c0_i32_0 : i32, i32
  }
  func.func @transform_3(%arg0: i32) -> (i32, i32) {
    %c0_i32 = arith.constant 0 : i32
    %c0_i32_0 = arith.constant 0 : i32
    %c0_i32_1 = arith.constant 0 : i32
    return %c0_i32, %c0_i32_0 : i32, i32
  }
  func.func @transform_4(%arg0: i32) -> (i32, i32) {
    %c0_i32 = arith.constant 0 : i32
    %c0_i32_0 = arith.constant 0 : i32
    %c0_i32_1 = arith.constant 0 : i32
    return %c0_i32, %c0_i32_0 : i32, i32
  }
  func.func @transform_5(%arg0: i32) -> (i32, i32) {
    %c0_i32 = arith.constant 0 : i32
    %c0_i32_0 = arith.constant 0 : i32
    return %arg0, %c0_i32 : i32, i32
  }
  func.func @transform_6(%arg0: i32) -> (i32, i32) {
    %c0_i32 = arith.constant 0 : i32
    %c0_i32_0 = arith.constant 0 : i32
    return %arg0, %c0_i32 : i32, i32
  }
  func.func @transform_7(%arg0: i32) -> (i32, i32) {
    %c0_i32 = arith.constant 0 : i32
    %c0_i32_0 = arith.constant 0 : i32
    %c0_i32_1 = arith.constant 0 : i32
    return %c0_i32, %c0_i32_0 : i32, i32
  }
}

module attributes {stable_mosaic.version = 11 : i64} {
  func.func @_lpips_conv_dist_kernel(%arg0: i32, %arg1: memref<32x144xbf16, #tpu.memory_space<vmem>>, %arg2: memref<32x144xbf16, #tpu.memory_space<vmem>>, %arg3: memref<144x32xbf16, #tpu.memory_space<vmem>>, %arg4: memref<1x32xf32, #tpu.memory_space<vmem>>, %arg5: memref<1x32xf32, #tpu.memory_space<vmem>>, %arg6: memref<32x32xbf16, #tpu.memory_space<vmem>>, %arg7: memref<32x32xbf16, #tpu.memory_space<vmem>>, %arg8: memref<1x1xf32, #tpu.memory_space<smem>>, %arg9: memref<8x32xf32, #tpu.memory_space<vmem>>) attributes {dimension_semantics = [#tpu.dimension_semantics<arbitrary>], iteration_bounds = array<i64: 1>, scalar_prefetch = 0 : i64, scratch_operands = 1 : i64, tpu.core_type = #tpu.core_type<tc>, window_params = [{transform_indices = @transform_0, window_bounds = array<i64: 32, 144>}, {transform_indices = @transform_1, window_bounds = array<i64: 32, 144>}, {pipeline_mode = #tpu.pipeline_mode<synchronous>, transform_indices = @transform_2, window_bounds = array<i64: 144, 32>}, {pipeline_mode = #tpu.pipeline_mode<synchronous>, transform_indices = @transform_3, window_bounds = array<i64: 1, 32>}, {pipeline_mode = #tpu.pipeline_mode<synchronous>, transform_indices = @transform_4, window_bounds = array<i64: 1, 32>}, {transform_indices = @transform_5, window_bounds = array<i64: 32, 32>}, {transform_indices = @transform_6, window_bounds = array<i64: 32, 32>}, {transform_indices = @transform_7, window_bounds = array<i64: 1, 1>}]} {
    %c0_i32 = arith.constant 0 : i32
    %0 = arith.cmpi eq, %arg0, %c0_i32 : i32
    %1 = arith.extui %0 : i1 to i32
    %c0_i32_0 = arith.constant 0 : i32
    %2 = arith.cmpi ne, %1, %c0_i32_0 : i32
    scf.if %2 {
      %cst_28 = arith.constant 0.000000e+00 : f32
      %50 = vector.broadcast %cst_28 : f32 to vector<8x32xf32>
      %c0_29 = arith.constant 0 : index
      %c0_30 = arith.constant 0 : index
      %51 = vector.load %arg9[%c0_29, %c0_30] : memref<8x32xf32, #tpu.memory_space<vmem>>, vector<8x32xf32>
      tpu.vector_store %arg9[%c0_29, %c0_30], %50 {strides = array<i32>} : memref<8x32xf32, #tpu.memory_space<vmem>>, vector<8x32xf32>,
    } else {
    }
    %c0 = arith.constant 0 : index
    %c0_1 = arith.constant 0 : index
    %3 = vector.load %arg3[%c0, %c0_1] : memref<144x32xbf16, #tpu.memory_space<vmem>>, vector<144x32xbf16>
    %c0_2 = arith.constant 0 : index
    %c0_3 = arith.constant 0 : index
    %4 = vector.load %arg4[%c0_2, %c0_3] : memref<1x32xf32, #tpu.memory_space<vmem>>, vector<1x32xf32>
    %c0_4 = arith.constant 0 : index
    %c0_5 = arith.constant 0 : index
    %5 = vector.load %arg1[%c0_4, %c0_5] : memref<32x144xbf16, #tpu.memory_space<vmem>>, vector<32x144xbf16>
    %cst = arith.constant dense<0.000000e+00> : vector<32x32xf32>
    %6 = tpu.matmul %5, %3, %cst {dimension_numbers = #tpu.dot_dimension_numbers<[1], [0], [0], [1], [0, 0, 1, 1], [], []>} : vector<32x144xbf16>, vector<144x32xbf16>, vector<32x32xf32> -> vector<32x32xf32>
    %7 = vector.broadcast %4 : vector<1x32xf32> to vector<32x32xf32>
    %8 = arith.addf %6, %7 : vector<32x32xf32>
    %cst_6 = arith.constant 0.000000e+00 : f32
    %9 = vector.broadcast %cst_6 : f32 to vector<32x32xf32>
    %10 = arith.maximumf %8, %9 : vector<32x32xf32>
    %c0_7 = arith.constant 0 : index
    %c0_8 = arith.constant 0 : index
    %11 = vector.load %arg2[%c0_7, %c0_8] : memref<32x144xbf16, #tpu.memory_space<vmem>>, vector<32x144xbf16>
    %cst_9 = arith.constant dense<0.000000e+00> : vector<32x32xf32>
    %12 = tpu.matmul %11, %3, %cst_9 {dimension_numbers = #tpu.dot_dimension_numbers<[1], [0], [0], [1], [0, 0, 1, 1], [], []>} : vector<32x144xbf16>, vector<144x32xbf16>, vector<32x32xf32> -> vector<32x32xf32>
    %13 = vector.broadcast %4 : vector<1x32xf32> to vector<32x32xf32>
    %14 = arith.addf %12, %13 : vector<32x32xf32>
    %cst_10 = arith.constant 0.000000e+00 : f32
    %15 = vector.broadcast %cst_10 : f32 to vector<32x32xf32>
    %16 = arith.maximumf %14, %15 : vector<32x32xf32>
    %17 = arith.truncf %10 : vector<32x32xf32> to vector<32x32xbf16>
    %c0_11 = arith.constant 0 : index
    %c0_12 = arith.constant 0 : index
    %18 = vector.load %arg6[%c0_11, %c0_12] : memref<32x32xbf16, #tpu.memory_space<vmem>>, vector<32x32xbf16>
    tpu.vector_store %arg6[%c0_11, %c0_12], %17 {strides = array<i32>} : memref<32x32xbf16, #tpu.memory_space<vmem>>, vector<32x32xbf16>,
    %19 = arith.truncf %16 : vector<32x32xf32> to vector<32x32xbf16>
    %c0_13 = arith.constant 0 : index
    %c0_14 = arith.constant 0 : index
    %20 = vector.load %arg7[%c0_13, %c0_14] : memref<32x32xbf16, #tpu.memory_space<vmem>>, vector<32x32xbf16>
    tpu.vector_store %arg7[%c0_13, %c0_14], %19 {strides = array<i32>} : memref<32x32xbf16, #tpu.memory_space<vmem>>, vector<32x32xbf16>,
    %21 = arith.mulf %10, %10 : vector<32x32xf32>
    %cst_15 = arith.constant dense<0.000000e+00> : vector<32xf32>
    %22 = vector.multi_reduction <add>, %21, %cst_15 [1] : vector<32x32xf32> to vector<32xf32>
    %23 = vector.shape_cast %22 : vector<32xf32> to vector<32x1xf32>
    %cst_16 = arith.constant 9.99999996E-13 : f32
    %24 = vector.broadcast %cst_16 : f32 to vector<32x1xf32>
    %25 = arith.addf %23, %24 : vector<32x1xf32>
    %26 = math.rsqrt %25 : vector<32x1xf32>
    %27 = vector.broadcast %26 : vector<32x1xf32> to vector<32x32xf32>
    %28 = arith.mulf %10, %27 : vector<32x32xf32>
    %29 = arith.mulf %16, %16 : vector<32x32xf32>
    %cst_17 = arith.constant dense<0.000000e+00> : vector<32xf32>
    %30 = vector.multi_reduction <add>, %29, %cst_17 [1] : vector<32x32xf32> to vector<32xf32>
    %31 = vector.shape_cast %30 : vector<32xf32> to vector<32x1xf32>
    %cst_18 = arith.constant 9.99999996E-13 : f32
    %32 = vector.broadcast %cst_18 : f32 to vector<32x1xf32>
    %33 = arith.addf %31, %32 : vector<32x1xf32>
    %34 = math.rsqrt %33 : vector<32x1xf32>
    %35 = vector.broadcast %34 : vector<32x1xf32> to vector<32x32xf32>
    %36 = arith.mulf %16, %35 : vector<32x32xf32>
    %37 = arith.subf %28, %36 : vector<32x32xf32>
    %38 = arith.mulf %37, %37 : vector<32x32xf32>
    %c0_19 = arith.constant 0 : index
    %c0_20 = arith.constant 0 : index
    %39 = vector.load %arg5[%c0_19, %c0_20] : memref<1x32xf32, #tpu.memory_space<vmem>>, vector<1x32xf32>
    %40 = vector.broadcast %39 : vector<1x32xf32> to vector<32x32xf32>
    %41 = arith.mulf %38, %40 : vector<32x32xf32>
    %c0_21 = arith.constant 0 : index
    %c0_22 = arith.constant 0 : index
    %42 = vector.load %arg9[%c0_21, %c0_22] : memref<8x32xf32, #tpu.memory_space<vmem>>, vector<8x32xf32>
    %43 = vector.shape_cast %41 : vector<32x32xf32> to vector<4x8x32xf32>
    %cst_23 = arith.constant dense<0.000000e+00> : vector<8x32xf32>
    %44 = vector.multi_reduction <add>, %43, %cst_23 [0] : vector<4x8x32xf32> to vector<8x32xf32>
    %45 = arith.addf %42, %44 : vector<8x32xf32>
    %c0_24 = arith.constant 0 : index
    %c0_25 = arith.constant 0 : index
    %46 = vector.load %arg9[%c0_24, %c0_25] : memref<8x32xf32, #tpu.memory_space<vmem>>, vector<8x32xf32>
    tpu.vector_store %arg9[%c0_24, %c0_25], %45 {strides = array<i32>} : memref<8x32xf32, #tpu.memory_space<vmem>>, vector<8x32xf32>,
    %c0_i32_26 = arith.constant 0 : i32
    %47 = arith.cmpi eq, %arg0, %c0_i32_26 : i32
    %48 = arith.extui %47 : i1 to i32
    %c0_i32_27 = arith.constant 0 : i32
    %49 = arith.cmpi ne, %48, %c0_i32_27 : i32
    scf.if %49 {
      %c0_28 = arith.constant 0 : index
      %c0_29 = arith.constant 0 : index
      %50 = vector.load %arg9[%c0_28, %c0_29] : memref<8x32xf32, #tpu.memory_space<vmem>>, vector<8x32xf32>
      %51 = vector.shape_cast %50 : vector<8x32xf32> to vector<1x8x32xf32>
      %cst_30 = arith.constant dense<0.000000e+00> : vector<1xf32>
      %52 = vector.multi_reduction <add>, %51, %cst_30 [1, 2] : vector<1x8x32xf32> to vector<1xf32>
      %53 = vector.shape_cast %52 : vector<1xf32> to vector<1x1x1xf32>
      %54 = vector.extract %53[0, 0, 0] : f32 from vector<1x1x1xf32>
      %c0_31 = arith.constant 0 : index
      %c0_32 = arith.constant 0 : index
      %55 = memref.load %arg8[%c0_31, %c0_32] : memref<1x1xf32, #tpu.memory_space<smem>>
      memref.store %54, %arg8[%c0_31, %c0_32] : memref<1x1xf32, #tpu.memory_space<smem>>
    } else {
    }
    return
  }
  func.func @transform_0(%arg0: i32) -> (i32, i32) {
    %c0_i32 = arith.constant 0 : i32
    %c0_i32_0 = arith.constant 0 : i32
    return %arg0, %c0_i32 : i32, i32
  }
  func.func @transform_1(%arg0: i32) -> (i32, i32) {
    %c0_i32 = arith.constant 0 : i32
    %c0_i32_0 = arith.constant 0 : i32
    return %arg0, %c0_i32 : i32, i32
  }
  func.func @transform_2(%arg0: i32) -> (i32, i32) {
    %c0_i32 = arith.constant 0 : i32
    %c0_i32_0 = arith.constant 0 : i32
    %c0_i32_1 = arith.constant 0 : i32
    return %c0_i32, %c0_i32_0 : i32, i32
  }
  func.func @transform_3(%arg0: i32) -> (i32, i32) {
    %c0_i32 = arith.constant 0 : i32
    %c0_i32_0 = arith.constant 0 : i32
    %c0_i32_1 = arith.constant 0 : i32
    return %c0_i32, %c0_i32_0 : i32, i32
  }
  func.func @transform_4(%arg0: i32) -> (i32, i32) {
    %c0_i32 = arith.constant 0 : i32
    %c0_i32_0 = arith.constant 0 : i32
    %c0_i32_1 = arith.constant 0 : i32
    return %c0_i32, %c0_i32_0 : i32, i32
  }
  func.func @transform_5(%arg0: i32) -> (i32, i32) {
    %c0_i32 = arith.constant 0 : i32
    %c0_i32_0 = arith.constant 0 : i32
    return %arg0, %c0_i32 : i32, i32
  }
  func.func @transform_6(%arg0: i32) -> (i32, i32) {
    %c0_i32 = arith.constant 0 : i32
    %c0_i32_0 = arith.constant 0 : i32
    return %arg0, %c0_i32 : i32, i32
  }
  func.func @transform_7(%arg0: i32) -> (i32, i32) {
    %c0_i32 = arith.constant 0 : i32
    %c0_i32_0 = arith.constant 0 : i32
    %c0_i32_1 = arith.constant 0 : i32
    return %c0_i32, %c0_i32_0 : i32, i32
  }
}

module attributes {stable_mosaic.version = 11 : i64} {
  func.func @_img_l1_partial_kernel(%arg0: i32, %arg1: memref<16x128xf32, #tpu.memory_space<vmem>>, %arg2: memref<16x128xf32, #tpu.memory_space<vmem>>, %arg3: memref<1x8x128xf32, #tpu.memory_space<vmem>>) attributes {dimension_semantics = [#tpu.dimension_semantics<parallel>], iteration_bounds = array<i64: 1>, scalar_prefetch = 0 : i64, scratch_operands = 0 : i64, tpu.core_type = #tpu.core_type<tc>, window_params = [{transform_indices = @transform_0, window_bounds = array<i64: 16, 128>}, {transform_indices = @transform_1, window_bounds = array<i64: 16, 128>}, {transform_indices = @transform_2, window_bounds = array<i64: 1, 8, 128>}]} {
    %c0 = arith.constant 0 : index
    %c0_0 = arith.constant 0 : index
    %0 = vector.load %arg1[%c0, %c0_0] : memref<16x128xf32, #tpu.memory_space<vmem>>, vector<16x128xf32>
    %c0_1 = arith.constant 0 : index
    %c0_2 = arith.constant 0 : index
    %1 = vector.load %arg2[%c0_1, %c0_2] : memref<16x128xf32, #tpu.memory_space<vmem>>, vector<16x128xf32>
    %2 = arith.subf %0, %1 : vector<16x128xf32>
    %3 = math.absf %2 : vector<16x128xf32>
    %c16_i32 = arith.constant 16 : i32
    %4 = arith.muli %arg0, %c16_i32 : i32
    %5 = tpu.iota {dimensions = array<i32: 0>} : vector<16x1xi32>
    %6 = vector.broadcast %4 : i32 to vector<16x1xi32>
    %7 = arith.addi %6, %5 : vector<16x1xi32>
    %c12_i32 = arith.constant 12 : i32
    %8 = vector.broadcast %c12_i32 : i32 to vector<16x1xi32>
    %9 = arith.cmpi slt, %7, %8 : vector<16x1xi32>
    %cst = arith.constant 0.000000e+00 : f32
    %10 = vector.shape_cast %9 : vector<16x1xi1> to vector<16x1xi1>
    %11 = vector.broadcast %10 : vector<16x1xi1> to vector<16x128xi1>
    %12 = vector.broadcast %cst : f32 to vector<16x128xf32>
    %13 = arith.select %11, %3, %12 : vector<16x128xi1>, vector<16x128xf32>
    %14 = vector.shape_cast %13 : vector<16x128xf32> to vector<2x8x128xf32>
    %cst_3 = arith.constant dense<0.000000e+00> : vector<8x128xf32>
    %15 = vector.multi_reduction <add>, %14, %cst_3 [0] : vector<2x8x128xf32> to vector<8x128xf32>
    %16 = vector.shape_cast %15 : vector<8x128xf32> to vector<1x8x128xf32>
    %c0_4 = arith.constant 0 : index
    %c0_5 = arith.constant 0 : index
    %c0_6 = arith.constant 0 : index
    %17 = vector.load %arg3[%c0_4, %c0_5, %c0_6] : memref<1x8x128xf32, #tpu.memory_space<vmem>>, vector<1x8x128xf32>
    tpu.vector_store %arg3[%c0_4, %c0_5, %c0_6], %16 {strides = array<i32>} : memref<1x8x128xf32, #tpu.memory_space<vmem>>, vector<1x8x128xf32>,
    return
  }
  func.func @transform_0(%arg0: i32) -> (i32, i32) {
    %c0_i32 = arith.constant 0 : i32
    %c0_i32_0 = arith.constant 0 : i32
    return %arg0, %c0_i32 : i32, i32
  }
  func.func @transform_1(%arg0: i32) -> (i32, i32) {
    %c0_i32 = arith.constant 0 : i32
    %c0_i32_0 = arith.constant 0 : i32
    return %arg0, %c0_i32 : i32, i32
  }
  func.func @transform_2(%arg0: i32) -> (i32, i32, i32) {
    %c0_i32 = arith.constant 0 : i32
    %c0_i32_0 = arith.constant 0 : i32
    %c0_i32_1 = arith.constant 0 : i32
    return %arg0, %c0_i32, %c0_i32_0 : i32, i32, i32
  }
}

module attributes {stable_mosaic.version = 11 : i64} {
  func.func @_small_sums_kernel(%arg0: i32, %arg1: memref<1x16xf32, #tpu.memory_space<vmem>>, %arg2: memref<1x16xf32, #tpu.memory_space<vmem>>, %arg3: memref<1x64xf32, #tpu.memory_space<vmem>>, %arg4: memref<1x64xf32, #tpu.memory_space<vmem>>, %arg5: memref<1x1xf32, #tpu.memory_space<smem>>, %arg6: memref<1x1xf32, #tpu.memory_space<smem>>) attributes {dimension_semantics = [#tpu.dimension_semantics<arbitrary>], iteration_bounds = array<i64: 1>, scalar_prefetch = 0 : i64, scratch_operands = 0 : i64, tpu.core_type = #tpu.core_type<tc>, window_params = [{pipeline_mode = #tpu.pipeline_mode<synchronous>, transform_indices = @transform_0, window_bounds = array<i64: 1, 16>}, {pipeline_mode = #tpu.pipeline_mode<synchronous>, transform_indices = @transform_1, window_bounds = array<i64: 1, 16>}, {pipeline_mode = #tpu.pipeline_mode<synchronous>, transform_indices = @transform_2, window_bounds = array<i64: 1, 64>}, {pipeline_mode = #tpu.pipeline_mode<synchronous>, transform_indices = @transform_3, window_bounds = array<i64: 1, 64>}, {transform_indices = @transform_4, window_bounds = array<i64: 1, 1>}, {transform_indices = @transform_5, window_bounds = array<i64: 1, 1>}]} {
    %c0 = arith.constant 0 : index
    %c0_0 = arith.constant 0 : index
    %0 = vector.load %arg1[%c0, %c0_0] : memref<1x16xf32, #tpu.memory_space<vmem>>, vector<1x16xf32>
    %c0_1 = arith.constant 0 : index
    %c0_2 = arith.constant 0 : index
    %1 = vector.load %arg2[%c0_1, %c0_2] : memref<1x16xf32, #tpu.memory_space<vmem>>, vector<1x16xf32>
    %2 = arith.subf %0, %1 : vector<1x16xf32>
    %3 = math.absf %2 : vector<1x16xf32>
    %4 = vector.shape_cast %3 : vector<1x16xf32> to vector<1x1x16xf32>
    %cst = arith.constant dense<0.000000e+00> : vector<1xf32>
    %5 = vector.multi_reduction <add>, %4, %cst [1, 2] : vector<1x1x16xf32> to vector<1xf32>
    %6 = vector.shape_cast %5 : vector<1xf32> to vector<1x1x1xf32>
    %7 = vector.extract %6[0, 0, 0] : f32 from vector<1x1x1xf32>
    %c0_3 = arith.constant 0 : index
    %c0_4 = arith.constant 0 : index
    %8 = memref.load %arg5[%c0_3, %c0_4] : memref<1x1xf32, #tpu.memory_space<smem>>
    memref.store %7, %arg5[%c0_3, %c0_4] : memref<1x1xf32, #tpu.memory_space<smem>>
    %c0_5 = arith.constant 0 : index
    %c0_6 = arith.constant 0 : index
    %9 = vector.load %arg4[%c0_5, %c0_6] : memref<1x64xf32, #tpu.memory_space<vmem>>, vector<1x64xf32>
    %c0_7 = arith.constant 0 : index
    %c0_8 = arith.constant 0 : index
    %10 = vector.load %arg3[%c0_7, %c0_8] : memref<1x64xf32, #tpu.memory_space<vmem>>, vector<1x64xf32>
    %cst_9 = arith.constant 1.000000e+00 : f32
    %11 = vector.broadcast %cst_9 : f32 to vector<1x64xf32>
    %12 = arith.addf %11, %9 : vector<1x64xf32>
    %13 = arith.mulf %10, %10 : vector<1x64xf32>
    %14 = arith.subf %12, %13 : vector<1x64xf32>
    %15 = math.exp %9 : vector<1x64xf32>
    %16 = arith.subf %14, %15 : vector<1x64xf32>
    %17 = vector.shape_cast %16 : vector<1x64xf32> to vector<1x1x64xf32>
    %cst_10 = arith.constant dense<0.000000e+00> : vector<1xf32>
    %18 = vector.multi_reduction <add>, %17, %cst_10 [1, 2] : vector<1x1x64xf32> to vector<1xf32>
    %19 = vector.shape_cast %18 : vector<1xf32> to vector<1x1x1xf32>
    %20 = vector.extract %19[0, 0, 0] : f32 from vector<1x1x1xf32>
    %c0_11 = arith.constant 0 : index
    %c0_12 = arith.constant 0 : index
    %21 = memref.load %arg6[%c0_11, %c0_12] : memref<1x1xf32, #tpu.memory_space<smem>>
    memref.store %20, %arg6[%c0_11, %c0_12] : memref<1x1xf32, #tpu.memory_space<smem>>
    return
  }
  func.func @transform_0(%arg0: i32) -> (i32, i32) {
    %c0_i32 = arith.constant 0 : i32
    %c0_i32_0 = arith.constant 0 : i32
    %c0_i32_1 = arith.constant 0 : i32
    return %c0_i32, %c0_i32_0 : i32, i32
  }
  func.func @transform_1(%arg0: i32) -> (i32, i32) {
    %c0_i32 = arith.constant 0 : i32
    %c0_i32_0 = arith.constant 0 : i32
    %c0_i32_1 = arith.constant 0 : i32
    return %c0_i32, %c0_i32_0 : i32, i32
  }
  func.func @transform_2(%arg0: i32) -> (i32, i32) {
    %c0_i32 = arith.constant 0 : i32
    %c0_i32_0 = arith.constant 0 : i32
    %c0_i32_1 = arith.constant 0 : i32
    return %c0_i32, %c0_i32_0 : i32, i32
  }
  func.func @transform_3(%arg0: i32) -> (i32, i32) {
    %c0_i32 = arith.constant 0 : i32
    %c0_i32_0 = arith.constant 0 : i32
    %c0_i32_1 = arith.constant 0 : i32
    return %c0_i32, %c0_i32_0 : i32, i32
  }
  func.func @transform_4(%arg0: i32) -> (i32, i32) {
    %c0_i32 = arith.constant 0 : i32
    %c0_i32_0 = arith.constant 0 : i32
    %c0_i32_1 = arith.constant 0 : i32
    return %c0_i32, %c0_i32_0 : i32, i32
  }
  func.func @transform_5(%arg0: i32) -> (i32, i32) {
    %c0_i32 = arith.constant 0 : i32
    %c0_i32_0 = arith.constant 0 : i32
    %c0_i32_1 = arith.constant 0 : i32
    return %c0_i32, %c0_i32_0 : i32, i32
  }
}

</mosaic_0001>

<llo_original>
// kernel: my_loss.7
$region0: #{my_loss.7}
  #allocation0 [shape = 'u32[]', space=smem, size = 0x4, offset = 0x4, fixed_abs, tag = 'smem constant byte address 0x4 - core index']
  #allocation1 [shape = 'u32[144,128]{1,0:T(1,128)}', space=vmem, size = 0x12000, scoped, tag = 'internal scratch']
  #allocation2 [shape = 'f32[8,8]{1,0:T(8,128)}', space=vmem, size = 0x1000, scoped, tag = 'scratch operand']
  %s0 = inlined_call_operand.vmem [shape: bf16[512,27], index: 0, kind: input, shape index: {}]
  %s1 = inlined_call_operand.vmem [shape: bf16[512,27], index: 1, kind: input, shape index: {}]
  %s2 = inlined_call_operand.vmem [shape: bf16[27,8], index: 2, kind: input, shape index: {}]
  %s3 = inlined_call_operand.vmem [shape: f32[1,8], index: 3, kind: input, shape index: {}]
  %s4 = inlined_call_operand.vmem [shape: f32[1,8], index: 4, kind: input, shape index: {}]
  %s5 = inlined_call_operand.vmem [shape: bf16[512,8], index: 5, kind: output, shape index: {0}]
  %s6 = inlined_call_operand.vmem [shape: bf16[512,8], index: 6, kind: output, shape index: {1}]
  %s7 = inlined_call_operand.hbm [shape: f32[1,1], index: 7, kind: output, shape index: {2}]
  %8 = xla_tuple %s5, %s6, %s7
  %s9 = sld [smem:[#allocation0]]
  $region54: #{my_loss.7} parent=0
    _
  %s11 = ssub.s32 1, %s9
  %s12 = scalar_select 0, %s11, %s9
  $region1: #{my_loss.7} parent=0
    #allocation3 [shape = 'u8[512]{0}', space=smem, size = 0x200, scoped, tag = 'output window, operand 2, single buffered']
    #allocation4 [shape = 's32[1]{0}', space=sflag, size = 0x4, scoped, tag = 'scoped memory for my_loss.7']
    %13 = vsyncpa [#allocation4], 0
    // Predicated region
    $region2: #{my_loss.7} parent=1 // pred_check
      _
    $region3: #{my_loss.7} parent=1 // pred_check_branch
      %15 = sbr.rel (0) target = $region5
    $region4: #{my_loss.7} parent=1 // pred_region
      _
    $region5: #{my_loss.7} parent=1 // pred_fallthru
      _
    // Predicated region
    $region6: #{my_loss.7} parent=1 // pred_check
      _
    $region7: #{my_loss.7} parent=1 // pred_check_branch
      %17 = sbr.rel (0) target = $region9
    $region8: #{my_loss.7} parent=1 // pred_region
      _
    $region9: #{my_loss.7} parent=1 // pred_fallthru
      _
    // Predicated region
    $region10: #{my_loss.7} parent=1 // pred_check
      _
    $region11: #{my_loss.7} parent=1 // pred_check_branch
      %19 = sbr.rel (0) target = $region13
    $region12: #{my_loss.7} parent=1 // pred_region
      _
    $region13: #{my_loss.7} parent=1 // pred_fallthru
      _
    // Predicated region
    $region14: #{my_loss.7} parent=1 // pred_check
      _
    $region15: #{my_loss.7} parent=1 // pred_check_branch
      %21 = sbr.rel (0) target = $region17
    $region16: #{my_loss.7} parent=1 // pred_region
      _
    $region17: #{my_loss.7} parent=1 // pred_fallthru
      _
    // Predicated region
    $region18: #{my_loss.7} parent=1 // pred_check
      _
    $region19: #{my_loss.7} parent=1 // pred_check_branch
      %23 = sbr.rel (0) target = $region21
    $region20: #{my_loss.7} parent=1 // pred_region
      _
    $region21: #{my_loss.7} parent=1 // pred_fallthru
      _
    %p25 = scmp.eq.s32.totalorder 0, 0
    // Predicated region
    $region22: #{my_loss.7} parent=1 // pred_check
      %p26 = pneg %p25
    $region23: #{my_loss.7} parent=1 // pred_check_branch
      %28 = sbr.rel (%p26) target = $region25
    $region24: #{my_loss.7} parent=1 // pred_region
      %vm29 = vcmask 64512
      %30 = vst.msk [vmem:[#allocation2] sm:$0xff] %vm29, 0.0
    $region25: #{my_loss.7} parent=1 // pred_fallthru
      _
    %v31 = vld [vmem:[%s2] sm:$0xf]
    %v32 = vld [vmem:[%s2 + $0x4] sm:$0xf]
    %v33 = vld [vmem:[%s2 + $0x8] sm:$0xf]
    %v34 = vld [vmem:[%s2 + $0xc] sm:$0x3]
    %v35 = vld [vmem:[%s3] sm:$0x1]
    %v36 = vld [vmem:[%s0] sm:$0xf]
    %v37 = vld [vmem:[%s0 + $0x4] sm:$0xf]
    %v38 = vld [vmem:[%s0 + $0x8] sm:$0xf]
    %v39 = vld [vmem:[%s0 + $0xc] sm:$0xf]
    %v40 = vld [vmem:[%s0 + $0x10] sm:$0xf]
    %v41 = vld [vmem:[%s0 + $0x14] sm:$0xf]
    %v42 = vld [vmem:[%s0 + $0x18] sm:$0xf]
    %v43 = vld [vmem:[%s0 + $0x1c] sm:$0xf]
    %v44 = vld [vmem:[%s0 + $0x20] sm:$0xf]
    %v45 = vld [vmem:[%s0 + $0x24] sm:$0xf]
    %v46 = vld [vmem:[%s0 + $0x28] sm:$0xf]
    %v47 = vld [vmem:[%s0 + $0x2c] sm:$0xf]
    %v48 = vld [vmem:[%s0 + $0x30] sm:$0xf]
    %v49 = vld [vmem:[%s0 + $0x34] sm:$0xf]
    %v50 = vld [vmem:[%s0 + $0x38] sm:$0xf]
    %v51 = vld [vmem:[%s0 + $0x3c] sm:$0xf]
    %v52 = vld [vmem:[%s0 + $0x40] sm:$0xf]
    %v53 = vld [vmem:[%s0 + $0x44] sm:$0xf]
    %v54 = vld [vmem:[%s0 + $0x48] sm:$0xf]
    %v55 = vld [vmem:[%s0 + $0x4c] sm:$0xf]
    %v56 = vld [vmem:[%s0 + $0x50] sm:$0xf]
    %v57 = vld [vmem:[%s0 + $0x54] sm:$0xf]
    %v58 = vld [vmem:[%s0 + $0x58] sm:$0xf]
    %v59 = vld [vmem:[%s0 + $0x5c] sm:$0xf]
    %v60 = vld [vmem:[%s0 + $0x60] sm:$0xf]
    %v61 = vld [vmem:[%s0 + $0x64] sm:$0xf]
    %v62 = vld [vmem:[%s0 + $0x68] sm:$0xf]
    %v63 = vld [vmem:[%s0 + $0x6c] sm:$0xf]
    %v64 = vld [vmem:[%s0 + $0x70] sm:$0xf]
    %v65 = vld [vmem:[%s0 + $0x74] sm:$0xf]
    %v66 = vld [vmem:[%s0 + $0x78] sm:$0xf]
    %v67 = vld [vmem:[%s0 + $0x7c] sm:$0xf]
    %v68 = vld [vmem:[%s0 + $0x80] sm:$0xf]
    %v69 = vld [vmem:[%s0 + $0x84] sm:$0xf]
    %v70 = vld [vmem:[%s0 + $0x88] sm:$0xf]
    %v71 = vld [vmem:[%s0 + $0x8c] sm:$0xf]
    %v72 = vld [vmem:[%s0 + $0x90] sm:$0xf]
    %v73 = vld [vmem:[%s0 + $0x94] sm:$0xf]
    %v74 = vld [vmem:[%s0 + $0x98] sm:$0xf]
    %v75 = vld [vmem:[%s0 + $0x9c] sm:$0xf]
    %v76 = vld [vmem:[%s0 + $0xa0] sm:$0xf]
    %v77 = vld [vmem:[%s0 + $0xa4] sm:$0xf]
    %v78 = vld [vmem:[%s0 + $0xa8] sm:$0xf]
    %v79 = vld [vmem:[%s0 + $0xac] sm:$0xf]
    %v80 = vld [vmem:[%s0 + $0xb0] sm:$0xf]
    %v81 = vld [vmem:[%s0 + $0xb4] sm:$0xf]
    %v82 = vld [vmem:[%s0 + $0xb8] sm:$0xf]
    %v83 = vld [vmem:[%s0 + $0xbc] sm:$0xf]
    %v84 = vld [vmem:[%s0 + $0xc0] sm:$0xf]
    %v85 = vld [vmem:[%s0 + $0xc4] sm:$0xf]
    %v86 = vld [vmem:[%s0 + $0xc8] sm:$0xf]
    %v87 = vld [vmem:[%s0 + $0xcc] sm:$0xf]
    %v88 = vld [vmem:[%s0 + $0xd0] sm:$0xf]
    %v89 = vld [vmem:[%s0 + $0xd4] sm:$0xf]
    %v90 = vld [vmem:[%s0 + $0xd8] sm:$0xf]
    %v91 = vld [vmem:[%s0 + $0xdc] sm:$0xf]
    %v92 = vld [vmem:[%s0 + $0xe0] sm:$0xf]
    %v93 = vld [vmem:[%s0 + $0xe4] sm:$0xf]
    %v94 = vld [vmem:[%s0 + $0xe8] sm:$0xf]
    %v95 = vld [vmem:[%s0 + $0xec] sm:$0xf]
    %v96 = vld [vmem:[%s0 + $0xf0] sm:$0xf]
    %v97 = vld [vmem:[%s0 + $0xf4] sm:$0xf]
    %v98 = vld [vmem:[%s0 + $0xf8] sm:$0xf]
    %v99 = vld [vmem:[%s0 + $0xfc] sm:$0xf]
    %v101 = vlaneseq
    %v102 = vshrl.u32 %v101, 7
    %v103 = vsub.s32 0, %v102
    %v104 = vrot.slane %v35, %v103
    %v170 = vunpack.c.l.b16 %v36
    %v171 = vunpack.c.l.b16 %v37
    %v172 = vunpack.c.l.b16 %v38
    %v173 = vunpack.c.l.b16 %v39
    %v174 = vunpack.c.l.b16 %v40
    %v175 = vunpack.c.l.b16 %v41
    %v176 = vunpack.c.l.b16 %v42
    %v177 = vunpack.c.l.b16 %v43
    %v178 = vunpack.c.l.b16 %v44
    %v179 = vunpack.c.l.b16 %v45
    %v180 = vunpack.c.l.b16 %v46
    %v181 = vunpack.c.l.b16 %v47
    %v182 = vunpack.c.l.b16 %v48
    %v183 = vunpack.c.l.b16 %v49
    %v184 = vunpack.c.l.b16 %v50
    %v185 = vunpack.c.l.b16 %v51
    %v186 = vunpack.c.l.b16 %v52
    %v187 = vunpack.c.l.b16 %v53
    %v188 = vunpack.c.l.b16 %v54
    %v189 = vunpack.c.l.b16 %v55
    %v190 = vunpack.c.l.b16 %v56
    %v191 = vunpack.c.l.b16 %v57
    %v192 = vunpack.c.l.b16 %v58
    %v193 = vunpack.c.l.b16 %v59
    %v194 = vunpack.c.l.b16 %v60
    %v195 = vunpack.c.l.b16 %v61
    %v196 = vunpack.c.l.b16 %v62
    %v197 = vunpack.c.l.b16 %v63
    %v198 = vunpack.c.l.b16 %v64
    %v199 = vunpack.c.l.b16 %v65
    %v200 = vunpack.c.l.b16 %v66
    %v201 = vunpack.c.l.b16 %v67
    %v202 = vunpack.c.l.b16 %v68
    %v203 = vunpack.c.l.b16 %v69
    %v204 = vunpack.c.l.b16 %v70
    %v205 = vunpack.c.l.b16 %v71
    %v206 = vunpack.c.l.b16 %v72
    %v207 = vunpack.c.l.b16 %v73
    %v208 = vunpack.c.l.b16 %v74
    %v209 = vunpack.c.l.b16 %v75
    %v210 = vunpack.c.l.b16 %v76
    %v211 = vunpack.c.l.b16 %v77
    %v212 = vunpack.c.l.b16 %v78
    %v213 = vunpack.c.l.b16 %v79
    %v214 = vunpack.c.l.b16 %v80
    %v215 = vunpack.c.l.b16 %v81
    %v216 = vunpack.c.l.b16 %v82
    %v217 = vunpack.c.l.b16 %v83
    %v218 = vunpack.c.l.b16 %v84
    %v219 = vunpack.c.l.b16 %v85
    %v220 = vunpack.c.l.b16 %v86
    %v221 = vunpack.c.l.b16 %v87
    %v222 = vunpack.c.l.b16 %v88
    %v223 = vunpack.c.l.b16 %v89
    %v224 = vunpack.c.l.b16 %v90
    %v225 = vunpack.c.l.b16 %v91
    %v226 = vunpack.c.l.b16 %v92
    %v227 = vunpack.c.l.b16 %v93
    %v228 = vunpack.c.l.b16 %v94
    %v229 = vunpack.c.l.b16 %v95
    %v230 = vunpack.c.l.b16 %v96
    %v231 = vunpack.c.l.b16 %v97
    %v232 = vunpack.c.l.b16 %v98
    %v233 = vunpack.c.l.b16 %v99
    %v234 = vpack.c.b16 %v171, %v170
    %v235 = vpack.c.b16 %v173, %v172
    %v236 = vpack.c.b16 %v175, %v174
    %v237 = vpack.c.b16 %v177, %v176
    %v238 = vpack.c.b16 %v179, %v178
    %v239 = vpack.c.b16 %v181, %v180
    %v240 = vpack.c.b16 %v183, %v182
    %v241 = vpack.c.b16 %v185, %v184
    %v242 = vpack.c.b16 %v187, %v186
    %v243 = vpack.c.b16 %v189, %v188
    %v244 = vpack.c.b16 %v191, %v190
    %v245 = vpack.c.b16 %v193, %v192
    %v246 = vpack.c.b16 %v195, %v194
    %v247 = vpack.c.b16 %v197, %v196
    %v248 = vpack.c.b16 %v199, %v198
    %v249 = vpack.c.b16 %v201, %v200
    %v250 = vpack.c.b16 %v203, %v202
    %v251 = vpack.c.b16 %v205, %v204
    %v252 = vpack.c.b16 %v207, %v206
    %v253 = vpack.c.b16 %v209, %v208
    %v254 = vpack.c.b16 %v211, %v210
    %v255 = vpack.c.b16 %v213, %v212
    %v256 = vpack.c.b16 %v215, %v214
    %v257 = vpack.c.b16 %v217, %v216
    %v258 = vpack.c.b16 %v219, %v218
    %v259 = vpack.c.b16 %v221, %v220
    %v260 = vpack.c.b16 %v223, %v222
    %v261 = vpack.c.b16 %v225, %v224
    %v262 = vpack.c.b16 %v227, %v226
    %v263 = vpack.c.b16 %v229, %v228
    %v264 = vpack.c.b16 %v231, %v230
    %v265 = vpack.c.b16 %v233, %v232
    %v270 = vunpack.c.l.b16 %v31
    %v271 = vunpack.c.l.b16 %v32
    %v272 = vunpack.c.l.b16 %v33
    %v273 = vunpack.c.l.b16 %v34
    %v274 = vpack.c.b16 %v271, %v270
    %v275 = vpack.c.b16 %v273, %v272
    %vm277 = vcmask 220160
    %v279 = vsel %vm277, %v234, 0
    %v282 = vsel %vm277, %v235, 0
    %v285 = vsel %vm277, %v236, 0
    %v288 = vsel %vm277, %v237, 0
    %v291 = vsel %vm277, %v238, 0
    %v294 = vsel %vm277, %v239, 0
    %v297 = vsel %vm277, %v240, 0
    %v300 = vsel %vm277, %v241, 0
    %v303 = vsel %vm277, %v242, 0
    %v306 = vsel %vm277, %v243, 0
    %v309 = vsel %vm277, %v244, 0
    %v312 = vsel %vm277, %v245, 0
    %v315 = vsel %vm277, %v246, 0
    %v318 = vsel %vm277, %v247, 0
    %v321 = vsel %vm277, %v248, 0
    %v324 = vsel %vm277, %v249, 0
    %v327 = vsel %vm277, %v250, 0
    %v330 = vsel %vm277, %v251, 0
    %v333 = vsel %vm277, %v252, 0
    %v336 = vsel %vm277, %v253, 0
    %v339 = vsel %vm277, %v254, 0
    %v342 = vsel %vm277, %v255, 0
    %v345 = vsel %vm277, %v256, 0
    %v348 = vsel %vm277, %v257, 0
    %v351 = vsel %vm277, %v258, 0
    %v354 = vsel %vm277, %v259, 0
    %v357 = vsel %vm277, %v260, 0
    %v360 = vsel %vm277, %v261, 0
    %v363 = vsel %vm277, %v262, 0
    %v366 = vsel %vm277, %v263, 0
    %v369 = vsel %vm277, %v264, 0
    %v372 = vsel %vm277, %v265, 0
    %vm374 = vcmask 1044480
    %vm375 = vcmask 1045504
    %v376 = vsel %vm374, 4294967295, 65535
    %v377 = vsel %vm375, %v376, 0
    %v379 = vand.u32 %v275, %v377
    %381 = vmatprep.subr.bf16.mxu0 0
    %382 = vmatpush1.bf16.msra.mxu0 0
    %383 = vmatprep.subr.bf16.mxu0 0
    %384 = vmatpush1.bf16.msra.mxu0 0
    %385 = vmatprep.subr.bf16.mxu0 0
    %386 = vmatpush1.bf16.msra.mxu0 0
    %387 = vmatprep.subr.bf16.mxu0 0
    %388 = vmatpush1.bf16.msra.mxu0 0
    %389 = vmatprep.subr.bf16.mxu0 0
    %390 = vmatpush1.bf16.msra.mxu0 0
    %391 = vmatprep.subr.bf16.mxu0 0
    %392 = vmatpush1.bf16.msra.mxu0 0
    %393 = vmatprep.subr.bf16.mxu0 0
    %394 = vmatpush1.bf16.msra.mxu0 %v379
    %395 = vmatprep.subr.bf16.mxu0 0
    %396 = vmatpush1.bf16.msra.mxu0 %v274
    %397 = vmatprep.subr.bf16.mxu0 0
    %398 = vmatpush2.bf16.msra.mxu0 0
    %399 = vmatprep.subr.bf16.mxu0 0
    %400 = vmatpush2.bf16.msra.mxu0 0
    %401 = vmatprep.subr.bf16.mxu0 0
    %402 = vmatpush2.bf16.msra.mxu0 0
    %403 = vmatprep.subr.bf16.mxu0 0
    %404 = vmatpush2.bf16.msra.mxu0 0
    %405 = vmatprep.subr.bf16.mxu0 0
    %406 = vmatpush2.bf16.msra.mxu0 0
    %407 = vmatprep.subr.bf16.mxu0 0
    %408 = vmatpush2.bf16.msra.mxu0 0
    %409 = vmatprep.subr.bf16.mxu0 0
    %410 = vmatpush2.bf16.msra.mxu0 0
    %411 = vmatprep.subr.bf16.mxu0 0
    %412 = vmatpush2.bf16.msra.mxu0 0
    %413 = vmatprep.mubr.bf16.mxu0 0
    %414 = vmatmul.mubr.bf16.gmra.mxu0 %v279
    %v415 = vpop.f32.mrf.mxu0
    %v416 = vadd.f32 %v104, %v415
    %v417 = vpop.f32.mrf.mxu0
    %v418 = vpop.f32.mrf.mxu0
    %v419 = vadd.f32 %v104, %v418
    %v420 = vpop.f32.mrf.mxu0
    %421 = vmatprep.mubr.bf16.mxu0 0
    %422 = vmatmul.mubr.bf16.gmra.mxu0 %v282
    %v423 = vpop.f32.mrf.mxu0
    %v424 = vadd.f32 %v104, %v423
    %v425 = vpop.f32.mrf.mxu0
    %v426 = vpop.f32.mrf.mxu0
    %v427 = vadd.f32 %v104, %v426
    %v428 = vpop.f32.mrf.mxu0
    %429 = vmatprep.mubr.bf16.mxu0 0
    %430 = vmatmul.mubr.bf16.gmra.mxu0 %v285
    %v431 = vpop.f32.mrf.mxu0
    %v432 = vadd.f32 %v104, %v431
    %v433 = vpop.f32.mrf.mxu0
    %v434 = vpop.f32.mrf.mxu0
    %v435 = vadd.f32 %v104, %v434
    %v436 = vpop.f32.mrf.mxu0
    %437 = vmatprep.mubr.bf16.mxu0 0
    %438 = vmatmul.mubr.bf16.gmra.mxu0 %v288
    %v439 = vpop.f32.mrf.mxu0
    %v440 = vadd.f32 %v104, %v439
    %v441 = vpop.f32.mrf.mxu0
    %v442 = vpop.f32.mrf.mxu0
    %v443 = vadd.f32 %v104, %v442
    %v444 = vpop.f32.mrf.mxu0
    %445 = vmatprep.mubr.bf16.mxu0 0
    %446 = vmatmul.mubr.bf16.gmra.mxu0 %v291
    %v447 = vpop.f32.mrf.mxu0
    %v448 = vadd.f32 %v104, %v447
    %v449 = vpop.f32.mrf.mxu0
    %v450 = vpop.f32.mrf.mxu0
    %v451 = vadd.f32 %v104, %v450
    %v452 = vpop.f32.mrf.mxu0
    %453 = vmatprep.mubr.bf16.mxu0 0
    %454 = vmatmul.mubr.bf16.gmra.mxu0 %v294
    %v455 = vpop.f32.mrf.mxu0
    %v456 = vadd.f32 %v104, %v455
    %v457 = vpop.f32.mrf.mxu0
    %v458 = vpop.f32.mrf.mxu0
    %v459 = vadd.f32 %v104, %v458
    %v460 = vpop.f32.mrf.mxu0
    %461 = vmatprep.mubr.bf16.mxu0 0
    %462 = vmatmul.mubr.bf16.gmra.mxu0 %v297
    %v463 = vpop.f32.mrf.mxu0
    %v464 = vadd.f32 %v104, %v463
    %v465 = vpop.f32.mrf.mxu0
    %v466 = vpop.f32.mrf.mxu0
    %v467 = vadd.f32 %v104, %v466
    %v468 = vpop.f32.mrf.mxu0
    %469 = vmatprep.mubr.bf16.mxu0 0
    %470 = vmatmul.mubr.bf16.gmra.mxu0 %v300
    %v471 = vpop.f32.mrf.mxu0
    %v472 = vadd.f32 %v104, %v471
    %v473 = vpop.f32.mrf.mxu0
    %v474 = vpop.f32.mrf.mxu0
    %v475 = vadd.f32 %v104, %v474
    %v476 = vpop.f32.mrf.mxu0
    %477 = vmatprep.mubr.bf16.mxu0 0
    %478 = vmatmul.mubr.bf16.gmra.mxu0 %v303
    %v479 = vpop.f32.mrf.mxu0
    %v480 = vadd.f32 %v104, %v479
    %v481 = vpop.f32.mrf.mxu0
    %v482 = vpop.f32.mrf.mxu0
    %v483 = vadd.f32 %v104, %v482
    %v484 = vpop.f32.mrf.mxu0
    %485 = vmatprep.mubr.bf16.mxu0 0
    %486 = vmatmul.mubr.bf16.gmra.mxu0 %v306
    %v487 = vpop.f32.mrf.mxu0
    %v488 = vadd.f32 %v104, %v487
    %v489 = vpop.f32.mrf.mxu0
    %v490 = vpop.f32.mrf.mxu0
    %v491 = vadd.f32 %v104, %v490
    %v492 = vpop.f32.mrf.mxu0
    %493 = vmatprep.mubr.bf16.mxu0 0
    %494 = vmatmul.mubr.bf16.gmra.mxu0 %v309
    %v495 = vpop.f32.mrf.mxu0
    %v496 = vadd.f32 %v104, %v495
    %v497 = vpop.f32.mrf.mxu0
    %v498 = vpop.f32.mrf.mxu0
    %v499 = vadd.f32 %v104, %v498
    %v500 = vpop.f32.mrf.mxu0
    %501 = vmatprep.mubr.bf16.mxu0 0
    %502 = vmatmul.mubr.bf16.gmra.mxu0 %v312
    %v503 = vpop.f32.mrf.mxu0
    %v504 = vadd.f32 %v104, %v503
    %v505 = vpop.f32.mrf.mxu0
    %v506 = vpop.f32.mrf.mxu0
    %v507 = vadd.f32 %v104, %v506
    %v508 = vpop.f32.mrf.mxu0
    %509 = vmatprep.mubr.bf16.mxu0 0
    %510 = vmatmul.mubr.bf16.gmra.mxu0 %v315
    %v511 = vpop.f32.mrf.mxu0
    %v512 = vadd.f32 %v104, %v511
    %v513 = vpop.f32.mrf.mxu0
    %v514 = vpop.f32.mrf.mxu0
    %v515 = vadd.f32 %v104, %v514
    %v516 = vpop.f32.mrf.mxu0
    %517 = vmatprep.mubr.bf16.mxu0 0
    %518 = vmatmul.mubr.bf16.gmra.mxu0 %v318
    %v519 = vpop.f32.mrf.mxu0
    %v520 = vadd.f32 %v104, %v519
    %v521 = vpop.f32.mrf.mxu0
    %v522 = vpop.f32.mrf.mxu0
    %v523 = vadd.f32 %v104, %v522
    %v524 = vpop.f32.mrf.mxu0
    %525 = vmatprep.mubr.bf16.mxu0 0
    %526 = vmatmul.mubr.bf16.gmra.mxu0 %v321
    %v527 = vpop.f32.mrf.mxu0
    %v528 = vadd.f32 %v104, %v527
    %v529 = vpop.f32.mrf.mxu0
    %v530 = vpop.f32.mrf.mxu0
    %v531 = vadd.f32 %v104, %v530
    %v532 = vpop.f32.mrf.mxu0
    %533 = vmatprep.mubr.bf16.mxu0 0
    %534 = vmatmul.mubr.bf16.gmra.mxu0 %v324
    %v535 = vpop.f32.mrf.mxu0
    %v536 = vadd.f32 %v104, %v535
    %v537 = vpop.f32.mrf.mxu0
    %v538 = vpop.f32.mrf.mxu0
    %v539 = vadd.f32 %v104, %v538
    %v540 = vpop.f32.mrf.mxu0
    %541 = vmatprep.mubr.bf16.mxu0 0
    %542 = vmatmul.mubr.bf16.gmra.mxu0 %v327
    %v543 = vpop.f32.mrf.mxu0
    %v544 = vadd.f32 %v104, %v543
    %v545 = vpop.f32.mrf.mxu0
    %v546 = vpop.f32.mrf.mxu0
    %v547 = vadd.f32 %v104, %v546
    %v548 = vpop.f32.mrf.mxu0
    %549 = vmatprep.mubr.bf16.mxu0 0
    %550 = vmatmul.mubr.bf16.gmra.mxu0 %v330
    %v551 = vpop.f32.mrf.mxu0
    %v552 = vadd.f32 %v104, %v551
    %v553 = vpop.f32.mrf.mxu0
    %v554 = vpop.f32.mrf.mxu0
    %v555 = vadd.f32 %v104, %v554
    %v556 = vpop.f32.mrf.mxu0
    %557 = vmatprep.mubr.bf16.mxu0 0
    %558 = vmatmul.mubr.bf16.gmra.mxu0 %v333
    %v559 = vpop.f32.mrf.mxu0
    %v560 = vadd.f32 %v104, %v559
    %v561 = vpop.f32.mrf.mxu0
    %v562 = vpop.f32.mrf.mxu0
    %v563 = vadd.f32 %v104, %v562
    %v564 = vpop.f32.mrf.mxu0
    %565 = vmatprep.mubr.bf16.mxu0 0
    %566 = vmatmul.mubr.bf16.gmra.mxu0 %v336
    %v567 = vpop.f32.mrf.mxu0
    %v568 = vadd.f32 %v104, %v567
    %v569 = vpop.f32.mrf.mxu0
    %v570 = vpop.f32.mrf.mxu0
    %v571 = vadd.f32 %v104, %v570
    %v572 = vpop.f32.mrf.mxu0
    %573 = vmatprep.mubr.bf16.mxu0 0
    %574 = vmatmul.mubr.bf16.gmra.mxu0 %v339
    %v575 = vpop.f32.mrf.mxu0
    %v576 = vadd.f32 %v104, %v575
    %v577 = vpop.f32.mrf.mxu0
    %v578 = vpop.f32.mrf.mxu0
    %v579 = vadd.f32 %v104, %v578
    %v580 = vpop.f32.mrf.mxu0
    %581 = vmatprep.mubr.bf16.mxu0 0
    %582 = vmatmul.mubr.bf16.gmra.mxu0 %v342
    %v583 = vpop.f32.mrf.mxu0
    %v584 = vadd.f32 %v104, %v583
    %v585 = vpop.f32.mrf.mxu0
    %v586 = vpop.f32.mrf.mxu0
    %v587 = vadd.f32 %v104, %v586
    %v588 = vpop.f32.mrf.mxu0
    %589 = vmatprep.mubr.bf16.mxu0 0
    %590 = vmatmul.mubr.bf16.gmra.mxu0 %v345
    %v591 = vpop.f32.mrf.mxu0
    %v592 = vadd.f32 %v104, %v591
    %v593 = vpop.f32.mrf.mxu0
    %v594 = vpop.f32.mrf.mxu0
    %v595 = vadd.f32 %v104, %v594
    %v596 = vpop.f32.mrf.mxu0
    %597 = vmatprep.mubr.bf16.mxu0 0
    %598 = vmatmul.mubr.bf16.gmra.mxu0 %v348
    %v599 = vpop.f32.mrf.mxu0
    %v600 = vadd.f32 %v104, %v599
    %v601 = vpop.f32.mrf.mxu0
    %v602 = vpop.f32.mrf.mxu0
    %v603 = vadd.f32 %v104, %v602
    %v604 = vpop.f32.mrf.mxu0
    %605 = vmatprep.mubr.bf16.mxu0 0
    %606 = vmatmul.mubr.bf16.gmra.mxu0 %v351
    %v607 = vpop.f32.mrf.mxu0
    %v608 = vadd.f32 %v104, %v607
    %v609 = vpop.f32.mrf.mxu0
    %v610 = vpop.f32.mrf.mxu0
    %v611 = vadd.f32 %v104, %v610
    %v612 = vpop.f32.mrf.mxu0
    %613 = vmatprep.mubr.bf16.mxu0 0
    %614 = vmatmul.mubr.bf16.gmra.mxu0 %v354
    %v615 = vpop.f32.mrf.mxu0
    %v616 = vadd.f32 %v104, %v615
    %v617 = vpop.f32.mrf.mxu0
    %v618 = vpop.f32.mrf.mxu0
    %v619 = vadd.f32 %v104, %v618
    %v620 = vpop.f32.mrf.mxu0
    %621 = vmatprep.mubr.bf16.mxu0 0
    %622 = vmatmul.mubr.bf16.gmra.mxu0 %v357
    %v623 = vpop.f32.mrf.mxu0
    %v624 = vadd.f32 %v104, %v623
    %v625 = vpop.f32.mrf.mxu0
    %v626 = vpop.f32.mrf.mxu0
    %v627 = vadd.f32 %v104, %v626
    %v628 = vpop.f32.mrf.mxu0
    %629 = vmatprep.mubr.bf16.mxu0 0
    %630 = vmatmul.mubr.bf16.gmra.mxu0 %v360
    %v631 = vpop.f32.mrf.mxu0
    %v632 = vadd.f32 %v104, %v631
    %v633 = vpop.f32.mrf.mxu0
    %v634 = vpop.f32.mrf.mxu0
    %v635 = vadd.f32 %v104, %v634
    %v636 = vpop.f32.mrf.mxu0
    %637 = vmatprep.mubr.bf16.mxu0 0
    %638 = vmatmul.mubr.bf16.gmra.mxu0 %v363
    %v639 = vpop.f32.mrf.mxu0
    %v640 = vadd.f32 %v104, %v639
    %v641 = vpop.f32.mrf.mxu0
    %v642 = vpop.f32.mrf.mxu0
    %v643 = vadd.f32 %v104, %v642
    %v644 = vpop.f32.mrf.mxu0
    %645 = vmatprep.mubr.bf16.mxu0 0
    %646 = vmatmul.mubr.bf16.gmra.mxu0 %v366
    %v647 = vpop.f32.mrf.mxu0
    %v648 = vadd.f32 %v104, %v647
    %v649 = vpop.f32.mrf.mxu0
    %v650 = vpop.f32.mrf.mxu0
    %v651 = vadd.f32 %v104, %v650
    %v652 = vpop.f32.mrf.mxu0
    %653 = vmatprep.mubr.bf16.mxu0 0
    %654 = vmatmul.mubr.bf16.gmra.mxu0 %v369
    %v655 = vpop.f32.mrf.mxu0
    %v656 = vadd.f32 %v104, %v655
    %v657 = vpop.f32.mrf.mxu0
    %v658 = vpop.f32.mrf.mxu0
    %v659 = vadd.f32 %v104, %v658
    %v660 = vpop.f32.mrf.mxu0
    %661 = vmatprep.mubr.bf16.mxu0 0
    %662 = vmatmul.mubr.bf16.gmra.mxu0 %v372
    %v663 = vpop.f32.mrf.mxu0
    %v664 = vadd.f32 %v104, %v663
    %v665 = vpop.f32.mrf.mxu0
    %v666 = vpop.f32.mrf.mxu0
    %v667 = vadd.f32 %v104, %v666
    %v668 = vpop.f32.mrf.mxu0
    %669 = vdwg.mxu0
    %v670 = vmax.f32 %v416, 0.0
    %v671 = vmax.f32 %v419, 0.0
    %v672 = vmax.f32 %v424, 0.0
    %v673 = vmax.f32 %v427, 0.0
    %v674 = vmax.f32 %v432, 0.0
    %v675 = vmax.f32 %v435, 0.0
    %v676 = vmax.f32 %v440, 0.0
    %v677 = vmax.f32 %v443, 0.0
    %v678 = vmax.f32 %v448, 0.0
    %v679 = vmax.f32 %v451, 0.0
    %v680 = vmax.f32 %v456, 0.0
    %v681 = vmax.f32 %v459, 0.0
    %v682 = vmax.f32 %v464, 0.0
    %v683 = vmax.f32 %v467, 0.0
    %v684 = vmax.f32 %v472, 0.0
    %v685 = vmax.f32 %v475, 0.0
    %v686 = vmax.f32 %v480, 0.0
    %v687 = vmax.f32 %v483, 0.0
    %v688 = vmax.f32 %v488, 0.0
    %v689 = vmax.f32 %v491, 0.0
    %v690 = vmax.f32 %v496, 0.0
    %v691 = vmax.f32 %v499, 0.0
    %v692 = vmax.f32 %v504, 0.0
    %v693 = vmax.f32 %v507, 0.0
    %v694 = vmax.f32 %v512, 0.0
    %v695 = vmax.f32 %v515, 0.0
    %v696 = vmax.f32 %v520, 0.0
    %v697 = vmax.f32 %v523, 0.0
    %v698 = vmax.f32 %v528, 0.0
    %v699 = vmax.f32 %v531, 0.0
    %v700 = vmax.f32 %v536, 0.0
    %v701 = vmax.f32 %v539, 0.0
    %v702 = vmax.f32 %v544, 0.0
    %v703 = vmax.f32 %v547, 0.0
    %v704 = vmax.f32 %v552, 0.0
    %v705 = vmax.f32 %v555, 0.0
    %v706 = vmax.f32 %v560, 0.0
    %v707 = vmax.f32 %v563, 0.0
    %v708 = vmax.f32 %v568, 0.0
    %v709 = vmax.f32 %v571, 0.0
    %v710 = vmax.f32 %v576, 0.0
    %v711 = vmax.f32 %v579, 0.0
    %v712 = vmax.f32 %v584, 0.0
    %v713 = vmax.f32 %v587, 0.0
    %v714 = vmax.f32 %v592, 0.0
    %v715 = vmax.f32 %v595, 0.0
    %v716 = vmax.f32 %v600, 0.0
    %v717 = vmax.f32 %v603, 0.0
    %v718 = vmax.f32 %v608, 0.0
    %v719 = vmax.f32 %v611, 0.0
    %v720 = vmax.f32 %v616, 0.0
    %v721 = vmax.f32 %v619, 0.0
    %v722 = vmax.f32 %v624, 0.0
    %v723 = vmax.f32 %v627, 0.0
    %v724 = vmax.f32 %v632, 0.0
    %v725 = vmax.f32 %v635, 0.0
    %v726 = vmax.f32 %v640, 0.0
    %v727 = vmax.f32 %v643, 0.0
    %v728 = vmax.f32 %v648, 0.0
    %v729 = vmax.f32 %v651, 0.0
    %v730 = vmax.f32 %v656, 0.0
    %v731 = vmax.f32 %v659, 0.0
    %v732 = vmax.f32 %v664, 0.0
    %v733 = vmax.f32 %v667, 0.0
    %v734 = vld [vmem:[%s1] sm:$0xf]
    %v735 = vld [vmem:[%s1 + $0x4] sm:$0xf]
    %v736 = vld [vmem:[%s1 + $0x8] sm:$0xf]
    %v737 = vld [vmem:[%s1 + $0xc] sm:$0xf]
    %v738 = vld [vmem:[%s1 + $0x10] sm:$0xf]
    %v739 = vld [vmem:[%s1 + $0x14] sm:$0xf]
    %v740 = vld [vmem:[%s1 + $0x18] sm:$0xf]
    %v741 = vld [vmem:[%s1 + $0x1c] sm:$0xf]
    %v742 = vld [vmem:[%s1 + $0x20] sm:$0xf]
    %v743 = vld [vmem:[%s1 + $0x24] sm:$0xf]
    %v744 = vld [vmem:[%s1 + $0x28] sm:$0xf]
    %v745 = vld [vmem:[%s1 + $0x2c] sm:$0xf]
    %v746 = vld [vmem:[%s1 + $0x30] sm:$0xf]
    %v747 = vld [vmem:[%s1 + $0x34] sm:$0xf]
    %v748 = vld [vmem:[%s1 + $0x38] sm:$0xf]
    %v749 = vld [vmem:[%s1 + $0x3c] sm:$0xf]
    %v750 = vld [vmem:[%s1 + $0x40] sm:$0xf]
    %v751 = vld [vmem:[%s1 + $0x44] sm:$0xf]
    %v752 = vld [vmem:[%s1 + $0x48] sm:$0xf]
    %v753 = vld [vmem:[%s1 + $0x4c] sm:$0xf]
    %v754 = vld [vmem:[%s1 + $0x50] sm:$0xf]
    %v755 = vld [vmem:[%s1 + $0x54] sm:$0xf]
    %v756 = vld [vmem:[%s1 + $0x58] sm:$0xf]
    %v757 = vld [vmem:[%s1 + $0x5c] sm:$0xf]
    %v758 = vld [vmem:[%s1 + $0x60] sm:$0xf]
    %v759 = vld [vmem:[%s1 + $0x64] sm:$0xf]
    %v760 = vld [vmem:[%s1 + $0x68] sm:$0xf]
    %v761 = vld [vmem:[%s1 + $0x6c] sm:$0xf]
    %v762 = vld [vmem:[%s1 + $0x70] sm:$0xf]
    %v763 = vld [vmem:[%s1 + $0x74] sm:$0xf]
    %v764 = vld [vmem:[%s1 + $0x78] sm:$0xf]
    %v765 = vld [vmem:[%s1 + $0x7c] sm:$0xf]
    %v766 = vld [vmem:[%s1 + $0x80] sm:$0xf]
    %v767 = vld [vmem:[%s1 + $0x84] sm:$0xf]
    %v768 = vld [vmem:[%s1 + $0x88] sm:$0xf]
    %v769 = vld [vmem:[%s1 + $0x8c] sm:$0xf]
    %v770 = vld [vmem:[%s1 + $0x90] sm:$0xf]
    %v771 = vld [vmem:[%s1 + $0x94] sm:$0xf]
    %v772 = vld [vmem:[%s1 + $0x98] sm:$0xf]
    %v773 = vld [vmem:[%s1 + $0x9c] sm:$0xf]
    %v774 = vld [vmem:[%s1 + $0xa0] sm:$0xf]
    %v775 = vld [vmem:[%s1 + $0xa4] sm:$0xf]
    %v776 = vld [vmem:[%s1 + $0xa8] sm:$0xf]
    %v777 = vld [vmem:[%s1 + $0xac] sm:$0xf]
    %v778 = vld [vmem:[%s1 + $0xb0] sm:$0xf]
    %v779 = vld [vmem:[%s1 + $0xb4] sm:$0xf]
    %v780 = vld [vmem:[%s1 + $0xb8] sm:$0xf]
    %v781 = vld [vmem:[%s1 + $0xbc] sm:$0xf]
    %v782 = vld [vmem:[%s1 + $0xc0] sm:$0xf]
    %v783 = vld [vmem:[%s1 + $0xc4] sm:$0xf]
    %v784 = vld [vmem:[%s1 + $0xc8] sm:$0xf]
    %v785 = vld [vmem:[%s1 + $0xcc] sm:$0xf]
    %v786 = vld [vmem:[%s1 + $0xd0] sm:$0xf]
    %v787 = vld [vmem:[%s1 + $0xd4] sm:$0xf]
    %v788 = vld [vmem:[%s1 + $0xd8] sm:$0xf]
    %v789 = vld [vmem:[%s1 + $0xdc] sm:$0xf]
    %v790 = vld [vmem:[%s1 + $0xe0] sm:$0xf]
    %v791 = vld [vmem:[%s1 + $0xe4] sm:$0xf]
    %v792 = vld [vmem:[%s1 + $0xe8] sm:$0xf]
    %v793 = vld [vmem:[%s1 + $0xec] sm:$0xf]
    %v794 = vld [vmem:[%s1 + $0xf0] sm:$0xf]
    %v795 = vld [vmem:[%s1 + $0xf4] sm:$0xf]
    %v796 = vld [vmem:[%s1 + $0xf8] sm:$0xf]
    %v797 = vld [vmem:[%s1 + $0xfc] sm:$0xf]
    %v862 = vunpack.c.l.b16 %v734
    %v863 = vunpack.c.l.b16 %v735
    %v864 = vunpack.c.l.b16 %v736
    %v865 = vunpack.c.l.b16 %v737
    %v866 = vunpack.c.l.b16 %v738
    %v867 = vunpack.c.l.b16 %v739
    %v868 = vunpack.c.l.b16 %v740
    %v869 = vunpack.c.l.b16 %v741
    %v870 = vunpack.c.l.b16 %v742
    %v871 = vunpack.c.l.b16 %v743
    %v872 = vunpack.c.l.b16 %v744
    %v873 = vunpack.c.l.b16 %v745
    %v874 = vunpack.c.l.b16 %v746
    %v875 = vunpack.c.l.b16 %v747
    %v876 = vunpack.c.l.b16 %v748
    %v877 = vunpack.c.l.b16 %v749
    %v878 = vunpack.c.l.b16 %v750
    %v879 = vunpack.c.l.b16 %v751
    %v880 = vunpack.c.l.b16 %v752
    %v881 = vunpack.c.l.b16 %v753
    %v882 = vunpack.c.l.b16 %v754
    %v883 = vunpack.c.l.b16 %v755
    %v884 = vunpack.c.l.b16 %v756
    %v885 = vunpack.c.l.b16 %v757
    %v886 = vunpack.c.l.b16 %v758
    %v887 = vunpack.c.l.b16 %v759
    %v888 = vunpack.c.l.b16 %v760
    %v889 = vunpack.c.l.b16 %v761
    %v890 = vunpack.c.l.b16 %v762
    %v891 = vunpack.c.l.b16 %v763
    %v892 = vunpack.c.l.b16 %v764
    %v893 = vunpack.c.l.b16 %v765
    %v894 = vunpack.c.l.b16 %v766
    %v895 = vunpack.c.l.b16 %v767
    %v896 = vunpack.c.l.b16 %v768
    %v897 = vunpack.c.l.b16 %v769
    %v898 = vunpack.c.l.b16 %v770
    %v899 = vunpack.c.l.b16 %v771
    %v900 = vunpack.c.l.b16 %v772
    %v901 = vunpack.c.l.b16 %v773
    %v902 = vunpack.c.l.b16 %v774
    %v903 = vunpack.c.l.b16 %v775
    %v904 = vunpack.c.l.b16 %v776
    %v905 = vunpack.c.l.b16 %v777
    %v906 = vunpack.c.l.b16 %v778
    %v907 = vunpack.c.l.b16 %v779
    %v908 = vunpack.c.l.b16 %v780
    %v909 = vunpack.c.l.b16 %v781
    %v910 = vunpack.c.l.b16 %v782
    %v911 = vunpack.c.l.b16 %v783
    %v912 = vunpack.c.l.b16 %v784
    %v913 = vunpack.c.l.b16 %v785
    %v914 = vunpack.c.l.b16 %v786
    %v915 = vunpack.c.l.b16 %v787
    %v916 = vunpack.c.l.b16 %v788
    %v917 = vunpack.c.l.b16 %v789
    %v918 = vunpack.c.l.b16 %v790
    %v919 = vunpack.c.l.b16 %v791
    %v920 = vunpack.c.l.b16 %v792
    %v921 = vunpack.c.l.b16 %v793
    %v922 = vunpack.c.l.b16 %v794
    %v923 = vunpack.c.l.b16 %v795
    %v924 = vunpack.c.l.b16 %v796
    %v925 = vunpack.c.l.b16 %v797
    %v926 = vpack.c.b16 %v863, %v862
    %v927 = vpack.c.b16 %v865, %v864
    %v928 = vpack.c.b16 %v867, %v866
    %v929 = vpack.c.b16 %v869, %v868
    %v930 = vpack.c.b16 %v871, %v870
    %v931 = vpack.c.b16 %v873, %v872
    %v932 = vpack.c.b16 %v875, %v874
    %v933 = vpack.c.b16 %v877, %v876
    %v934 = vpack.c.b16 %v879, %v878
    %v935 = vpack.c.b16 %v881, %v880
    %v936 = vpack.c.b16 %v883, %v882
    %v937 = vpack.c.b16 %v885, %v884
    %v938 = vpack.c.b16 %v887, %v886
    %v939 = vpack.c.b16 %v889, %v888
    %v940 = vpack.c.b16 %v891, %v890
    %v941 = vpack.c.b16 %v893, %v892
    %v942 = vpack.c.b16 %v895, %v894
    %v943 = vpack.c.b16 %v897, %v896
    %v944 = vpack.c.b16 %v899, %v898
    %v945 = vpack.c.b16 %v901, %v900
    %v946 = vpack.c.b16 %v903, %v902
    %v947 = vpack.c.b16 %v905, %v904
    %v948 = vpack.c.b16 %v907, %v906
    %v949 = vpack.c.b16 %v909, %v908
    %v950 = vpack.c.b16 %v911, %v910
    %v951 = vpack.c.b16 %v913, %v912
    %v952 = vpack.c.b16 %v915, %v914
    %v953 = vpack.c.b16 %v917, %v916
    %v954 = vpack.c.b16 %v919, %v918
    %v955 = vpack.c.b16 %v921, %v920
    %v956 = vpack.c.b16 %v923, %v922
    %v957 = vpack.c.b16 %v925, %v924
    %v959 = vsel %vm277, %v926, 0
    %v962 = vsel %vm277, %v927, 0
    %v965 = vsel %vm277, %v928, 0
    %v968 = vsel %vm277, %v929, 0
    %v971 = vsel %vm277, %v930, 0
    %v974 = vsel %vm277, %v931, 0
    %v977 = vsel %vm277, %v932, 0
    %v980 = vsel %vm277, %v933, 0
    %v983 = vsel %vm277, %v934, 0
    %v986 = vsel %vm277, %v935, 0
    %v989 = vsel %vm277, %v936, 0
    %v992 = vsel %vm277, %v937, 0
    %v995 = vsel %vm277, %v938, 0
    %v998 = vsel %vm277, %v939, 0
    %v1001 = vsel %vm277, %v940, 0
    %v1004 = vsel %vm277, %v941, 0
    %v1007 = vsel %vm277, %v942, 0
    %v1010 = vsel %vm277, %v943, 0
    %v1013 = vsel %vm277, %v944, 0
    %v1016 = vsel %vm277, %v945, 0
    %v1019 = vsel %vm277, %v946, 0
    %v1022 = vsel %vm277, %v947, 0
    %v1025 = vsel %vm277, %v948, 0
    %v1028 = vsel %vm277, %v949, 0
    %v1031 = vsel %vm277, %v950, 0
    %v1034 = vsel %vm277, %v951, 0
    %v1037 = vsel %vm277, %v952, 0
    %v1040 = vsel %vm277, %v953, 0
    %v1043 = vsel %vm277, %v954, 0
    %v1046 = vsel %vm277, %v955, 0
    %v1049 = vsel %vm277, %v956, 0
    %v1052 = vsel %vm277, %v957, 0
    %1054 = vmatprep.subr.bf16.mxu0 0
    %1055 = vmatpush1.bf16.msra.mxu0 0
    %1056 = vmatprep.subr.bf16.mxu0 0
    %1057 = vmatpush1.bf16.msra.mxu0 0
    %1058 = vmatprep.subr.bf16.mxu0 0
    %1059 = vmatpush1.bf16.msra.mxu0 0
    %1060 = vmatprep.subr.bf16.mxu0 0
    %1061 = vmatpush1.bf16.msra.mxu0 0
    %1062 = vmatprep.subr.bf16.mxu0 0
    %1063 = vmatpush1.bf16.msra.mxu0 0
    %1064 = vmatprep.subr.bf16.mxu0 0
    %1065 = vmatpush1.bf16.msra.mxu0 0
    %1066 = vmatprep.subr.bf16.mxu0 0
    %1067 = vmatpush1.bf16.msra.mxu0 %v379
    %1068 = vmatprep.subr.bf16.mxu0 0
    %1069 = vmatpush1.bf16.msra.mxu0 %v274
    %1070 = vmatprep.subr.bf16.mxu0 0
    %1071 = vmatpush2.bf16.msra.mxu0 0
    %1072 = vmatprep.subr.bf16.mxu0 0
    %1073 = vmatpush2.bf16.msra.mxu0 0
    %1074 = vmatprep.subr.bf16.mxu0 0
    %1075 = vmatpush2.bf16.msra.mxu0 0
    %1076 = vmatprep.subr.bf16.mxu0 0
    %1077 = vmatpush2.bf16.msra.mxu0 0
    %1078 = vmatprep.subr.bf16.mxu0 0
    %1079 = vmatpush2.bf16.msra.mxu0 0
    %1080 = vmatprep.subr.bf16.mxu0 0
    %1081 = vmatpush2.bf16.msra.mxu0 0
    %1082 = vmatprep.subr.bf16.mxu0 0
    %1083 = vmatpush2.bf16.msra.mxu0 0
    %1084 = vmatprep.subr.bf16.mxu0 0
    %1085 = vmatpush2.bf16.msra.mxu0 0
    %1086 = vmatprep.mubr.bf16.mxu0 0
    %1087 = vmatmul.mubr.bf16.gmra.mxu0 %v959
    %v1088 = vpop.f32.mrf.mxu0
    %v1089 = vadd.f32 %v104, %v1088
    %v1090 = vpop.f32.mrf.mxu0
    %v1091 = vpop.f32.mrf.mxu0
    %v1092 = vadd.f32 %v104, %v1091
    %v1093 = vpop.f32.mrf.mxu0
    %1094 = vmatprep.mubr.bf16.mxu0 0
    %1095 = vmatmul.mubr.bf16.gmra.mxu0 %v962
    %v1096 = vpop.f32.mrf.mxu0
    %v1097 = vadd.f32 %v104, %v1096
    %v1098 = vpop.f32.mrf.mxu0
    %v1099 = vpop.f32.mrf.mxu0
    %v1100 = vadd.f32 %v104, %v1099
    %v1101 = vpop.f32.mrf.mxu0
    %1102 = vmatprep.mubr.bf16.mxu0 0
    %1103 = vmatmul.mubr.bf16.gmra.mxu0 %v965
    %v1104 = vpop.f32.mrf.mxu0
    %v1105 = vadd.f32 %v104, %v1104
    %v1106 = vpop.f32.mrf.mxu0
    %v1107 = vpop.f32.mrf.mxu0
    %v1108 = vadd.f32 %v104, %v1107
    %v1109 = vpop.f32.mrf.mxu0
    %1110 = vmatprep.mubr.bf16.mxu0 0
    %1111 = vmatmul.mubr.bf16.gmra.mxu0 %v968
    %v1112 = vpop.f32.mrf.mxu0
    %v1113 = vadd.f32 %v104, %v1112
    %v1114 = vpop.f32.mrf.mxu0
    %v1115 = vpop.f32.mrf.mxu0
    %v1116 = vadd.f32 %v104, %v1115
    %v1117 = vpop.f32.mrf.mxu0
    %1118 = vmatprep.mubr.bf16.mxu0 0
    %1119 = vmatmul.mubr.bf16.gmra.mxu0 %v971
    %v1120 = vpop.f32.mrf.mxu0
    %v1121 = vadd.f32 %v104, %v1120
    %v1122 = vpop.f32.mrf.mxu0
    %v1123 = vpop.f32.mrf.mxu0
    %v1124 = vadd.f32 %v104, %v1123
    %v1125 = vpop.f32.mrf.mxu0
    %1126 = vmatprep.mubr.bf16.mxu0 0
    %1127 = vmatmul.mubr.bf16.gmra.mxu0 %v974
    %v1128 = vpop.f32.mrf.mxu0
    %v1129 = vadd.f32 %v104, %v1128
    %v1130 = vpop.f32.mrf.mxu0
    %v1131 = vpop.f32.mrf.mxu0
    %v1132 = vadd.f32 %v104, %v1131
    %v1133 = vpop.f32.mrf.mxu0
    %1134 = vmatprep.mubr.bf16.mxu0 0
    %1135 = vmatmul.mubr.bf16.gmra.mxu0 %v977
    %v1136 = vpop.f32.mrf.mxu0
    %v1137 = vadd.f32 %v104, %v1136
    %v1138 = vpop.f32.mrf.mxu0
    %v1139 = vpop.f32.mrf.mxu0
    %v1140 = vadd.f32 %v104, %v1139
    %v1141 = vpop.f32.mrf.mxu0
    %1142 = vmatprep.mubr.bf16.mxu0 0
    %1143 = vmatmul.mubr.bf16.gmra.mxu0 %v980
    %v1144 = vpop.f32.mrf.mxu0
    %v1145 = vadd.f32 %v104, %v1144
    %v1146 = vpop.f32.mrf.mxu0
    %v1147 = vpop.f32.mrf.mxu0
    %v1148 = vadd.f32 %v104, %v1147
    %v1149 = vpop.f32.mrf.mxu0
    %1150 = vmatprep.mubr.bf16.mxu0 0
    %1151 = vmatmul.mubr.bf16.gmra.mxu0 %v983
    %v1152 = vpop.f32.mrf.mxu0
    %v1153 = vadd.f32 %v104, %v1152
    %v1154 = vpop.f32.mrf.mxu0
    %v1155 = vpop.f32.mrf.mxu0
    %v1156 = vadd.f32 %v104, %v1155
    %v1157 = vpop.f32.mrf.mxu0
    %1158 = vmatprep.mubr.bf16.mxu0 0
    %1159 = vmatmul.mubr.bf16.gmra.mxu0 %v986
    %v1160 = vpop.f32.mrf.mxu0
    %v1161 = vadd.f32 %v104, %v1160
    %v1162 = vpop.f32.mrf.mxu0
    %v1163 = vpop.f32.mrf.mxu0
    %v1164 = vadd.f32 %v104, %v1163
    %v1165 = vpop.f32.mrf.mxu0
    %1166 = vmatprep.mubr.bf16.mxu0 0
    %1167 = vmatmul.mubr.bf16.gmra.mxu0 %v989
    %v1168 = vpop.f32.mrf.mxu0
    %v1169 = vadd.f32 %v104, %v1168
    %v1170 = vpop.f32.mrf.mxu0
    %v1171 = vpop.f32.mrf.mxu0
    %v1172 = vadd.f32 %v104, %v1171
    %v1173 = vpop.f32.mrf.mxu0
    %1174 = vmatprep.mubr.bf16.mxu0 0
    %1175 = vmatmul.mubr.bf16.gmra.mxu0 %v992
    %v1176 = vpop.f32.mrf.mxu0
    %v1177 = vadd.f32 %v104, %v1176
    %v1178 = vpop.f32.mrf.mxu0
    %v1179 = vpop.f32.mrf.mxu0
    %v1180 = vadd.f32 %v104, %v1179
    %v1181 = vpop.f32.mrf.mxu0
    %1182 = vmatprep.mubr.bf16.mxu0 0
    %1183 = vmatmul.mubr.bf16.gmra.mxu0 %v995
    %v1184 = vpop.f32.mrf.mxu0
    %v1185 = vadd.f32 %v104, %v1184
    %v1186 = vpop.f32.mrf.mxu0
    %v1187 = vpop.f32.mrf.mxu0
    %v1188 = vadd.f32 %v104, %v1187
    %v1189 = vpop.f32.mrf.mxu0
    %1190 = vmatprep.mubr.bf16.mxu0 0
    %1191 = vmatmul.mubr.bf16.gmra.mxu0 %v998
    %v1192 = vpop.f32.mrf.mxu0
    %v1193 = vadd.f32 %v104, %v1192
    %v1194 = vpop.f32.mrf.mxu0
    %v1195 = vpop.f32.mrf.mxu0
    %v1196 = vadd.f32 %v104, %v1195
    %v1197 = vpop.f32.mrf.mxu0
    %1198 = vmatprep.mubr.bf16.mxu0 0
    %1199 = vmatmul.mubr.bf16.gmra.mxu0 %v1001
    %v1200 = vpop.f32.mrf.mxu0
    %v1201 = vadd.f32 %v104, %v1200
    %v1202 = vpop.f32.mrf.mxu0
    %v1203 = vpop.f32.mrf.mxu0
    %v1204 = vadd.f32 %v104, %v1203
    %v1205 = vpop.f32.mrf.mxu0
    %1206 = vmatprep.mubr.bf16.mxu0 0
    %1207 = vmatmul.mubr.bf16.gmra.mxu0 %v1004
    %v1208 = vpop.f32.mrf.mxu0
    %v1209 = vadd.f32 %v104, %v1208
    %v1210 = vpop.f32.mrf.mxu0
    %v1211 = vpop.f32.mrf.mxu0
    %v1212 = vadd.f32 %v104, %v1211
    %v1213 = vpop.f32.mrf.mxu0
    %1214 = vmatprep.mubr.bf16.mxu0 0
    %1215 = vmatmul.mubr.bf16.gmra.mxu0 %v1007
    %v1216 = vpop.f32.mrf.mxu0
    %v1217 = vadd.f32 %v104, %v1216
    %v1218 = vpop.f32.mrf.mxu0
    %v1219 = vpop.f32.mrf.mxu0
    %v1220 = vadd.f32 %v104, %v1219
    %v1221 = vpop.f32.mrf.mxu0
    %1222 = vmatprep.mubr.bf16.mxu0 0
    %1223 = vmatmul.mubr.bf16.gmra.mxu0 %v1010
    %v1224 = vpop.f32.mrf.mxu0
    %v1225 = vadd.f32 %v104, %v1224
    %v1226 = vpop.f32.mrf.mxu0
    %v1227 = vpop.f32.mrf.mxu0
    %v1228 = vadd.f32 %v104, %v1227
    %v1229 = vpop.f32.mrf.mxu0
    %1230 = vmatprep.mubr.bf16.mxu0 0
    %1231 = vmatmul.mubr.bf16.gmra.mxu0 %v1013
    %v1232 = vpop.f32.mrf.mxu0
    %v1233 = vadd.f32 %v104, %v1232
    %v1234 = vpop.f32.mrf.mxu0
    %v1235 = vpop.f32.mrf.mxu0
    %v1236 = vadd.f32 %v104, %v1235
    %v1237 = vpop.f32.mrf.mxu0
    %1238 = vmatprep.mubr.bf16.mxu0 0
    %1239 = vmatmul.mubr.bf16.gmra.mxu0 %v1016
    %v1240 = vpop.f32.mrf.mxu0
    %v1241 = vadd.f32 %v104, %v1240
    %v1242 = vpop.f32.mrf.mxu0
    %v1243 = vpop.f32.mrf.mxu0
    %v1244 = vadd.f32 %v104, %v1243
    %v1245 = vpop.f32.mrf.mxu0
    %1246 = vmatprep.mubr.bf16.mxu0 0
    %1247 = vmatmul.mubr.bf16.gmra.mxu0 %v1019
    %v1248 = vpop.f32.mrf.mxu0
    %v1249 = vadd.f32 %v104, %v1248
    %v1250 = vpop.f32.mrf.mxu0
    %v1251 = vpop.f32.mrf.mxu0
    %v1252 = vadd.f32 %v104, %v1251
    %v1253 = vpop.f32.mrf.mxu0
    %1254 = vmatprep.mubr.bf16.mxu0 0
    %1255 = vmatmul.mubr.bf16.gmra.mxu0 %v1022
    %v1256 = vpop.f32.mrf.mxu0
    %v1257 = vadd.f32 %v104, %v1256
    %v1258 = vpop.f32.mrf.mxu0
    %v1259 = vpop.f32.mrf.mxu0
    %v1260 = vadd.f32 %v104, %v1259
    %v1261 = vpop.f32.mrf.mxu0
    %1262 = vmatprep.mubr.bf16.mxu0 0
    %1263 = vmatmul.mubr.bf16.gmra.mxu0 %v1025
    %v1264 = vpop.f32.mrf.mxu0
    %v1265 = vadd.f32 %v104, %v1264
    %v1266 = vpop.f32.mrf.mxu0
    %v1267 = vpop.f32.mrf.mxu0
    %v1268 = vadd.f32 %v104, %v1267
    %v1269 = vpop.f32.mrf.mxu0
    %1270 = vmatprep.mubr.bf16.mxu0 0
    %1271 = vmatmul.mubr.bf16.gmra.mxu0 %v1028
    %v1272 = vpop.f32.mrf.mxu0
    %v1273 = vadd.f32 %v104, %v1272
    %v1274 = vpop.f32.mrf.mxu0
    %v1275 = vpop.f32.mrf.mxu0
    %v1276 = vadd.f32 %v104, %v1275
    %v1277 = vpop.f32.mrf.mxu0
    %1278 = vmatprep.mubr.bf16.mxu0 0
    %1279 = vmatmul.mubr.bf16.gmra.mxu0 %v1031
    %v1280 = vpop.f32.mrf.mxu0
    %v1281 = vadd.f32 %v104, %v1280
    %v1282 = vpop.f32.mrf.mxu0
    %v1283 = vpop.f32.mrf.mxu0
    %v1284 = vadd.f32 %v104, %v1283
    %v1285 = vpop.f32.mrf.mxu0
    %1286 = vmatprep.mubr.bf16.mxu0 0
    %1287 = vmatmul.mubr.bf16.gmra.mxu0 %v1034
    %v1288 = vpop.f32.mrf.mxu0
    %v1289 = vadd.f32 %v104, %v1288
    %v1290 = vpop.f32.mrf.mxu0
    %v1291 = vpop.f32.mrf.mxu0
    %v1292 = vadd.f32 %v104, %v1291
    %v1293 = vpop.f32.mrf.mxu0
    %1294 = vmatprep.mubr.bf16.mxu0 0
    %1295 = vmatmul.mubr.bf16.gmra.mxu0 %v1037
    %v1296 = vpop.f32.mrf.mxu0
    %v1297 = vadd.f32 %v104, %v1296
    %v1298 = vpop.f32.mrf.mxu0
    %v1299 = vpop.f32.mrf.mxu0
    %v1300 = vadd.f32 %v104, %v1299
    %v1301 = vpop.f32.mrf.mxu0
    %1302 = vmatprep.mubr.bf16.mxu0 0
    %1303 = vmatmul.mubr.bf16.gmra.mxu0 %v1040
    %v1304 = vpop.f32.mrf.mxu0
    %v1305 = vadd.f32 %v104, %v1304
    %v1306 = vpop.f32.mrf.mxu0
    %v1307 = vpop.f32.mrf.mxu0
    %v1308 = vadd.f32 %v104, %v1307
    %v1309 = vpop.f32.mrf.mxu0
    %1310 = vmatprep.mubr.bf16.mxu0 0
    %1311 = vmatmul.mubr.bf16.gmra.mxu0 %v1043
    %v1312 = vpop.f32.mrf.mxu0
    %v1313 = vadd.f32 %v104, %v1312
    %v1314 = vpop.f32.mrf.mxu0
    %v1315 = vpop.f32.mrf.mxu0
    %v1316 = vadd.f32 %v104, %v1315
    %v1317 = vpop.f32.mrf.mxu0
    %1318 = vmatprep.mubr.bf16.mxu0 0
    %1319 = vmatmul.mubr.bf16.gmra.mxu0 %v1046
    %v1320 = vpop.f32.mrf.mxu0
    %v1321 = vadd.f32 %v104, %v1320
    %v1322 = vpop.f32.mrf.mxu0
    %v1323 = vpop.f32.mrf.mxu0
    %v1324 = vadd.f32 %v104, %v1323
    %v1325 = vpop.f32.mrf.mxu0
    %1326 = vmatprep.mubr.bf16.mxu0 0
    %1327 = vmatmul.mubr.bf16.gmra.mxu0 %v1049
    %v1328 = vpop.f32.mrf.mxu0
    %v1329 = vadd.f32 %v104, %v1328
    %v1330 = vpop.f32.mrf.mxu0
    %v1331 = vpop.f32.mrf.mxu0
    %v1332 = vadd.f32 %v104, %v1331
    %v1333 = vpop.f32.mrf.mxu0
    %1334 = vmatprep.mubr.bf16.mxu0 0
    %1335 = vmatmul.mubr.bf16.gmra.mxu0 %v1052
    %v1336 = vpop.f32.mrf.mxu0
    %v1337 = vadd.f32 %v104, %v1336
    %v1338 = vpop.f32.mrf.mxu0
    %v1339 = vpop.f32.mrf.mxu0
    %v1340 = vadd.f32 %v104, %v1339
    %v1341 = vpop.f32.mrf.mxu0
    %1342 = vdwg.mxu0
    %v1343 = vmax.f32 %v1089, 0.0
    %v1344 = vmax.f32 %v1092, 0.0
    %v1345 = vmax.f32 %v1097, 0.0
    %v1346 = vmax.f32 %v1100, 0.0
    %v1347 = vmax.f32 %v1105, 0.0
    %v1348 = vmax.f32 %v1108, 0.0
    %v1349 = vmax.f32 %v1113, 0.0
    %v1350 = vmax.f32 %v1116, 0.0
    %v1351 = vmax.f32 %v1121, 0.0
    %v1352 = vmax.f32 %v1124, 0.0
    %v1353 = vmax.f32 %v1129, 0.0
    %v1354 = vmax.f32 %v1132, 0.0
    %v1355 = vmax.f32 %v1137, 0.0
    %v1356 = vmax.f32 %v1140, 0.0
    %v1357 = vmax.f32 %v1145, 0.0
    %v1358 = vmax.f32 %v1148, 0.0
    %v1359 = vmax.f32 %v1153, 0.0
    %v1360 = vmax.f32 %v1156, 0.0
    %v1361 = vmax.f32 %v1161, 0.0
    %v1362 = vmax.f32 %v1164, 0.0
    %v1363 = vmax.f32 %v1169, 0.0
    %v1364 = vmax.f32 %v1172, 0.0
    %v1365 = vmax.f32 %v1177, 0.0
    %v1366 = vmax.f32 %v1180, 0.0
    %v1367 = vmax.f32 %v1185, 0.0
    %v1368 = vmax.f32 %v1188, 0.0
    %v1369 = vmax.f32 %v1193, 0.0
    %v1370 = vmax.f32 %v1196, 0.0
    %v1371 = vmax.f32 %v1201, 0.0
    %v1372 = vmax.f32 %v1204, 0.0
    %v1373 = vmax.f32 %v1209, 0.0
    %v1374 = vmax.f32 %v1212, 0.0
    %v1375 = vmax.f32 %v1217, 0.0
    %v1376 = vmax.f32 %v1220, 0.0
    %v1377 = vmax.f32 %v1225, 0.0
    %v1378 = vmax.f32 %v1228, 0.0
    %v1379 = vmax.f32 %v1233, 0.0
    %v1380 = vmax.f32 %v1236, 0.0
    %v1381 = vmax.f32 %v1241, 0.0
    %v1382 = vmax.f32 %v1244, 0.0
    %v1383 = vmax.f32 %v1249, 0.0
    %v1384 = vmax.f32 %v1252, 0.0
    %v1385 = vmax.f32 %v1257, 0.0
    %v1386 = vmax.f32 %v1260, 0.0
    %v1387 = vmax.f32 %v1265, 0.0
    %v1388 = vmax.f32 %v1268, 0.0
    %v1389 = vmax.f32 %v1273, 0.0
    %v1390 = vmax.f32 %v1276, 0.0
    %v1391 = vmax.f32 %v1281, 0.0
    %v1392 = vmax.f32 %v1284, 0.0
    %v1393 = vmax.f32 %v1289, 0.0
    %v1394 = vmax.f32 %v1292, 0.0
    %v1395 = vmax.f32 %v1297, 0.0
    %v1396 = vmax.f32 %v1300, 0.0
    %v1397 = vmax.f32 %v1305, 0.0
    %v1398 = vmax.f32 %v1308, 0.0
    %v1399 = vmax.f32 %v1313, 0.0
    %v1400 = vmax.f32 %v1316, 0.0
    %v1401 = vmax.f32 %v1321, 0.0
    %v1402 = vmax.f32 %v1324, 0.0
    %v1403 = vmax.f32 %v1329, 0.0
    %v1404 = vmax.f32 %v1332, 0.0
    %v1405 = vmax.f32 %v1337, 0.0
    %v1406 = vmax.f32 %v1340, 0.0
    %v1407 = vpack.c.bf16 %v671, %v670
    %v1408 = vpack.c.bf16 %v673, %v672
    %v1409 = vpack.c.bf16 %v675, %v674
    %v1410 = vpack.c.bf16 %v677, %v676
    %v1411 = vpack.c.bf16 %v679, %v678
    %v1412 = vpack.c.bf16 %v681, %v680
    %v1413 = vpack.c.bf16 %v683, %v682
    %v1414 = vpack.c.bf16 %v685, %v684
    %v1415 = vpack.c.bf16 %v687, %v686
    %v1416 = vpack.c.bf16 %v689, %v688
    %v1417 = vpack.c.bf16 %v691, %v690
    %v1418 = vpack.c.bf16 %v693, %v692
    %v1419 = vpack.c.bf16 %v695, %v694
    %v1420 = vpack.c.bf16 %v697, %v696
    %v1421 = vpack.c.bf16 %v699, %v698
    %v1422 = vpack.c.bf16 %v701, %v700
    %v1423 = vpack.c.bf16 %v703, %v702
    %v1424 = vpack.c.bf16 %v705, %v704
    %v1425 = vpack.c.bf16 %v707, %v706
    %v1426 = vpack.c.bf16 %v709, %v708
    %v1427 = vpack.c.bf16 %v711, %v710
    %v1428 = vpack.c.bf16 %v713, %v712
    %v1429 = vpack.c.bf16 %v715, %v714
    %v1430 = vpack.c.bf16 %v717, %v716
    %v1431 = vpack.c.bf16 %v719, %v718
    %v1432 = vpack.c.bf16 %v721, %v720
    %v1433 = vpack.c.bf16 %v723, %v722
    %v1434 = vpack.c.bf16 %v725, %v724
    %v1435 = vpack.c.bf16 %v727, %v726
    %v1436 = vpack.c.bf16 %v729, %v728
    %v1437 = vpack.c.bf16 %v731, %v730
    %v1438 = vpack.c.bf16 %v733, %v732
    %v1471 = vunpack.c.l.b16 %v1407
    %v1472 = vunpack.c.h.b16 %v1407
    %v1473 = vunpack.c.l.b16 %v1408
    %v1474 = vunpack.c.h.b16 %v1408
    %v1475 = vunpack.c.l.b16 %v1409
    %v1476 = vunpack.c.h.b16 %v1409
    %v1477 = vunpack.c.l.b16 %v1410
    %v1478 = vunpack.c.h.b16 %v1410
    %v1479 = vunpack.c.l.b16 %v1411
    %v1480 = vunpack.c.h.b16 %v1411
    %v1481 = vunpack.c.l.b16 %v1412
    %v1482 = vunpack.c.h.b16 %v1412
    %v1483 = vunpack.c.l.b16 %v1413
    %v1484 = vunpack.c.h.b16 %v1413
    %v1485 = vunpack.c.l.b16 %v1414
    %v1486 = vunpack.c.h.b16 %v1414
    %v1487 = vunpack.c.l.b16 %v1415
    %v1488 = vunpack.c.h.b16 %v1415
    %v1489 = vunpack.c.l.b16 %v1416
    %v1490 = vunpack.c.h.b16 %v1416
    %v1491 = vunpack.c.l.b16 %v1417
    %v1492 = vunpack.c.h.b16 %v1417
    %v1493 = vunpack.c.l.b16 %v1418
    %v1494 = vunpack.c.h.b16 %v1418
    %v1495 = vunpack.c.l.b16 %v1419
    %v1496 = vunpack.c.h.b16 %v1419
    %v1497 = vunpack.c.l.b16 %v1420
    %v1498 = vunpack.c.h.b16 %v1420
    %v1499 = vunpack.c.l.b16 %v1421
    %v1500 = vunpack.c.h.b16 %v1421
    %v1501 = vunpack.c.l.b16 %v1422
    %v1502 = vunpack.c.h.b16 %v1422
    %v1503 = vunpack.c.l.b16 %v1423
    %v1504 = vunpack.c.h.b16 %v1423
    %v1505 = vunpack.c.l.b16 %v1424
    %v1506 = vunpack.c.h.b16 %v1424
    %v1507 = vunpack.c.l.b16 %v1425
    %v1508 = vunpack.c.h.b16 %v1425
    %v1509 = vunpack.c.l.b16 %v1426
    %v1510 = vunpack.c.h.b16 %v1426
    %v1511 = vunpack.c.l.b16 %v1427
    %v1512 = vunpack.c.h.b16 %v1427
    %v1513 = vunpack.c.l.b16 %v1428
    %v1514 = vunpack.c.h.b16 %v1428
    %v1515 = vunpack.c.l.b16 %v1429
    %v1516 = vunpack.c.h.b16 %v1429
    %v1517 = vunpack.c.l.b16 %v1430
    %v1518 = vunpack.c.h.b16 %v1430
    %v1519 = vunpack.c.l.b16 %v1431
    %v1520 = vunpack.c.h.b16 %v1431
    %v1521 = vunpack.c.l.b16 %v1432
    %v1522 = vunpack.c.h.b16 %v1432
    %v1523 = vunpack.c.l.b16 %v1433
    %v1524 = vunpack.c.h.b16 %v1433
    %v1525 = vunpack.c.l.b16 %v1434
    %v1526 = vunpack.c.h.b16 %v1434
    %v1527 = vunpack.c.l.b16 %v1435
    %v1528 = vunpack.c.h.b16 %v1435
    %v1529 = vunpack.c.l.b16 %v1436
    %v1530 = vunpack.c.h.b16 %v1436
    %v1531 = vunpack.c.l.b16 %v1437
    %v1532 = vunpack.c.h.b16 %v1437
    %v1533 = vunpack.c.l.b16 %v1438
    %v1534 = vunpack.c.h.b16 %v1438
    %v1535 = vpack.c.b16 %v1471, %v1471
    %v1536 = vpack.c.b16 %v1472, %v1472
    %v1537 = vpack.c.b16 %v1473, %v1473
    %v1538 = vpack.c.b16 %v1474, %v1474
    %v1539 = vpack.c.b16 %v1475, %v1475
    %v1540 = vpack.c.b16 %v1476, %v1476
    %v1541 = vpack.c.b16 %v1477, %v1477
    %v1542 = vpack.c.b16 %v1478, %v1478
    %v1543 = vpack.c.b16 %v1479, %v1479
    %v1544 = vpack.c.b16 %v1480, %v1480
    %v1545 = vpack.c.b16 %v1481, %v1481
    %v1546 = vpack.c.b16 %v1482, %v1482
    %v1547 = vpack.c.b16 %v1483, %v1483
    %v1548 = vpack.c.b16 %v1484, %v1484
    %v1549 = vpack.c.b16 %v1485, %v1485
    %v1550 = vpack.c.b16 %v1486, %v1486
    %v1551 = vpack.c.b16 %v1487, %v1487
    %v1552 = vpack.c.b16 %v1488, %v1488
    %v1553 = vpack.c.b16 %v1489, %v1489
    %v1554 = vpack.c.b16 %v1490, %v1490
    %v1555 = vpack.c.b16 %v1491, %v1491
    %v1556 = vpack.c.b16 %v1492, %v1492
    %v1557 = vpack.c.b16 %v1493, %v1493
    %v1558 = vpack.c.b16 %v1494, %v1494
    %v1559 = vpack.c.b16 %v1495, %v1495
    %v1560 = vpack.c.b16 %v1496, %v1496
    %v1561 = vpack.c.b16 %v1497, %v1497
    %v1562 = vpack.c.b16 %v1498, %v1498
    %v1563 = vpack.c.b16 %v1499, %v1499
    %v1564 = vpack.c.b16 %v1500, %v1500
    %v1565 = vpack.c.b16 %v1501, %v1501
    %v1566 = vpack.c.b16 %v1502, %v1502
    %v1567 = vpack.c.b16 %v1503, %v1503
    %v1568 = vpack.c.b16 %v1504, %v1504
    %v1569 = vpack.c.b16 %v1505, %v1505
    %v1570 = vpack.c.b16 %v1506, %v1506
    %v1571 = vpack.c.b16 %v1507, %v1507
    %v1572 = vpack.c.b16 %v1508, %v1508
    %v1573 = vpack.c.b16 %v1509, %v1509
    %v1574 = vpack.c.b16 %v1510, %v1510
    %v1575 = vpack.c.b16 %v1511, %v1511
    %v1576 = vpack.c.b16 %v1512, %v1512
    %v1577 = vpack.c.b16 %v1513, %v1513
    %v1578 = vpack.c.b16 %v1514, %v1514
    %v1579 = vpack.c.b16 %v1515, %v1515
    %v1580 = vpack.c.b16 %v1516, %v1516
    %v1581 = vpack.c.b16 %v1517, %v1517
    %v1582 = vpack.c.b16 %v1518, %v1518
    %v1583 = vpack.c.b16 %v1519, %v1519
    %v1584 = vpack.c.b16 %v1520, %v1520
    %v1585 = vpack.c.b16 %v1521, %v1521
    %v1586 = vpack.c.b16 %v1522, %v1522
    %v1587 = vpack.c.b16 %v1523, %v1523
    %v1588 = vpack.c.b16 %v1524, %v1524
    %v1589 = vpack.c.b16 %v1525, %v1525
    %v1590 = vpack.c.b16 %v1526, %v1526
    %v1591 = vpack.c.b16 %v1527, %v1527
    %v1592 = vpack.c.b16 %v1528, %v1528
    %v1593 = vpack.c.b16 %v1529, %v1529
    %v1594 = vpack.c.b16 %v1530, %v1530
    %v1595 = vpack.c.b16 %v1531, %v1531
    %v1596 = vpack.c.b16 %v1532, %v1532
    %v1597 = vpack.c.b16 %v1533, %v1533
    %v1598 = vpack.c.b16 %v1534, %v1534
    %vm1663 = vcmask 60416
    %1664 = vst.msk [vmem:[%s5] sm:$0xf] %vm1663, %v1535
    %1665 = vst.msk [vmem:[%s5 + $0x4] sm:$0xf] %vm1663, %v1536
    %1666 = vst.msk [vmem:[%s5 + $0x8] sm:$0xf] %vm1663, %v1537
    %1667 = vst.msk [vmem:[%s5 + $0xc] sm:$0xf] %vm1663, %v1538
    %1668 = vst.msk [vmem:[%s5 + $0x10] sm:$0xf] %vm1663, %v1539
    %1669 = vst.msk [vmem:[%s5 + $0x14] sm:$0xf] %vm1663, %v1540
    %1670 = vst.msk [vmem:[%s5 + $0x18] sm:$0xf] %vm1663, %v1541
    %1671 = vst.msk [vmem:[%s5 + $0x1c] sm:$0xf] %vm1663, %v1542
    %1672 = vst.msk [vmem:[%s5 + $0x20] sm:$0xf] %vm1663, %v1543
    %1673 = vst.msk [vmem:[%s5 + $0x24] sm:$0xf] %vm1663, %v1544
    %1674 = vst.msk [vmem:[%s5 + $0x28] sm:$0xf] %vm1663, %v1545
    %1675 = vst.msk [vmem:[%s5 + $0x2c] sm:$0xf] %vm1663, %v1546
    %1676 = vst.msk [vmem:[%s5 + $0x30] sm:$0xf] %vm1663, %v1547
    %1677 = vst.msk [vmem:[%s5 + $0x34] sm:$0xf] %vm1663, %v1548
    %1678 = vst.msk [vmem:[%s5 + $0x38] sm:$0xf] %vm1663, %v1549
    %1679 = vst.msk [vmem:[%s5 + $0x3c] sm:$0xf] %vm1663, %v1550
    %1680 = vst.msk [vmem:[%s5 + $0x40] sm:$0xf] %vm1663, %v1551
    %1681 = vst.msk [vmem:[%s5 + $0x44] sm:$0xf] %vm1663, %v1552
    %1682 = vst.msk [vmem:[%s5 + $0x48] sm:$0xf] %vm1663, %v1553
    %1683 = vst.msk [vmem:[%s5 + $0x4c] sm:$0xf] %vm1663, %v1554
    %1684 = vst.msk [vmem:[%s5 + $0x50] sm:$0xf] %vm1663, %v1555
    %1685 = vst.msk [vmem:[%s5 + $0x54] sm:$0xf] %vm1663, %v1556
    %1686 = vst.msk [vmem:[%s5 + $0x58] sm:$0xf] %vm1663, %v1557
    %1687 = vst.msk [vmem:[%s5 + $0x5c] sm:$0xf] %vm1663, %v1558
    %1688 = vst.msk [vmem:[%s5 + $0x60] sm:$0xf] %vm1663, %v1559
    %1689 = vst.msk [vmem:[%s5 + $0x64] sm:$0xf] %vm1663, %v1560
    %1690 = vst.msk [vmem:[%s5 + $0x68] sm:$0xf] %vm1663, %v1561
    %1691 = vst.msk [vmem:[%s5 + $0x6c] sm:$0xf] %vm1663, %v1562
    %1692 = vst.msk [vmem:[%s5 + $0x70] sm:$0xf] %vm1663, %v1563
    %1693 = vst.msk [vmem:[%s5 + $0x74] sm:$0xf] %vm1663, %v1564
    %1694 = vst.msk [vmem:[%s5 + $0x78] sm:$0xf] %vm1663, %v1565
    %1695 = vst.msk [vmem:[%s5 + $0x7c] sm:$0xf] %vm1663, %v1566
    %1696 = vst.msk [vmem:[%s5 + $0x80] sm:$0xf] %vm1663, %v1567
    %1697 = vst.msk [vmem:[%s5 + $0x84] sm:$0xf] %vm1663, %v1568
    %1698 = vst.msk [vmem:[%s5 + $0x88] sm:$0xf] %vm1663, %v1569
    %1699 = vst.msk [vmem:[%s5 + $0x8c] sm:$0xf] %vm1663, %v1570
    %1700 = vst.msk [vmem:[%s5 + $0x90] sm:$0xf] %vm1663, %v1571
    %1701 = vst.msk [vmem:[%s5 + $0x94] sm:$0xf] %vm1663, %v1572
    %1702 = vst.msk [vmem:[%s5 + $0x98] sm:$0xf] %vm1663, %v1573
    %1703 = vst.msk [vmem:[%s5 + $0x9c] sm:$0xf] %vm1663, %v1574
    %1704 = vst.msk [vmem:[%s5 + $0xa0] sm:$0xf] %vm1663, %v1575
    %1705 = vst.msk [vmem:[%s5 + $0xa4] sm:$0xf] %vm1663, %v1576
    %1706 = vst.msk [vmem:[%s5 + $0xa8] sm:$0xf] %vm1663, %v1577
    %1707 = vst.msk [vmem:[%s5 + $0xac] sm:$0xf] %vm1663, %v1578
    %1708 = vst.msk [vmem:[%s5 + $0xb0] sm:$0xf] %vm1663, %v1579
    %1709 = vst.msk [vmem:[%s5 + $0xb4] sm:$0xf] %vm1663, %v1580
    %1710 = vst.msk [vmem:[%s5 + $0xb8] sm:$0xf] %vm1663, %v1581
    %1711 = vst.msk [vmem:[%s5 + $0xbc] sm:$0xf] %vm1663, %v1582
    %1712 = vst.msk [vmem:[%s5 + $0xc0] sm:$0xf] %vm1663, %v1583
    %1713 = vst.msk [vmem:[%s5 + $0xc4] sm:$0xf] %vm1663, %v1584
    %1714 = vst.msk [vmem:[%s5 + $0xc8] sm:$0xf] %vm1663, %v1585
    %1715 = vst.msk [vmem:[%s5 + $0xcc] sm:$0xf] %vm1663, %v1586
    %1716 = vst.msk [vmem:[%s5 + $0xd0] sm:$0xf] %vm1663, %v1587
    %1717 = vst.msk [vmem:[%s5 + $0xd4] sm:$0xf] %vm1663, %v1588
    %1718 = vst.msk [vmem:[%s5 + $0xd8] sm:$0xf] %vm1663, %v1589
    %1719 = vst.msk [vmem:[%s5 + $0xdc] sm:$0xf] %vm1663, %v1590
    %1720 = vst.msk [vmem:[%s5 + $0xe0] sm:$0xf] %vm1663, %v1591
    %1721 = vst.msk [vmem:[%s5 + $0xe4] sm:$0xf] %vm1663, %v1592
    %1722 = vst.msk [vmem:[%s5 + $0xe8] sm:$0xf] %vm1663, %v1593
    %1723 = vst.msk [vmem:[%s5 + $0xec] sm:$0xf] %vm1663, %v1594
    %1724 = vst.msk [vmem:[%s5 + $0xf0] sm:$0xf] %vm1663, %v1595
    %1725 = vst.msk [vmem:[%s5 + $0xf4] sm:$0xf] %vm1663, %v1596
    %1726 = vst.msk [vmem:[%s5 + $0xf8] sm:$0xf] %vm1663, %v1597
    %1727 = vst.msk [vmem:[%s5 + $0xfc] sm:$0xf] %vm1663, %v1598
    %v1728 = vpack.c.bf16 %v1344, %v1343
    %v1729 = vpack.c.bf16 %v1346, %v1345
    %v1730 = vpack.c.bf16 %v1348, %v1347
    %v1731 = vpack.c.bf16 %v1350, %v1349
    %v1732 = vpack.c.bf16 %v1352, %v1351
    %v1733 = vpack.c.bf16 %v1354, %v1353
    %v1734 = vpack.c.bf16 %v1356, %v1355
    %v1735 = vpack.c.bf16 %v1358, %v1357
    %v1736 = vpack.c.bf16 %v1360, %v1359
    %v1737 = vpack.c.bf16 %v1362, %v1361
    %v1738 = vpack.c.bf16 %v1364, %v1363
    %v1739 = vpack.c.bf16 %v1366, %v1365
    %v1740 = vpack.c.bf16 %v1368, %v1367
    %v1741 = vpack.c.bf16 %v1370, %v1369
    %v1742 = vpack.c.bf16 %v1372, %v1371
    %v1743 = vpack.c.bf16 %v1374, %v1373
    %v1744 = vpack.c.bf16 %v1376, %v1375
    %v1745 = vpack.c.bf16 %v1378, %v1377
    %v1746 = vpack.c.bf16 %v1380, %v1379
    %v1747 = vpack.c.bf16 %v1382, %v1381
    %v1748 = vpack.c.bf16 %v1384, %v1383
    %v1749 = vpack.c.bf16 %v1386, %v1385
    %v1750 = vpack.c.bf16 %v1388, %v1387
    %v1751 = vpack.c.bf16 %v1390, %v1389
    %v1752 = vpack.c.bf16 %v1392, %v1391
    %v1753 = vpack.c.bf16 %v1394, %v1393
    %v1754 = vpack.c.bf16 %v1396, %v1395
    %v1755 = vpack.c.bf16 %v1398, %v1397
    %v1756 = vpack.c.bf16 %v1400, %v1399
    %v1757 = vpack.c.bf16 %v1402, %v1401
    %v1758 = vpack.c.bf16 %v1404, %v1403
    %v1759 = vpack.c.bf16 %v1406, %v1405
    %v1792 = vunpack.c.l.b16 %v1728
    %v1793 = vunpack.c.h.b16 %v1728
    %v1794 = vunpack.c.l.b16 %v1729
    %v1795 = vunpack.c.h.b16 %v1729
    %v1796 = vunpack.c.l.b16 %v1730
    %v1797 = vunpack.c.h.b16 %v1730
    %v1798 = vunpack.c.l.b16 %v1731
    %v1799 = vunpack.c.h.b16 %v1731
    %v1800 = vunpack.c.l.b16 %v1732
    %v1801 = vunpack.c.h.b16 %v1732
    %v1802 = vunpack.c.l.b16 %v1733
    %v1803 = vunpack.c.h.b16 %v1733
    %v1804 = vunpack.c.l.b16 %v1734
    %v1805 = vunpack.c.h.b16 %v1734
    %v1806 = vunpack.c.l.b16 %v1735
    %v1807 = vunpack.c.h.b16 %v1735
    %v1808 = vunpack.c.l.b16 %v1736
    %v1809 = vunpack.c.h.b16 %v1736
    %v1810 = vunpack.c.l.b16 %v1737
    %v1811 = vunpack.c.h.b16 %v1737
    %v1812 = vunpack.c.l.b16 %v1738
    %v1813 = vunpack.c.h.b16 %v1738
    %v1814 = vunpack.c.l.b16 %v1739
    %v1815 = vunpack.c.h.b16 %v1739
    %v1816 = vunpack.c.l.b16 %v1740
    %v1817 = vunpack.c.h.b16 %v1740
    %v1818 = vunpack.c.l.b16 %v1741
    %v1819 = vunpack.c.h.b16 %v1741
    %v1820 = vunpack.c.l.b16 %v1742
    %v1821 = vunpack.c.h.b16 %v1742
    %v1822 = vunpack.c.l.b16 %v1743
    %v1823 = vunpack.c.h.b16 %v1743
    %v1824 = vunpack.c.l.b16 %v1744
    %v1825 = vunpack.c.h.b16 %v1744
    %v1826 = vunpack.c.l.b16 %v1745
    %v1827 = vunpack.c.h.b16 %v1745
    %v1828 = vunpack.c.l.b16 %v1746
    %v1829 = vunpack.c.h.b16 %v1746
    %v1830 = vunpack.c.l.b16 %v1747
    %v1831 = vunpack.c.h.b16 %v1747
    %v1832 = vunpack.c.l.b16 %v1748
    %v1833 = vunpack.c.h.b16 %v1748
    %v1834 = vunpack.c.l.b16 %v1749
    %v1835 = vunpack.c.h.b16 %v1749
    %v1836 = vunpack.c.l.b16 %v1750
    %v1837 = vunpack.c.h.b16 %v1750
    %v1838 = vunpack.c.l.b16 %v1751
    %v1839 = vunpack.c.h.b16 %v1751
    %v1840 = vunpack.c.l.b16 %v1752
    %v1841 = vunpack.c.h.b16 %v1752
    %v1842 = vunpack.c.l.b16 %v1753
    %v1843 = vunpack.c.h.b16 %v1753
    %v1844 = vunpack.c.l.b16 %v1754
    %v1845 = vunpack.c.h.b16 %v1754
    %v1846 = vunpack.c.l.b16 %v1755
    %v1847 = vunpack.c.h.b16 %v1755
    %v1848 = vunpack.c.l.b16 %v1756
    %v1849 = vunpack.c.h.b16 %v1756
    %v1850 = vunpack.c.l.b16 %v1757
    %v1851 = vunpack.c.h.b16 %v1757
    %v1852 = vunpack.c.l.b16 %v1758
    %v1853 = vunpack.c.h.b16 %v1758
    %v1854 = vunpack.c.l.b16 %v1759
    %v1855 = vunpack.c.h.b16 %v1759
    %v1856 = vpack.c.b16 %v1792, %v1792
    %v1857 = vpack.c.b16 %v1793, %v1793
    %v1858 = vpack.c.b16 %v1794, %v1794
    %v1859 = vpack.c.b16 %v1795, %v1795
    %v1860 = vpack.c.b16 %v1796, %v1796
    %v1861 = vpack.c.b16 %v1797, %v1797
    %v1862 = vpack.c.b16 %v1798, %v1798
    %v1863 = vpack.c.b16 %v1799, %v1799
    %v1864 = vpack.c.b16 %v1800, %v1800
    %v1865 = vpack.c.b16 %v1801, %v1801
    %v1866 = vpack.c.b16 %v1802, %v1802
    %v1867 = vpack.c.b16 %v1803, %v1803
    %v1868 = vpack.c.b16 %v1804, %v1804
    %v1869 = vpack.c.b16 %v1805, %v1805
    %v1870 = vpack.c.b16 %v1806, %v1806
    %v1871 = vpack.c.b16 %v1807, %v1807
    %v1872 = vpack.c.b16 %v1808, %v1808
    %v1873 = vpack.c.b16 %v1809, %v1809
    %v1874 = vpack.c.b16 %v1810, %v1810
    %v1875 = vpack.c.b16 %v1811, %v1811
    %v1876 = vpack.c.b16 %v1812, %v1812
    %v1877 = vpack.c.b16 %v1813, %v1813
    %v1878 = vpack.c.b16 %v1814, %v1814
    %v1879 = vpack.c.b16 %v1815, %v1815
    %v1880 = vpack.c.b16 %v1816, %v1816
    %v1881 = vpack.c.b16 %v1817, %v1817
    %v1882 = vpack.c.b16 %v1818, %v1818
    %v1883 = vpack.c.b16 %v1819, %v1819
    %v1884 = vpack.c.b16 %v1820, %v1820
    %v1885 = vpack.c.b16 %v1821, %v1821
    %v1886 = vpack.c.b16 %v1822, %v1822
    %v1887 = vpack.c.b16 %v1823, %v1823
    %v1888 = vpack.c.b16 %v1824, %v1824
    %v1889 = vpack.c.b16 %v1825, %v1825
    %v1890 = vpack.c.b16 %v1826, %v1826
    %v1891 = vpack.c.b16 %v1827, %v1827
    %v1892 = vpack.c.b16 %v1828, %v1828
    %v1893 = vpack.c.b16 %v1829, %v1829
    %v1894 = vpack.c.b16 %v1830, %v1830
    %v1895 = vpack.c.b16 %v1831, %v1831
    %v1896 = vpack.c.b16 %v1832, %v1832
    %v1897 = vpack.c.b16 %v1833, %v1833
    %v1898 = vpack.c.b16 %v1834, %v1834
    %v1899 = vpack.c.b16 %v1835, %v1835
    %v1900 = vpack.c.b16 %v1836, %v1836
    %v1901 = vpack.c.b16 %v1837, %v1837
    %v1902 = vpack.c.b16 %v1838, %v1838
    %v1903 = vpack.c.b16 %v1839, %v1839
    %v1904 = vpack.c.b16 %v1840, %v1840
    %v1905 = vpack.c.b16 %v1841, %v1841
    %v1906 = vpack.c.b16 %v1842, %v1842
    %v1907 = vpack.c.b16 %v1843, %v1843
    %v1908 = vpack.c.b16 %v1844, %v1844
    %v1909 = vpack.c.b16 %v1845, %v1845
    %v1910 = vpack.c.b16 %v1846, %v1846
    %v1911 = vpack.c.b16 %v1847, %v1847
    %v1912 = vpack.c.b16 %v1848, %v1848
    %v1913 = vpack.c.b16 %v1849, %v1849
    %v1914 = vpack.c.b16 %v1850, %v1850
    %v1915 = vpack.c.b16 %v1851, %v1851
    %v1916 = vpack.c.b16 %v1852, %v1852
    %v1917 = vpack.c.b16 %v1853, %v1853
    %v1918 = vpack.c.b16 %v1854, %v1854
    %v1919 = vpack.c.b16 %v1855, %v1855
    %1984 = vst.msk [vmem:[%s6] sm:$0xf] %vm1663, %v1856
    %1985 = vst.msk [vmem:[%s6 + $0x4] sm:$0xf] %vm1663, %v1857
    %1986 = vst.msk [vmem:[%s6 + $0x8] sm:$0xf] %vm1663, %v1858
    %1987 = vst.msk [vmem:[%s6 + $0xc] sm:$0xf] %vm1663, %v1859
    %1988 = vst.msk [vmem:[%s6 + $0x10] sm:$0xf] %vm1663, %v1860
    %1989 = vst.msk [vmem:[%s6 + $0x14] sm:$0xf] %vm1663, %v1861
    %1990 = vst.msk [vmem:[%s6 + $0x18] sm:$0xf] %vm1663, %v1862
    %1991 = vst.msk [vmem:[%s6 + $0x1c] sm:$0xf] %vm1663, %v1863
    %1992 = vst.msk [vmem:[%s6 + $0x20] sm:$0xf] %vm1663, %v1864
    %1993 = vst.msk [vmem:[%s6 + $0x24] sm:$0xf] %vm1663, %v1865
    %1994 = vst.msk [vmem:[%s6 + $0x28] sm:$0xf] %vm1663, %v1866
    %1995 = vst.msk [vmem:[%s6 + $0x2c] sm:$0xf] %vm1663, %v1867
    %1996 = vst.msk [vmem:[%s6 + $0x30] sm:$0xf] %vm1663, %v1868
    %1997 = vst.msk [vmem:[%s6 + $0x34] sm:$0xf] %vm1663, %v1869
    %1998 = vst.msk [vmem:[%s6 + $0x38] sm:$0xf] %vm1663, %v1870
    %1999 = vst.msk [vmem:[%s6 + $0x3c] sm:$0xf] %vm1663, %v1871
    %2000 = vst.msk [vmem:[%s6 + $0x40] sm:$0xf] %vm1663, %v1872
    %2001 = vst.msk [vmem:[%s6 + $0x44] sm:$0xf] %vm1663, %v1873
    %2002 = vst.msk [vmem:[%s6 + $0x48] sm:$0xf] %vm1663, %v1874
    %2003 = vst.msk [vmem:[%s6 + $0x4c] sm:$0xf] %vm1663, %v1875
    %2004 = vst.msk [vmem:[%s6 + $0x50] sm:$0xf] %vm1663, %v1876
    %2005 = vst.msk [vmem:[%s6 + $0x54] sm:$0xf] %vm1663, %v1877
    %2006 = vst.msk [vmem:[%s6 + $0x58] sm:$0xf] %vm1663, %v1878
    %2007 = vst.msk [vmem:[%s6 + $0x5c] sm:$0xf] %vm1663, %v1879
    %2008 = vst.msk [vmem:[%s6 + $0x60] sm:$0xf] %vm1663, %v1880
    %2009 = vst.msk [vmem:[%s6 + $0x64] sm:$0xf] %vm1663, %v1881
    %2010 = vst.msk [vmem:[%s6 + $0x68] sm:$0xf] %vm1663, %v1882
    %2011 = vst.msk [vmem:[%s6 + $0x6c] sm:$0xf] %vm1663, %v1883
    %2012 = vst.msk [vmem:[%s6 + $0x70] sm:$0xf] %vm1663, %v1884
    %2013 = vst.msk [vmem:[%s6 + $0x74] sm:$0xf] %vm1663, %v1885
    %2014 = vst.msk [vmem:[%s6 + $0x78] sm:$0xf] %vm1663, %v1886
    %2015 = vst.msk [vmem:[%s6 + $0x7c] sm:$0xf] %vm1663, %v1887
    %2016 = vst.msk [vmem:[%s6 + $0x80] sm:$0xf] %vm1663, %v1888
    %2017 = vst.msk [vmem:[%s6 + $0x84] sm:$0xf] %vm1663, %v1889
    %2018 = vst.msk [vmem:[%s6 + $0x88] sm:$0xf] %vm1663, %v1890
    %2019 = vst.msk [vmem:[%s6 + $0x8c] sm:$0xf] %vm1663, %v1891
    %2020 = vst.msk [vmem:[%s6 + $0x90] sm:$0xf] %vm1663, %v1892
    %2021 = vst.msk [vmem:[%s6 + $0x94] sm:$0xf] %vm1663, %v1893
    %2022 = vst.msk [vmem:[%s6 + $0x98] sm:$0xf] %vm1663, %v1894
    %2023 = vst.msk [vmem:[%s6 + $0x9c] sm:$0xf] %vm1663, %v1895
    %2024 = vst.msk [vmem:[%s6 + $0xa0] sm:$0xf] %vm1663, %v1896
    %2025 = vst.msk [vmem:[%s6 + $0xa4] sm:$0xf] %vm1663, %v1897
    %2026 = vst.msk [vmem:[%s6 + $0xa8] sm:$0xf] %vm1663, %v1898
    %2027 = vst.msk [vmem:[%s6 + $0xac] sm:$0xf] %vm1663, %v1899
    %2028 = vst.msk [vmem:[%s6 + $0xb0] sm:$0xf] %vm1663, %v1900
    %2029 = vst.msk [vmem:[%s6 + $0xb4] sm:$0xf] %vm1663, %v1901
    %2030 = vst.msk [vmem:[%s6 + $0xb8] sm:$0xf] %vm1663, %v1902
    %2031 = vst.msk [vmem:[%s6 + $0xbc] sm:$0xf] %vm1663, %v1903
    %2032 = vst.msk [vmem:[%s6 + $0xc0] sm:$0xf] %vm1663, %v1904
    %2033 = vst.msk [vmem:[%s6 + $0xc4] sm:$0xf] %vm1663, %v1905
    %2034 = vst.msk [vmem:[%s6 + $0xc8] sm:$0xf] %vm1663, %v1906
    %2035 = vst.msk [vmem:[%s6 + $0xcc] sm:$0xf] %vm1663, %v1907
    %2036 = vst.msk [vmem:[%s6 + $0xd0] sm:$0xf] %vm1663, %v1908
    %2037 = vst.msk [vmem:[%s6 + $0xd4] sm:$0xf] %vm1663, %v1909
    %2038 = vst.msk [vmem:[%s6 + $0xd8] sm:$0xf] %vm1663, %v1910
    %2039 = vst.msk [vmem:[%s6 + $0xdc] sm:$0xf] %vm1663, %v1911
    %2040 = vst.msk [vmem:[%s6 + $0xe0] sm:$0xf] %vm1663, %v1912
    %2041 = vst.msk [vmem:[%s6 + $0xe4] sm:$0xf] %vm1663, %v1913
    %2042 = vst.msk [vmem:[%s6 + $0xe8] sm:$0xf] %vm1663, %v1914
    %2043 = vst.msk [vmem:[%s6 + $0xec] sm:$0xf] %vm1663, %v1915
    %2044 = vst.msk [vmem:[%s6 + $0xf0] sm:$0xf] %vm1663, %v1916
    %2045 = vst.msk [vmem:[%s6 + $0xf4] sm:$0xf] %vm1663, %v1917
    %2046 = vst.msk [vmem:[%s6 + $0xf8] sm:$0xf] %vm1663, %v1918
    %2047 = vst.msk [vmem:[%s6 + $0xfc] sm:$0xf] %vm1663, %v1919
    %v2048 = vmul.f32 %v670, %v670
    %v2049 = vmul.f32 %v671, %v671
    %v2050 = vmul.f32 %v672, %v672
    %v2051 = vmul.f32 %v673, %v673
    %v2052 = vmul.f32 %v674, %v674
    %v2053 = vmul.f32 %v675, %v675
    %v2054 = vmul.f32 %v676, %v676
    %v2055 = vmul.f32 %v677, %v677
    %v2056 = vmul.f32 %v678, %v678
    %v2057 = vmul.f32 %v679, %v679
    %v2058 = vmul.f32 %v680, %v680
    %v2059 = vmul.f32 %v681, %v681
    %v2060 = vmul.f32 %v682, %v682
    %v2061 = vmul.f32 %v683, %v683
    %v2062 = vmul.f32 %v684, %v684
    %v2063 = vmul.f32 %v685, %v685
    %v2064 = vmul.f32 %v686, %v686
    %v2065 = vmul.f32 %v687, %v687
    %v2066 = vmul.f32 %v688, %v688
    %v2067 = vmul.f32 %v689, %v689
    %v2068 = vmul.f32 %v690, %v690
    %v2069 = vmul.f32 %v691, %v691
    %v2070 = vmul.f32 %v692, %v692
    %v2071 = vmul.f32 %v693, %v693
    %v2072 = vmul.f32 %v694, %v694
    %v2073 = vmul.f32 %v695, %v695
    %v2074 = vmul.f32 %v696, %v696
    %v2075 = vmul.f32 %v697, %v697
    %v2076 = vmul.f32 %v698, %v698
    %v2077 = vmul.f32 %v699, %v699
    %v2078 = vmul.f32 %v700, %v700
    %v2079 = vmul.f32 %v701, %v701
    %v2080 = vmul.f32 %v702, %v702
    %v2081 = vmul.f32 %v703, %v703
    %v2082 = vmul.f32 %v704, %v704
    %v2083 = vmul.f32 %v705, %v705
    %v2084 = vmul.f32 %v706, %v706
    %v2085 = vmul.f32 %v707, %v707
    %v2086 = vmul.f32 %v708, %v708
    %v2087 = vmul.f32 %v709, %v709
    %v2088 = vmul.f32 %v710, %v710
    %v2089 = vmul.f32 %v711, %v711
    %v2090 = vmul.f32 %v712, %v712
    %v2091 = vmul.f32 %v713, %v713
    %v2092 = vmul.f32 %v714, %v714
    %v2093 = vmul.f32 %v715, %v715
    %v2094 = vmul.f32 %v716, %v716
    %v2095 = vmul.f32 %v717, %v717
    %v2096 = vmul.f32 %v718, %v718
    %v2097 = vmul.f32 %v719, %v719
    %v2098 = vmul.f32 %v720, %v720
    %v2099 = vmul.f32 %v721, %v721
    %v2100 = vmul.f32 %v722, %v722
    %v2101 = vmul.f32 %v723, %v723
    %v2102 = vmul.f32 %v724, %v724
    %v2103 = vmul.f32 %v725, %v725
    %v2104 = vmul.f32 %v726, %v726
    %v2105 = vmul.f32 %v727, %v727
    %v2106 = vmul.f32 %v728, %v728
    %v2107 = vmul.f32 %v729, %v729
    %v2108 = vmul.f32 %v730, %v730
    %v2109 = vmul.f32 %v731, %v731
    %v2110 = vmul.f32 %v732, %v732
    %v2111 = vmul.f32 %v733, %v733
    %vm2112 = vcmask 64512
    %v2113 = vsel %vm2112, %v2048, 0.0
    %2114 = vadd.xlane.f32.xlu0 %v2113
    %v2115 = vpop.xlane.xlu0 %2114
    %v2116 = vsel %vm2112, %v2049, 0.0
    %2117 = vadd.xlane.f32.xlu0 %v2116
    %v2118 = vpop.xlane.xlu0 %2117
    %v2119 = vsel %vm2112, %v2050, 0.0
    %2120 = vadd.xlane.f32.xlu0 %v2119
    %v2121 = vpop.xlane.xlu0 %2120
    %v2122 = vsel %vm2112, %v2051, 0.0
    %2123 = vadd.xlane.f32.xlu0 %v2122
    %v2124 = vpop.xlane.xlu0 %2123
    %v2125 = vsel %vm2112, %v2052, 0.0
    %2126 = vadd.xlane.f32.xlu0 %v2125
    %v2127 = vpop.xlane.xlu0 %2126
    %v2128 = vsel %vm2112, %v2053, 0.0
    %2129 = vadd.xlane.f32.xlu0 %v2128
    %v2130 = vpop.xlane.xlu0 %2129
    %v2131 = vsel %vm2112, %v2054, 0.0
    %2132 = vadd.xlane.f32.xlu0 %v2131
    %v2133 = vpop.xlane.xlu0 %2132
    %v2134 = vsel %vm2112, %v2055, 0.0
    %2135 = vadd.xlane.f32.xlu0 %v2134
    %v2136 = vpop.xlane.xlu0 %2135
    %v2137 = vsel %vm2112, %v2056, 0.0
    %2138 = vadd.xlane.f32.xlu0 %v2137
    %v2139 = vpop.xlane.xlu0 %2138
    %v2140 = vsel %vm2112, %v2057, 0.0
    %2141 = vadd.xlane.f32.xlu0 %v2140
    %v2142 = vpop.xlane.xlu0 %2141
    %v2143 = vsel %vm2112, %v2058, 0.0
    %2144 = vadd.xlane.f32.xlu0 %v2143
    %v2145 = vpop.xlane.xlu0 %2144
    %v2146 = vsel %vm2112, %v2059, 0.0
    %2147 = vadd.xlane.f32.xlu0 %v2146
    %v2148 = vpop.xlane.xlu0 %2147
    %v2149 = vsel %vm2112, %v2060, 0.0
    %2150 = vadd.xlane.f32.xlu0 %v2149
    %v2151 = vpop.xlane.xlu0 %2150
    %v2152 = vsel %vm2112, %v2061, 0.0
    %2153 = vadd.xlane.f32.xlu0 %v2152
    %v2154 = vpop.xlane.xlu0 %2153
    %v2155 = vsel %vm2112, %v2062, 0.0
    %2156 = vadd.xlane.f32.xlu0 %v2155
    %v2157 = vpop.xlane.xlu0 %2156
    %v2158 = vsel %vm2112, %v2063, 0.0
    %2159 = vadd.xlane.f32.xlu0 %v2158
    %v2160 = vpop.xlane.xlu0 %2159
    %v2161 = vsel %vm2112, %v2064, 0.0
    %2162 = vadd.xlane.f32.xlu0 %v2161
    %v2163 = vpop.xlane.xlu0 %2162
    %v2164 = vsel %vm2112, %v2065, 0.0
    %2165 = vadd.xlane.f32.xlu0 %v2164
    %v2166 = vpop.xlane.xlu0 %2165
    %v2167 = vsel %vm2112, %v2066, 0.0
    %2168 = vadd.xlane.f32.xlu0 %v2167
    %v2169 = vpop.xlane.xlu0 %2168
    %v2170 = vsel %vm2112, %v2067, 0.0
    %2171 = vadd.xlane.f32.xlu0 %v2170
    %v2172 = vpop.xlane.xlu0 %2171
    %v2173 = vsel %vm2112, %v2068, 0.0
    %2174 = vadd.xlane.f32.xlu0 %v2173
    %v2175 = vpop.xlane.xlu0 %2174
    %v2176 = vsel %vm2112, %v2069, 0.0
    %2177 = vadd.xlane.f32.xlu0 %v2176
    %v2178 = vpop.xlane.xlu0 %2177
    %v2179 = vsel %vm2112, %v2070, 0.0
    %2180 = vadd.xlane.f32.xlu0 %v2179
    %v2181 = vpop.xlane.xlu0 %2180
    %v2182 = vsel %vm2112, %v2071, 0.0
    %2183 = vadd.xlane.f32.xlu0 %v2182
    %v2184 = vpop.xlane.xlu0 %2183
    %v2185 = vsel %vm2112, %v2072, 0.0
    %2186 = vadd.xlane.f32.xlu0 %v2185
    %v2187 = vpop.xlane.xlu0 %2186
    %v2188 = vsel %vm2112, %v2073, 0.0
    %2189 = vadd.xlane.f32.xlu0 %v2188
    %v2190 = vpop.xlane.xlu0 %2189
    %v2191 = vsel %vm2112, %v2074, 0.0
    %2192 = vadd.xlane.f32.xlu0 %v2191
    %v2193 = vpop.xlane.xlu0 %2192
    %v2194 = vsel %vm2112, %v2075, 0.0
    %2195 = vadd.xlane.f32.xlu0 %v2194
    %v2196 = vpop.xlane.xlu0 %2195
    %v2197 = vsel %vm2112, %v2076, 0.0
    %2198 = vadd.xlane.f32.xlu0 %v2197
    %v2199 = vpop.xlane.xlu0 %2198
    %v2200 = vsel %vm2112, %v2077, 0.0
    %2201 = vadd.xlane.f32.xlu0 %v2200
    %v2202 = vpop.xlane.xlu0 %2201
    %v2203 = vsel %vm2112, %v2078, 0.0
    %2204 = vadd.xlane.f32.xlu0 %v2203
    %v2205 = vpop.xlane.xlu0 %2204
    %v2206 = vsel %vm2112, %v2079, 0.0
    %2207 = vadd.xlane.f32.xlu0 %v2206
    %v2208 = vpop.xlane.xlu0 %2207
    %v2209 = vsel %vm2112, %v2080, 0.0
    %2210 = vadd.xlane.f32.xlu0 %v2209
    %v2211 = vpop.xlane.xlu0 %2210
    %v2212 = vsel %vm2112, %v2081, 0.0
    %2213 = vadd.xlane.f32.xlu0 %v2212
    %v2214 = vpop.xlane.xlu0 %2213
    %v2215 = vsel %vm2112, %v2082, 0.0
    %2216 = vadd.xlane.f32.xlu0 %v2215
    %v2217 = vpop.xlane.xlu0 %2216
    %v2218 = vsel %vm2112, %v2083, 0.0
    %2219 = vadd.xlane.f32.xlu0 %v2218
    %v2220 = vpop.xlane.xlu0 %2219
    %v2221 = vsel %vm2112, %v2084, 0.0
    %2222 = vadd.xlane.f32.xlu0 %v2221
    %v2223 = vpop.xlane.xlu0 %2222
    %v2224 = vsel %vm2112, %v2085, 0.0
    %2225 = vadd.xlane.f32.xlu0 %v2224
    %v2226 = vpop.xlane.xlu0 %2225
    %v2227 = vsel %vm2112, %v2086, 0.0
    %2228 = vadd.xlane.f32.xlu0 %v2227
    %v2229 = vpop.xlane.xlu0 %2228
    %v2230 = vsel %vm2112, %v2087, 0.0
    %2231 = vadd.xlane.f32.xlu0 %v2230
    %v2232 = vpop.xlane.xlu0 %2231
    %v2233 = vsel %vm2112, %v2088, 0.0
    %2234 = vadd.xlane.f32.xlu0 %v2233
    %v2235 = vpop.xlane.xlu0 %2234
    %v2236 = vsel %vm2112, %v2089, 0.0
    %2237 = vadd.xlane.f32.xlu0 %v2236
    %v2238 = vpop.xlane.xlu0 %2237
    %v2239 = vsel %vm2112, %v2090, 0.0
    %2240 = vadd.xlane.f32.xlu0 %v2239
    %v2241 = vpop.xlane.xlu0 %2240
    %v2242 = vsel %vm2112, %v2091, 0.0
    %2243 = vadd.xlane.f32.xlu0 %v2242
    %v2244 = vpop.xlane.xlu0 %2243
    %v2245 = vsel %vm2112, %v2092, 0.0
    %2246 = vadd.xlane.f32.xlu0 %v2245
    %v2247 = vpop.xlane.xlu0 %2246
    %v2248 = vsel %vm2112, %v2093, 0.0
    %2249 = vadd.xlane.f32.xlu0 %v2248
    %v2250 = vpop.xlane.xlu0 %2249
    %v2251 = vsel %vm2112, %v2094, 0.0
    %2252 = vadd.xlane.f32.xlu0 %v2251
    %v2253 = vpop.xlane.xlu0 %2252
    %v2254 = vsel %vm2112, %v2095, 0.0
    %2255 = vadd.xlane.f32.xlu0 %v2254
    %v2256 = vpop.xlane.xlu0 %2255
    %v2257 = vsel %vm2112, %v2096, 0.0
    %2258 = vadd.xlane.f32.xlu0 %v2257
    %v2259 = vpop.xlane.xlu0 %2258
    %v2260 = vsel %vm2112, %v2097, 0.0
    %2261 = vadd.xlane.f32.xlu0 %v2260
    %v2262 = vpop.xlane.xlu0 %2261
    %v2263 = vsel %vm2112, %v2098, 0.0
    %2264 = vadd.xlane.f32.xlu0 %v2263
    %v2265 = vpop.xlane.xlu0 %2264
    %v2266 = vsel %vm2112, %v2099, 0.0
    %2267 = vadd.xlane.f32.xlu0 %v2266
    %v2268 = vpop.xlane.xlu0 %2267
    %v2269 = vsel %vm2112, %v2100, 0.0
    %2270 = vadd.xlane.f32.xlu0 %v2269
    %v2271 = vpop.xlane.xlu0 %2270
    %v2272 = vsel %vm2112, %v2101, 0.0
    %2273 = vadd.xlane.f32.xlu0 %v2272
    %v2274 = vpop.xlane.xlu0 %2273
    %v2275 = vsel %vm2112, %v2102, 0.0
    %2276 = vadd.xlane.f32.xlu0 %v2275
    %v2277 = vpop.xlane.xlu0 %2276
    %v2278 = vsel %vm2112, %v2103, 0.0
    %2279 = vadd.xlane.f32.xlu0 %v2278
    %v2280 = vpop.xlane.xlu0 %2279
    %v2281 = vsel %vm2112, %v2104, 0.0
    %2282 = vadd.xlane.f32.xlu0 %v2281
    %v2283 = vpop.xlane.xlu0 %2282
    %v2284 = vsel %vm2112, %v2105, 0.0
    %2285 = vadd.xlane.f32.xlu0 %v2284
    %v2286 = vpop.xlane.xlu0 %2285
    %v2287 = vsel %vm2112, %v2106, 0.0
    %2288 = vadd.xlane.f32.xlu0 %v2287
    %v2289 = vpop.xlane.xlu0 %2288
    %v2290 = vsel %vm2112, %v2107, 0.0
    %2291 = vadd.xlane.f32.xlu0 %v2290
    %v2292 = vpop.xlane.xlu0 %2291
    %v2293 = vsel %vm2112, %v2108, 0.0
    %2294 = vadd.xlane.f32.xlu0 %v2293
    %v2295 = vpop.xlane.xlu0 %2294
    %v2296 = vsel %vm2112, %v2109, 0.0
    %2297 = vadd.xlane.f32.xlu0 %v2296
    %v2298 = vpop.xlane.xlu0 %2297
    %v2299 = vsel %vm2112, %v2110, 0.0
    %2300 = vadd.xlane.f32.xlu0 %v2299
    %v2301 = vpop.xlane.xlu0 %2300
    %v2302 = vsel %vm2112, %v2111, 0.0
    %2303 = vadd.xlane.f32.xlu0 %v2302
    %v2304 = vpop.xlane.xlu0 %2303
    %v2305 = vadd.f32 %v2115, 1e-12
    %v2306 = vadd.f32 %v2118, 1e-12
    %v2307 = vadd.f32 %v2121, 1e-12
    %v2308 = vadd.f32 %v2124, 1e-12
    %v2309 = vadd.f32 %v2127, 1e-12
    %v2310 = vadd.f32 %v2130, 1e-12
    %v2311 = vadd.f32 %v2133, 1e-12
    %v2312 = vadd.f32 %v2136, 1e-12
    %v2313 = vadd.f32 %v2139, 1e-12
    %v2314 = vadd.f32 %v2142, 1e-12
    %v2315 = vadd.f32 %v2145, 1e-12
    %v2316 = vadd.f32 %v2148, 1e-12
    %v2317 = vadd.f32 %v2151, 1e-12
    %v2318 = vadd.f32 %v2154, 1e-12
    %v2319 = vadd.f32 %v2157, 1e-12
    %v2320 = vadd.f32 %v2160, 1e-12
    %v2321 = vadd.f32 %v2163, 1e-12
    %v2322 = vadd.f32 %v2166, 1e-12
    %v2323 = vadd.f32 %v2169, 1e-12
    %v2324 = vadd.f32 %v2172, 1e-12
    %v2325 = vadd.f32 %v2175, 1e-12
    %v2326 = vadd.f32 %v2178, 1e-12
    %v2327 = vadd.f32 %v2181, 1e-12
    %v2328 = vadd.f32 %v2184, 1e-12
    %v2329 = vadd.f32 %v2187, 1e-12
    %v2330 = vadd.f32 %v2190, 1e-12
    %v2331 = vadd.f32 %v2193, 1e-12
    %v2332 = vadd.f32 %v2196, 1e-12
    %v2333 = vadd.f32 %v2199, 1e-12
    %v2334 = vadd.f32 %v2202, 1e-12
    %v2335 = vadd.f32 %v2205, 1e-12
    %v2336 = vadd.f32 %v2208, 1e-12
    %v2337 = vadd.f32 %v2211, 1e-12
    %v2338 = vadd.f32 %v2214, 1e-12
    %v2339 = vadd.f32 %v2217, 1e-12
    %v2340 = vadd.f32 %v2220, 1e-12
    %v2341 = vadd.f32 %v2223, 1e-12
    %v2342 = vadd.f32 %v2226, 1e-12
    %v2343 = vadd.f32 %v2229, 1e-12
    %v2344 = vadd.f32 %v2232, 1e-12
    %v2345 = vadd.f32 %v2235, 1e-12
    %v2346 = vadd.f32 %v2238, 1e-12
    %v2347 = vadd.f32 %v2241, 1e-12
    %v2348 = vadd.f32 %v2244, 1e-12
    %v2349 = vadd.f32 %v2247, 1e-12
    %v2350 = vadd.f32 %v2250, 1e-12
    %v2351 = vadd.f32 %v2253, 1e-12
    %v2352 = vadd.f32 %v2256, 1e-12
    %v2353 = vadd.f32 %v2259, 1e-12
    %v2354 = vadd.f32 %v2262, 1e-12
    %v2355 = vadd.f32 %v2265, 1e-12
    %v2356 = vadd.f32 %v2268, 1e-12
    %v2357 = vadd.f32 %v2271, 1e-12
    %v2358 = vadd.f32 %v2274, 1e-12
    %v2359 = vadd.f32 %v2277, 1e-12
    %v2360 = vadd.f32 %v2280, 1e-12
    %v2361 = vadd.f32 %v2283, 1e-12
    %v2362 = vadd.f32 %v2286, 1e-12
    %v2363 = vadd.f32 %v2289, 1e-12
    %v2364 = vadd.f32 %v2292, 1e-12
    %v2365 = vadd.f32 %v2295, 1e-12
    %v2366 = vadd.f32 %v2298, 1e-12
    %v2367 = vadd.f32 %v2301, 1e-12
    %v2368 = vadd.f32 %v2304, 1e-12
    %v2369 = vrsqrt.pop %v2305
    %v2370 = vrsqrt.pop %v2306
    %v2371 = vrsqrt.pop %v2307
    %v2372 = vrsqrt.pop %v2308
    %v2373 = vrsqrt.pop %v2309
    %v2374 = vrsqrt.pop %v2310
    %v2375 = vrsqrt.pop %v2311
    %v2376 = vrsqrt.pop %v2312
    %v2377 = vrsqrt.pop %v2313
    %v2378 = vrsqrt.pop %v2314
    %v2379 = vrsqrt.pop %v2315
    %v2380 = vrsqrt.pop %v2316
    %v2381 = vrsqrt.pop %v2317
    %v2382 = vrsqrt.pop %v2318
    %v2383 = vrsqrt.pop %v2319
    %v2384 = vrsqrt.pop %v2320
    %v2385 = vrsqrt.pop %v2321
    %v2386 = vrsqrt.pop %v2322
    %v2387 = vrsqrt.pop %v2323
    %v2388 = vrsqrt.pop %v2324
    %v2389 = vrsqrt.pop %v2325
    %v2390 = vrsqrt.pop %v2326
    %v2391 = vrsqrt.pop %v2327
    %v2392 = vrsqrt.pop %v2328
    %v2393 = vrsqrt.pop %v2329
    %v2394 = vrsqrt.pop %v2330
    %v2395 = vrsqrt.pop %v2331
    %v2396 = vrsqrt.pop %v2332
    %v2397 = vrsqrt.pop %v2333
    %v2398 = vrsqrt.pop %v2334
    %v2399 = vrsqrt.pop %v2335
    %v2400 = vrsqrt.pop %v2336
    %v2401 = vrsqrt.pop %v2337
    %v2402 = vrsqrt.pop %v2338
    %v2403 = vrsqrt.pop %v2339
    %v2404 = vrsqrt.pop %v2340
    %v2405 = vrsqrt.pop %v2341
    %v2406 = vrsqrt.pop %v2342
    %v2407 = vrsqrt.pop %v2343
    %v2408 = vrsqrt.pop %v2344
    %v2409 = vrsqrt.pop %v2345
    %v2410 = vrsqrt.pop %v2346
    %v2411 = vrsqrt.pop %v2347
    %v2412 = vrsqrt.pop %v2348
    %v2413 = vrsqrt.pop %v2349
    %v2414 = vrsqrt.pop %v2350
    %v2415 = vrsqrt.pop %v2351
    %v2416 = vrsqrt.pop %v2352
    %v2417 = vrsqrt.pop %v2353
    %v2418 = vrsqrt.pop %v2354
    %v2419 = vrsqrt.pop %v2355
    %v2420 = vrsqrt.pop %v2356
    %v2421 = vrsqrt.pop %v2357
    %v2422 = vrsqrt.pop %v2358
    %v2423 = vrsqrt.pop %v2359
    %v2424 = vrsqrt.pop %v2360
    %v2425 = vrsqrt.pop %v2361
    %v2426 = vrsqrt.pop %v2362
    %v2427 = vrsqrt.pop %v2363
    %v2428 = vrsqrt.pop %v2364
    %v2429 = vrsqrt.pop %v2365
    %v2430 = vrsqrt.pop %v2366
    %v2431 = vrsqrt.pop %v2367
    %v2432 = vrsqrt.pop %v2368
    %v2433 = vmul.f32 %v670, %v2369
    %v2434 = vmul.f32 %v671, %v2370
    %v2435 = vmul.f32 %v672, %v2371
    %v2436 = vmul.f32 %v673, %v2372
    %v2437 = vmul.f32 %v674, %v2373
    %v2438 = vmul.f32 %v675, %v2374
    %v2439 = vmul.f32 %v676, %v2375
    %v2440 = vmul.f32 %v677, %v2376
    %v2441 = vmul.f32 %v678, %v2377
    %v2442 = vmul.f32 %v679, %v2378
    %v2443 = vmul.f32 %v680, %v2379
    %v2444 = vmul.f32 %v681, %v2380
    %v2445 = vmul.f32 %v682, %v2381
    %v2446 = vmul.f32 %v683, %v2382
    %v2447 = vmul.f32 %v684, %v2383
    %v2448 = vmul.f32 %v685, %v2384
    %v2449 = vmul.f32 %v686, %v2385
    %v2450 = vmul.f32 %v687, %v2386
    %v2451 = vmul.f32 %v688, %v2387
    %v2452 = vmul.f32 %v689, %v2388
    %v2453 = vmul.f32 %v690, %v2389
    %v2454 = vmul.f32 %v691, %v2390
    %v2455 = vmul.f32 %v692, %v2391
    %v2456 = vmul.f32 %v693, %v2392
    %v2457 = vmul.f32 %v694, %v2393
    %v2458 = vmul.f32 %v695, %v2394
    %v2459 = vmul.f32 %v696, %v2395
    %v2460 = vmul.f32 %v697, %v2396
    %v2461 = vmul.f32 %v698, %v2397
    %v2462 = vmul.f32 %v699, %v2398
    %v2463 = vmul.f32 %v700, %v2399
    %v2464 = vmul.f32 %v701, %v2400
    %v2465 = vmul.f32 %v702, %v2401
    %v2466 = vmul.f32 %v703, %v2402
    %v2467 = vmul.f32 %v704, %v2403
    %v2468 = vmul.f32 %v705, %v2404
    %v2469 = vmul.f32 %v706, %v2405
    %v2470 = vmul.f32 %v707, %v2406
    %v2471 = vmul.f32 %v708, %v2407
    %v2472 = vmul.f32 %v709, %v2408
    %v2473 = vmul.f32 %v710, %v2409
    %v2474 = vmul.f32 %v711, %v2410
    %v2475 = vmul.f32 %v712, %v2411
    %v2476 = vmul.f32 %v713, %v2412
    %v2477 = vmul.f32 %v714, %v2413
    %v2478 = vmul.f32 %v715, %v2414
    %v2479 = vmul.f32 %v716, %v2415
    %v2480 = vmul.f32 %v717, %v2416
    %v2481 = vmul.f32 %v718, %v2417
    %v2482 = vmul.f32 %v719, %v2418
    %v2483 = vmul.f32 %v720, %v2419
    %v2484 = vmul.f32 %v721, %v2420
    %v2485 = vmul.f32 %v722, %v2421
    %v2486 = vmul.f32 %v723, %v2422
    %v2487 = vmul.f32 %v724, %v2423
    %v2488 = vmul.f32 %v725, %v2424
    %v2489 = vmul.f32 %v726, %v2425
    %v2490 = vmul.f32 %v727, %v2426
    %v2491 = vmul.f32 %v728, %v2427
    %v2492 = vmul.f32 %v729, %v2428
    %v2493 = vmul.f32 %v730, %v2429
    %v2494 = vmul.f32 %v731, %v2430
    %v2495 = vmul.f32 %v732, %v2431
    %v2496 = vmul.f32 %v733, %v2432
    %v2497 = vmul.f32 %v1343, %v1343
    %v2498 = vmul.f32 %v1344, %v1344
    %v2499 = vmul.f32 %v1345, %v1345
    %v2500 = vmul.f32 %v1346, %v1346
    %v2501 = vmul.f32 %v1347, %v1347
    %v2502 = vmul.f32 %v1348, %v1348
    %v2503 = vmul.f32 %v1349, %v1349
    %v2504 = vmul.f32 %v1350, %v1350
    %v2505 = vmul.f32 %v1351, %v1351
    %v2506 = vmul.f32 %v1352, %v1352
    %v2507 = vmul.f32 %v1353, %v1353
    %v2508 = vmul.f32 %v1354, %v1354
    %v2509 = vmul.f32 %v1355, %v1355
    %v2510 = vmul.f32 %v1356, %v1356
    %v2511 = vmul.f32 %v1357, %v1357
    %v2512 = vmul.f32 %v1358, %v1358
    %v2513 = vmul.f32 %v1359, %v1359
    %v2514 = vmul.f32 %v1360, %v1360
    %v2515 = vmul.f32 %v1361, %v1361
    %v2516 = vmul.f32 %v1362, %v1362
    %v2517 = vmul.f32 %v1363, %v1363
    %v2518 = vmul.f32 %v1364, %v1364
    %v2519 = vmul.f32 %v1365, %v1365
    %v2520 = vmul.f32 %v1366, %v1366
    %v2521 = vmul.f32 %v1367, %v1367
    %v2522 = vmul.f32 %v1368, %v1368
    %v2523 = vmul.f32 %v1369, %v1369
    %v2524 = vmul.f32 %v1370, %v1370
    %v2525 = vmul.f32 %v1371, %v1371
    %v2526 = vmul.f32 %v1372, %v1372
    %v2527 = vmul.f32 %v1373, %v1373
    %v2528 = vmul.f32 %v1374, %v1374
    %v2529 = vmul.f32 %v1375, %v1375
    %v2530 = vmul.f32 %v1376, %v1376
    %v2531 = vmul.f32 %v1377, %v1377
    %v2532 = vmul.f32 %v1378, %v1378
    %v2533 = vmul.f32 %v1379, %v1379
    %v2534 = vmul.f32 %v1380, %v1380
    %v2535 = vmul.f32 %v1381, %v1381
    %v2536 = vmul.f32 %v1382, %v1382
    %v2537 = vmul.f32 %v1383, %v1383
    %v2538 = vmul.f32 %v1384, %v1384
    %v2539 = vmul.f32 %v1385, %v1385
    %v2540 = vmul.f32 %v1386, %v1386
    %v2541 = vmul.f32 %v1387, %v1387
    %v2542 = vmul.f32 %v1388, %v1388
    %v2543 = vmul.f32 %v1389, %v1389
    %v2544 = vmul.f32 %v1390, %v1390
    %v2545 = vmul.f32 %v1391, %v1391
    %v2546 = vmul.f32 %v1392, %v1392
    %v2547 = vmul.f32 %v1393, %v1393
    %v2548 = vmul.f32 %v1394, %v1394
    %v2549 = vmul.f32 %v1395, %v1395
    %v2550 = vmul.f32 %v1396, %v1396
    %v2551 = vmul.f32 %v1397, %v1397
    %v2552 = vmul.f32 %v1398, %v1398
    %v2553 = vmul.f32 %v1399, %v1399
    %v2554 = vmul.f32 %v1400, %v1400
    %v2555 = vmul.f32 %v1401, %v1401
    %v2556 = vmul.f32 %v1402, %v1402
    %v2557 = vmul.f32 %v1403, %v1403
    %v2558 = vmul.f32 %v1404, %v1404
    %v2559 = vmul.f32 %v1405, %v1405
    %v2560 = vmul.f32 %v1406, %v1406
    %v2561 = vsel %vm2112, %v2497, 0.0
    %2562 = vadd.xlane.f32.xlu0 %v2561
    %v2563 = vpop.xlane.xlu0 %2562
    %v2564 = vsel %vm2112, %v2498, 0.0
    %2565 = vadd.xlane.f32.xlu0 %v2564
    %v2566 = vpop.xlane.xlu0 %2565
    %v2567 = vsel %vm2112, %v2499, 0.0
    %2568 = vadd.xlane.f32.xlu0 %v2567
    %v2569 = vpop.xlane.xlu0 %2568
    %v2570 = vsel %vm2112, %v2500, 0.0
    %2571 = vadd.xlane.f32.xlu0 %v2570
    %v2572 = vpop.xlane.xlu0 %2571
    %v2573 = vsel %vm2112, %v2501, 0.0
    %2574 = vadd.xlane.f32.xlu0 %v2573
    %v2575 = vpop.xlane.xlu0 %2574
    %v2576 = vsel %vm2112, %v2502, 0.0
    %2577 = vadd.xlane.f32.xlu0 %v2576
    %v2578 = vpop.xlane.xlu0 %2577
    %v2579 = vsel %vm2112, %v2503, 0.0
    %2580 = vadd.xlane.f32.xlu0 %v2579
    %v2581 = vpop.xlane.xlu0 %2580
    %v2582 = vsel %vm2112, %v2504, 0.0
    %2583 = vadd.xlane.f32.xlu0 %v2582
    %v2584 = vpop.xlane.xlu0 %2583
    %v2585 = vsel %vm2112, %v2505, 0.0
    %2586 = vadd.xlane.f32.xlu0 %v2585
    %v2587 = vpop.xlane.xlu0 %2586
    %v2588 = vsel %vm2112, %v2506, 0.0
    %2589 = vadd.xlane.f32.xlu0 %v2588
    %v2590 = vpop.xlane.xlu0 %2589
    %v2591 = vsel %vm2112, %v2507, 0.0
    %2592 = vadd.xlane.f32.xlu0 %v2591
    %v2593 = vpop.xlane.xlu0 %2592
    %v2594 = vsel %vm2112, %v2508, 0.0
    %2595 = vadd.xlane.f32.xlu0 %v2594
    %v2596 = vpop.xlane.xlu0 %2595
    %v2597 = vsel %vm2112, %v2509, 0.0
    %2598 = vadd.xlane.f32.xlu0 %v2597
    %v2599 = vpop.xlane.xlu0 %2598
    %v2600 = vsel %vm2112, %v2510, 0.0
    %2601 = vadd.xlane.f32.xlu0 %v2600
    %v2602 = vpop.xlane.xlu0 %2601
    %v2603 = vsel %vm2112, %v2511, 0.0
    %2604 = vadd.xlane.f32.xlu0 %v2603
    %v2605 = vpop.xlane.xlu0 %2604
    %v2606 = vsel %vm2112, %v2512, 0.0
    %2607 = vadd.xlane.f32.xlu0 %v2606
    %v2608 = vpop.xlane.xlu0 %2607
    %v2609 = vsel %vm2112, %v2513, 0.0
    %2610 = vadd.xlane.f32.xlu0 %v2609
    %v2611 = vpop.xlane.xlu0 %2610
    %v2612 = vsel %vm2112, %v2514, 0.0
    %2613 = vadd.xlane.f32.xlu0 %v2612
    %v2614 = vpop.xlane.xlu0 %2613
    %v2615 = vsel %vm2112, %v2515, 0.0
    %2616 = vadd.xlane.f32.xlu0 %v2615
    %v2617 = vpop.xlane.xlu0 %2616
    %v2618 = vsel %vm2112, %v2516, 0.0
    %2619 = vadd.xlane.f32.xlu0 %v2618
    %v2620 = vpop.xlane.xlu0 %2619
    %v2621 = vsel %vm2112, %v2517, 0.0
    %2622 = vadd.xlane.f32.xlu0 %v2621
    %v2623 = vpop.xlane.xlu0 %2622
    %v2624 = vsel %vm2112, %v2518, 0.0
    %2625 = vadd.xlane.f32.xlu0 %v2624
    %v2626 = vpop.xlane.xlu0 %2625
    %v2627 = vsel %vm2112, %v2519, 0.0
    %2628 = vadd.xlane.f32.xlu0 %v2627
    %v2629 = vpop.xlane.xlu0 %2628
    %v2630 = vsel %vm2112, %v2520, 0.0
    %2631 = vadd.xlane.f32.xlu0 %v2630
    %v2632 = vpop.xlane.xlu0 %2631
    %v2633 = vsel %vm2112, %v2521, 0.0
    %2634 = vadd.xlane.f32.xlu0 %v2633
    %v2635 = vpop.xlane.xlu0 %2634
    %v2636 = vsel %vm2112, %v2522, 0.0
    %2637 = vadd.xlane.f32.xlu0 %v2636
    %v2638 = vpop.xlane.xlu0 %2637
    %v2639 = vsel %vm2112, %v2523, 0.0
    %2640 = vadd.xlane.f32.xlu0 %v2639
    %v2641 = vpop.xlane.xlu0 %2640
    %v2642 = vsel %vm2112, %v2524, 0.0
    %2643 = vadd.xlane.f32.xlu0 %v2642
    %v2644 = vpop.xlane.xlu0 %2643
    %v2645 = vsel %vm2112, %v2525, 0.0
    %2646 = vadd.xlane.f32.xlu0 %v2645
    %v2647 = vpop.xlane.xlu0 %2646
    %v2648 = vsel %vm2112, %v2526, 0.0
    %2649 = vadd.xlane.f32.xlu0 %v2648
    %v2650 = vpop.xlane.xlu0 %2649
    %v2651 = vsel %vm2112, %v2527, 0.0
    %2652 = vadd.xlane.f32.xlu0 %v2651
    %v2653 = vpop.xlane.xlu0 %2652
    %v2654 = vsel %vm2112, %v2528, 0.0
    %2655 = vadd.xlane.f32.xlu0 %v2654
    %v2656 = vpop.xlane.xlu0 %2655
    %v2657 = vsel %vm2112, %v2529, 0.0
    %2658 = vadd.xlane.f32.xlu0 %v2657
    %v2659 = vpop.xlane.xlu0 %2658
    %v2660 = vsel %vm2112, %v2530, 0.0
    %2661 = vadd.xlane.f32.xlu0 %v2660
    %v2662 = vpop.xlane.xlu0 %2661
    %v2663 = vsel %vm2112, %v2531, 0.0
    %2664 = vadd.xlane.f32.xlu0 %v2663
    %v2665 = vpop.xlane.xlu0 %2664
    %v2666 = vsel %vm2112, %v2532, 0.0
    %2667 = vadd.xlane.f32.xlu0 %v2666
    %v2668 = vpop.xlane.xlu0 %2667
    %v2669 = vsel %vm2112, %v2533, 0.0
    %2670 = vadd.xlane.f32.xlu0 %v2669
    %v2671 = vpop.xlane.xlu0 %2670
    %v2672 = vsel %vm2112, %v2534, 0.0
    %2673 = vadd.xlane.f32.xlu0 %v2672
    %v2674 = vpop.xlane.xlu0 %2673
    %v2675 = vsel %vm2112, %v2535, 0.0
    %2676 = vadd.xlane.f32.xlu0 %v2675
    %v2677 = vpop.xlane.xlu0 %2676
    %v2678 = vsel %vm2112, %v2536, 0.0
    %2679 = vadd.xlane.f32.xlu0 %v2678
    %v2680 = vpop.xlane.xlu0 %2679
    %v2681 = vsel %vm2112, %v2537, 0.0
    %2682 = vadd.xlane.f32.xlu0 %v2681
    %v2683 = vpop.xlane.xlu0 %2682
    %v2684 = vsel %vm2112, %v2538, 0.0
    %2685 = vadd.xlane.f32.xlu0 %v2684
    %v2686 = vpop.xlane.xlu0 %2685
    %v2687 = vsel %vm2112, %v2539, 0.0
    %2688 = vadd.xlane.f32.xlu0 %v2687
    %v2689 = vpop.xlane.xlu0 %2688
    %v2690 = vsel %vm2112, %v2540, 0.0
    %2691 = vadd.xlane.f32.xlu0 %v2690
    %v2692 = vpop.xlane.xlu0 %2691
    %v2693 = vsel %vm2112, %v2541, 0.0
    %2694 = vadd.xlane.f32.xlu0 %v2693
    %v2695 = vpop.xlane.xlu0 %2694
    %v2696 = vsel %vm2112, %v2542, 0.0
    %2697 = vadd.xlane.f32.xlu0 %v2696
    %v2698 = vpop.xlane.xlu0 %2697
    %v2699 = vsel %vm2112, %v2543, 0.0
    %2700 = vadd.xlane.f32.xlu0 %v2699
    %v2701 = vpop.xlane.xlu0 %2700
    %v2702 = vsel %vm2112, %v2544, 0.0
    %2703 = vadd.xlane.f32.xlu0 %v2702
    %v2704 = vpop.xlane.xlu0 %2703
    %v2705 = vsel %vm2112, %v2545, 0.0
    %2706 = vadd.xlane.f32.xlu0 %v2705
    %v2707 = vpop.xlane.xlu0 %2706
    %v2708 = vsel %vm2112, %v2546, 0.0
    %2709 = vadd.xlane.f32.xlu0 %v2708
    %v2710 = vpop.xlane.xlu0 %2709
    %v2711 = vsel %vm2112, %v2547, 0.0
    %2712 = vadd.xlane.f32.xlu0 %v2711
    %v2713 = vpop.xlane.xlu0 %2712
    %v2714 = vsel %vm2112, %v2548, 0.0
    %2715 = vadd.xlane.f32.xlu0 %v2714
    %v2716 = vpop.xlane.xlu0 %2715
    %v2717 = vsel %vm2112, %v2549, 0.0
    %2718 = vadd.xlane.f32.xlu0 %v2717
    %v2719 = vpop.xlane.xlu0 %2718
    %v2720 = vsel %vm2112, %v2550, 0.0
    %2721 = vadd.xlane.f32.xlu0 %v2720
    %v2722 = vpop.xlane.xlu0 %2721
    %v2723 = vsel %vm2112, %v2551, 0.0
    %2724 = vadd.xlane.f32.xlu0 %v2723
    %v2725 = vpop.xlane.xlu0 %2724
    %v2726 = vsel %vm2112, %v2552, 0.0
    %2727 = vadd.xlane.f32.xlu0 %v2726
    %v2728 = vpop.xlane.xlu0 %2727
    %v2729 = vsel %vm2112, %v2553, 0.0
    %2730 = vadd.xlane.f32.xlu0 %v2729
    %v2731 = vpop.xlane.xlu0 %2730
    %v2732 = vsel %vm2112, %v2554, 0.0
    %2733 = vadd.xlane.f32.xlu0 %v2732
    %v2734 = vpop.xlane.xlu0 %2733
    %v2735 = vsel %vm2112, %v2555, 0.0
    %2736 = vadd.xlane.f32.xlu0 %v2735
    %v2737 = vpop.xlane.xlu0 %2736
    %v2738 = vsel %vm2112, %v2556, 0.0
    %2739 = vadd.xlane.f32.xlu0 %v2738
    %v2740 = vpop.xlane.xlu0 %2739
    %v2741 = vsel %vm2112, %v2557, 0.0
    %2742 = vadd.xlane.f32.xlu0 %v2741
    %v2743 = vpop.xlane.xlu0 %2742
    %v2744 = vsel %vm2112, %v2558, 0.0
    %2745 = vadd.xlane.f32.xlu0 %v2744
    %v2746 = vpop.xlane.xlu0 %2745
    %v2747 = vsel %vm2112, %v2559, 0.0
    %2748 = vadd.xlane.f32.xlu0 %v2747
    %v2749 = vpop.xlane.xlu0 %2748
    %v2750 = vsel %vm2112, %v2560, 0.0
    %2751 = vadd.xlane.f32.xlu0 %v2750
    %v2752 = vpop.xlane.xlu0 %2751
    %v2753 = vadd.f32 %v2563, 1e-12
    %v2754 = vadd.f32 %v2566, 1e-12
    %v2755 = vadd.f32 %v2569, 1e-12
    %v2756 = vadd.f32 %v2572, 1e-12
    %v2757 = vadd.f32 %v2575, 1e-12
    %v2758 = vadd.f32 %v2578, 1e-12
    %v2759 = vadd.f32 %v2581, 1e-12
    %v2760 = vadd.f32 %v2584, 1e-12
    %v2761 = vadd.f32 %v2587, 1e-12
    %v2762 = vadd.f32 %v2590, 1e-12
    %v2763 = vadd.f32 %v2593, 1e-12
    %v2764 = vadd.f32 %v2596, 1e-12
    %v2765 = vadd.f32 %v2599, 1e-12
    %v2766 = vadd.f32 %v2602, 1e-12
    %v2767 = vadd.f32 %v2605, 1e-12
    %v2768 = vadd.f32 %v2608, 1e-12
    %v2769 = vadd.f32 %v2611, 1e-12
    %v2770 = vadd.f32 %v2614, 1e-12
    %v2771 = vadd.f32 %v2617, 1e-12
    %v2772 = vadd.f32 %v2620, 1e-12
    %v2773 = vadd.f32 %v2623, 1e-12
    %v2774 = vadd.f32 %v2626, 1e-12
    %v2775 = vadd.f32 %v2629, 1e-12
    %v2776 = vadd.f32 %v2632, 1e-12
    %v2777 = vadd.f32 %v2635, 1e-12
    %v2778 = vadd.f32 %v2638, 1e-12
    %v2779 = vadd.f32 %v2641, 1e-12
    %v2780 = vadd.f32 %v2644, 1e-12
    %v2781 = vadd.f32 %v2647, 1e-12
    %v2782 = vadd.f32 %v2650, 1e-12
    %v2783 = vadd.f32 %v2653, 1e-12
    %v2784 = vadd.f32 %v2656, 1e-12
    %v2785 = vadd.f32 %v2659, 1e-12
    %v2786 = vadd.f32 %v2662, 1e-12
    %v2787 = vadd.f32 %v2665, 1e-12
    %v2788 = vadd.f32 %v2668, 1e-12
    %v2789 = vadd.f32 %v2671, 1e-12
    %v2790 = vadd.f32 %v2674, 1e-12
    %v2791 = vadd.f32 %v2677, 1e-12
    %v2792 = vadd.f32 %v2680, 1e-12
    %v2793 = vadd.f32 %v2683, 1e-12
    %v2794 = vadd.f32 %v2686, 1e-12
    %v2795 = vadd.f32 %v2689, 1e-12
    %v2796 = vadd.f32 %v2692, 1e-12
    %v2797 = vadd.f32 %v2695, 1e-12
    %v2798 = vadd.f32 %v2698, 1e-12
    %v2799 = vadd.f32 %v2701, 1e-12
    %v2800 = vadd.f32 %v2704, 1e-12
    %v2801 = vadd.f32 %v2707, 1e-12
    %v2802 = vadd.f32 %v2710, 1e-12
    %v2803 = vadd.f32 %v2713, 1e-12
    %v2804 = vadd.f32 %v2716, 1e-12
    %v2805 = vadd.f32 %v2719, 1e-12
    %v2806 = vadd.f32 %v2722, 1e-12
    %v2807 = vadd.f32 %v2725, 1e-12
    %v2808 = vadd.f32 %v2728, 1e-12
    %v2809 = vadd.f32 %v2731, 1e-12
    %v2810 = vadd.f32 %v2734, 1e-12
    %v2811 = vadd.f32 %v2737, 1e-12
    %v2812 = vadd.f32 %v2740, 1e-12
    %v2813 = vadd.f32 %v2743, 1e-12
    %v2814 = vadd.f32 %v2746, 1e-12
    %v2815 = vadd.f32 %v2749, 1e-12
    %v2816 = vadd.f32 %v2752, 1e-12
    %v2817 = vrsqrt.pop %v2753
    %v2818 = vrsqrt.pop %v2754
    %v2819 = vrsqrt.pop %v2755
    %v2820 = vrsqrt.pop %v2756
    %v2821 = vrsqrt.pop %v2757
    %v2822 = vrsqrt.pop %v2758
    %v2823 = vrsqrt.pop %v2759
    %v2824 = vrsqrt.pop %v2760
    %v2825 = vrsqrt.pop %v2761
    %v2826 = vrsqrt.pop %v2762
    %v2827 = vrsqrt.pop %v2763
    %v2828 = vrsqrt.pop %v2764
    %v2829 = vrsqrt.pop %v2765
    %v2830 = vrsqrt.pop %v2766
    %v2831 = vrsqrt.pop %v2767
    %v2832 = vrsqrt.pop %v2768
    %v2833 = vrsqrt.pop %v2769
    %v2834 = vrsqrt.pop %v2770
    %v2835 = vrsqrt.pop %v2771
    %v2836 = vrsqrt.pop %v2772
    %v2837 = vrsqrt.pop %v2773
    %v2838 = vrsqrt.pop %v2774
    %v2839 = vrsqrt.pop %v2775
    %v2840 = vrsqrt.pop %v2776
    %v2841 = vrsqrt.pop %v2777
    %v2842 = vrsqrt.pop %v2778
    %v2843 = vrsqrt.pop %v2779
    %v2844 = vrsqrt.pop %v2780
    %v2845 = vrsqrt.pop %v2781
    %v2846 = vrsqrt.pop %v2782
    %v2847 = vrsqrt.pop %v2783
    %v2848 = vrsqrt.pop %v2784
    %v2849 = vrsqrt.pop %v2785
    %v2850 = vrsqrt.pop %v2786
    %v2851 = vrsqrt.pop %v2787
    %v2852 = vrsqrt.pop %v2788
    %v2853 = vrsqrt.pop %v2789
    %v2854 = vrsqrt.pop %v2790
    %v2855 = vrsqrt.pop %v2791
    %v2856 = vrsqrt.pop %v2792
    %v2857 = vrsqrt.pop %v2793
    %v2858 = vrsqrt.pop %v2794
    %v2859 = vrsqrt.pop %v2795
    %v2860 = vrsqrt.pop %v2796
    %v2861 = vrsqrt.pop %v2797
    %v2862 = vrsqrt.pop %v2798
    %v2863 = vrsqrt.pop %v2799
    %v2864 = vrsqrt.pop %v2800
    %v2865 = vrsqrt.pop %v2801
    %v2866 = vrsqrt.pop %v2802
    %v2867 = vrsqrt.pop %v2803
    %v2868 = vrsqrt.pop %v2804
    %v2869 = vrsqrt.pop %v2805
    %v2870 = vrsqrt.pop %v2806
    %v2871 = vrsqrt.pop %v2807
    %v2872 = vrsqrt.pop %v2808
    %v2873 = vrsqrt.pop %v2809
    %v2874 = vrsqrt.pop %v2810
    %v2875 = vrsqrt.pop %v2811
    %v2876 = vrsqrt.pop %v2812
    %v2877 = vrsqrt.pop %v2813
    %v2878 = vrsqrt.pop %v2814
    %v2879 = vrsqrt.pop %v2815
    %v2880 = vrsqrt.pop %v2816
    %v2881 = vmul.f32 %v1343, %v2817
    %v2882 = vmul.f32 %v1344, %v2818
    %v2883 = vmul.f32 %v1345, %v2819
    %v2884 = vmul.f32 %v1346, %v2820
    %v2885 = vmul.f32 %v1347, %v2821
    %v2886 = vmul.f32 %v1348, %v2822
    %v2887 = vmul.f32 %v1349, %v2823
    %v2888 = vmul.f32 %v1350, %v2824
    %v2889 = vmul.f32 %v1351, %v2825
    %v2890 = vmul.f32 %v1352, %v2826
    %v2891 = vmul.f32 %v1353, %v2827
    %v2892 = vmul.f32 %v1354, %v2828
    %v2893 = vmul.f32 %v1355, %v2829
    %v2894 = vmul.f32 %v1356, %v2830
    %v2895 = vmul.f32 %v1357, %v2831
    %v2896 = vmul.f32 %v1358, %v2832
    %v2897 = vmul.f32 %v1359, %v2833
    %v2898 = vmul.f32 %v1360, %v2834
    %v2899 = vmul.f32 %v1361, %v2835
    %v2900 = vmul.f32 %v1362, %v2836
    %v2901 = vmul.f32 %v1363, %v2837
    %v2902 = vmul.f32 %v1364, %v2838
    %v2903 = vmul.f32 %v1365, %v2839
    %v2904 = vmul.f32 %v1366, %v2840
    %v2905 = vmul.f32 %v1367, %v2841
    %v2906 = vmul.f32 %v1368, %v2842
    %v2907 = vmul.f32 %v1369, %v2843
    %v2908 = vmul.f32 %v1370, %v2844
    %v2909 = vmul.f32 %v1371, %v2845
    %v2910 = vmul.f32 %v1372, %v2846
    %v2911 = vmul.f32 %v1373, %v2847
    %v2912 = vmul.f32 %v1374, %v2848
    %v2913 = vmul.f32 %v1375, %v2849
    %v2914 = vmul.f32 %v1376, %v2850
    %v2915 = vmul.f32 %v1377, %v2851
    %v2916 = vmul.f32 %v1378, %v2852
    %v2917 = vmul.f32 %v1379, %v2853
    %v2918 = vmul.f32 %v1380, %v2854
    %v2919 = vmul.f32 %v1381, %v2855
    %v2920 = vmul.f32 %v1382, %v2856
    %v2921 = vmul.f32 %v1383, %v2857
    %v2922 = vmul.f32 %v1384, %v2858
    %v2923 = vmul.f32 %v1385, %v2859
    %v2924 = vmul.f32 %v1386, %v2860
    %v2925 = vmul.f32 %v1387, %v2861
    %v2926 = vmul.f32 %v1388, %v2862
    %v2927 = vmul.f32 %v1389, %v2863
    %v2928 = vmul.f32 %v1390, %v2864
    %v2929 = vmul.f32 %v1391, %v2865
    %v2930 = vmul.f32 %v1392, %v2866
    %v2931 = vmul.f32 %v1393, %v2867
    %v2932 = vmul.f32 %v1394, %v2868
    %v2933 = vmul.f32 %v1395, %v2869
    %v2934 = vmul.f32 %v1396, %v2870
    %v2935 = vmul.f32 %v1397, %v2871
    %v2936 = vmul.f32 %v1398, %v2872
    %v2937 = vmul.f32 %v1399, %v2873
    %v2938 = vmul.f32 %v1400, %v2874
    %v2939 = vmul.f32 %v1401, %v2875
    %v2940 = vmul.f32 %v1402, %v2876
    %v2941 = vmul.f32 %v1403, %v2877
    %v2942 = vmul.f32 %v1404, %v2878
    %v2943 = vmul.f32 %v1405, %v2879
    %v2944 = vmul.f32 %v1406, %v2880
    %v2945 = vsub.f32 %v2433, %v2881
    %v2946 = vsub.f32 %v2434, %v2882
    %v2947 = vsub.f32 %v2435, %v2883
    %v2948 = vsub.f32 %v2436, %v2884
    %v2949 = vsub.f32 %v2437, %v2885
    %v2950 = vsub.f32 %v2438, %v2886
    %v2951 = vsub.f32 %v2439, %v2887
    %v2952 = vsub.f32 %v2440, %v2888
    %v2953 = vsub.f32 %v2441, %v2889
    %v2954 = vsub.f32 %v2442, %v2890
    %v2955 = vsub.f32 %v2443, %v2891
    %v2956 = vsub.f32 %v2444, %v2892
    %v2957 = vsub.f32 %v2445, %v2893
    %v2958 = vsub.f32 %v2446, %v2894
    %v2959 = vsub.f32 %v2447, %v2895
    %v2960 = vsub.f32 %v2448, %v2896
    %v2961 = vsub.f32 %v2449, %v2897
    %v2962 = vsub.f32 %v2450, %v2898
    %v2963 = vsub.f32 %v2451, %v2899
    %v2964 = vsub.f32 %v2452, %v2900
    %v2965 = vsub.f32 %v2453, %v2901
    %v2966 = vsub.f32 %v2454, %v2902
    %v2967 = vsub.f32 %v2455, %v2903
    %v2968 = vsub.f32 %v2456, %v2904
    %v2969 = vsub.f32 %v2457, %v2905
    %v2970 = vsub.f32 %v2458, %v2906
    %v2971 = vsub.f32 %v2459, %v2907
    %v2972 = vsub.f32 %v2460, %v2908
    %v2973 = vsub.f32 %v2461, %v2909
    %v2974 = vsub.f32 %v2462, %v2910
    %v2975 = vsub.f32 %v2463, %v2911
    %v2976 = vsub.f32 %v2464, %v2912
    %v2977 = vsub.f32 %v2465, %v2913
    %v2978 = vsub.f32 %v2466, %v2914
    %v2979 = vsub.f32 %v2467, %v2915
    %v2980 = vsub.f32 %v2468, %v2916
    %v2981 = vsub.f32 %v2469, %v2917
    %v2982 = vsub.f32 %v2470, %v2918
    %v2983 = vsub.f32 %v2471, %v2919
    %v2984 = vsub.f32 %v2472, %v2920
    %v2985 = vsub.f32 %v2473, %v2921
    %v2986 = vsub.f32 %v2474, %v2922
    %v2987 = vsub.f32 %v2475, %v2923
    %v2988 = vsub.f32 %v2476, %v2924
    %v2989 = vsub.f32 %v2477, %v2925
    %v2990 = vsub.f32 %v2478, %v2926
    %v2991 = vsub.f32 %v2479, %v2927
    %v2992 = vsub.f32 %v2480, %v2928
    %v2993 = vsub.f32 %v2481, %v2929
    %v2994 = vsub.f32 %v2482, %v2930
    %v2995 = vsub.f32 %v2483, %v2931
    %v2996 = vsub.f32 %v2484, %v2932
    %v2997 = vsub.f32 %v2485, %v2933
    %v2998 = vsub.f32 %v2486, %v2934
    %v2999 = vsub.f32 %v2487, %v2935
    %v3000 = vsub.f32 %v2488, %v2936
    %v3001 = vsub.f32 %v2489, %v2937
    %v3002 = vsub.f32 %v2490, %v2938
    %v3003 = vsub.f32 %v2491, %v2939
    %v3004 = vsub.f32 %v2492, %v2940
    %v3005 = vsub.f32 %v2493, %v2941
    %v3006 = vsub.f32 %v2494, %v2942
    %v3007 = vsub.f32 %v2495, %v2943
    %v3008 = vsub.f32 %v2496, %v2944
    %v3009 = vmul.f32 %v2945, %v2945
    %v3010 = vmul.f32 %v2946, %v2946
    %v3011 = vmul.f32 %v2947, %v2947
    %v3012 = vmul.f32 %v2948, %v2948
    %v3013 = vmul.f32 %v2949, %v2949
    %v3014 = vmul.f32 %v2950, %v2950
    %v3015 = vmul.f32 %v2951, %v2951
    %v3016 = vmul.f32 %v2952, %v2952
    %v3017 = vmul.f32 %v2953, %v2953
    %v3018 = vmul.f32 %v2954, %v2954
    %v3019 = vmul.f32 %v2955, %v2955
    %v3020 = vmul.f32 %v2956, %v2956
    %v3021 = vmul.f32 %v2957, %v2957
    %v3022 = vmul.f32 %v2958, %v2958
    %v3023 = vmul.f32 %v2959, %v2959
    %v3024 = vmul.f32 %v2960, %v2960
    %v3025 = vmul.f32 %v2961, %v2961
    %v3026 = vmul.f32 %v2962, %v2962
    %v3027 = vmul.f32 %v2963, %v2963
    %v3028 = vmul.f32 %v2964, %v2964
    %v3029 = vmul.f32 %v2965, %v2965
    %v3030 = vmul.f32 %v2966, %v2966
    %v3031 = vmul.f32 %v2967, %v2967
    %v3032 = vmul.f32 %v2968, %v2968
    %v3033 = vmul.f32 %v2969, %v2969
    %v3034 = vmul.f32 %v2970, %v2970
    %v3035 = vmul.f32 %v2971, %v2971
    %v3036 = vmul.f32 %v2972, %v2972
    %v3037 = vmul.f32 %v2973, %v2973
    %v3038 = vmul.f32 %v2974, %v2974
    %v3039 = vmul.f32 %v2975, %v2975
    %v3040 = vmul.f32 %v2976, %v2976
    %v3041 = vmul.f32 %v2977, %v2977
    %v3042 = vmul.f32 %v2978, %v2978
    %v3043 = vmul.f32 %v2979, %v2979
    %v3044 = vmul.f32 %v2980, %v2980
    %v3045 = vmul.f32 %v2981, %v2981
    %v3046 = vmul.f32 %v2982, %v2982
    %v3047 = vmul.f32 %v2983, %v2983
    %v3048 = vmul.f32 %v2984, %v2984
    %v3049 = vmul.f32 %v2985, %v2985
    %v3050 = vmul.f32 %v2986, %v2986
    %v3051 = vmul.f32 %v2987, %v2987
    %v3052 = vmul.f32 %v2988, %v2988
    %v3053 = vmul.f32 %v2989, %v2989
    %v3054 = vmul.f32 %v2990, %v2990
    %v3055 = vmul.f32 %v2991, %v2991
    %v3056 = vmul.f32 %v2992, %v2992
    %v3057 = vmul.f32 %v2993, %v2993
    %v3058 = vmul.f32 %v2994, %v2994
    %v3059 = vmul.f32 %v2995, %v2995
    %v3060 = vmul.f32 %v2996, %v2996
    %v3061 = vmul.f32 %v2997, %v2997
    %v3062 = vmul.f32 %v2998, %v2998
    %v3063 = vmul.f32 %v2999, %v2999
    %v3064 = vmul.f32 %v3000, %v3000
    %v3065 = vmul.f32 %v3001, %v3001
    %v3066 = vmul.f32 %v3002, %v3002
    %v3067 = vmul.f32 %v3003, %v3003
    %v3068 = vmul.f32 %v3004, %v3004
    %v3069 = vmul.f32 %v3005, %v3005
    %v3070 = vmul.f32 %v3006, %v3006
    %v3071 = vmul.f32 %v3007, %v3007
    %v3072 = vmul.f32 %v3008, %v3008
    %v3073 = vld [vmem:[%s4] sm:$0x1]
    %v3075 = vlaneseq
    %v3076 = vshrl.u32 %v3075, 7
    %v3077 = vsub.s32 0, %v3076
    %v3078 = vrot.slane %v3073, %v3077
    %v3080 = vmul.f32 %v3009, %v3078
    %v3081 = vmul.f32 %v3010, %v3078
    %v3082 = vmul.f32 %v3011, %v3078
    %v3083 = vmul.f32 %v3012, %v3078
    %v3084 = vmul.f32 %v3013, %v3078
    %v3085 = vmul.f32 %v3014, %v3078
    %v3086 = vmul.f32 %v3015, %v3078
    %v3087 = vmul.f32 %v3016, %v3078
    %v3088 = vmul.f32 %v3017, %v3078
    %v3089 = vmul.f32 %v3018, %v3078
    %v3090 = vmul.f32 %v3019, %v3078
    %v3091 = vmul.f32 %v3020, %v3078
    %v3092 = vmul.f32 %v3021, %v3078
    %v3093 = vmul.f32 %v3022, %v3078
    %v3094 = vmul.f32 %v3023, %v3078
    %v3095 = vmul.f32 %v3024, %v3078
    %v3096 = vmul.f32 %v3025, %v3078
    %v3097 = vmul.f32 %v3026, %v3078
    %v3098 = vmul.f32 %v3027, %v3078
    %v3099 = vmul.f32 %v3028, %v3078
    %v3100 = vmul.f32 %v3029, %v3078
    %v3101 = vmul.f32 %v3030, %v3078
    %v3102 = vmul.f32 %v3031, %v3078
    %v3103 = vmul.f32 %v3032, %v3078
    %v3104 = vmul.f32 %v3033, %v3078
    %v3105 = vmul.f32 %v3034, %v3078
    %v3106 = vmul.f32 %v3035, %v3078
    %v3107 = vmul.f32 %v3036, %v3078
    %v3108 = vmul.f32 %v3037, %v3078
    %v3109 = vmul.f32 %v3038, %v3078
    %v3110 = vmul.f32 %v3039, %v3078
    %v3111 = vmul.f32 %v3040, %v3078
    %v3112 = vmul.f32 %v3041, %v3078
    %v3113 = vmul.f32 %v3042, %v3078
    %v3114 = vmul.f32 %v3043, %v3078
    %v3115 = vmul.f32 %v3044, %v3078
    %v3116 = vmul.f32 %v3045, %v3078
    %v3117 = vmul.f32 %v3046, %v3078
    %v3118 = vmul.f32 %v3047, %v3078
    %v3119 = vmul.f32 %v3048, %v3078
    %v3120 = vmul.f32 %v3049, %v3078
    %v3121 = vmul.f32 %v3050, %v3078
    %v3122 = vmul.f32 %v3051, %v3078
    %v3123 = vmul.f32 %v3052, %v3078
    %v3124 = vmul.f32 %v3053, %v3078
    %v3125 = vmul.f32 %v3054, %v3078
    %v3126 = vmul.f32 %v3055, %v3078
    %v3127 = vmul.f32 %v3056, %v3078
    %v3128 = vmul.f32 %v3057, %v3078
    %v3129 = vmul.f32 %v3058, %v3078
    %v3130 = vmul.f32 %v3059, %v3078
    %v3131 = vmul.f32 %v3060, %v3078
    %v3132 = vmul.f32 %v3061, %v3078
    %v3133 = vmul.f32 %v3062, %v3078
    %v3134 = vmul.f32 %v3063, %v3078
    %v3135 = vmul.f32 %v3064, %v3078
    %v3136 = vmul.f32 %v3065, %v3078
    %v3137 = vmul.f32 %v3066, %v3078
    %v3138 = vmul.f32 %v3067, %v3078
    %v3139 = vmul.f32 %v3068, %v3078
    %v3140 = vmul.f32 %v3069, %v3078
    %v3141 = vmul.f32 %v3070, %v3078
    %v3142 = vmul.f32 %v3071, %v3078
    %v3143 = vmul.f32 %v3072, %v3078
    %v3144 = vld [vmem:[#allocation2] sm:$0xff]
    %v3145 = vsel %vm2112, %v3080, 0.0
    %v3146 = vsel %vm2112, %v3081, 0.0
    %v3147 = vadd.f32 %v3145, %v3146
    %v3148 = vsel %vm2112, %v3082, 0.0
    %v3149 = vadd.f32 %v3147, %v3148
    %v3150 = vsel %vm2112, %v3083, 0.0
    %v3151 = vadd.f32 %v3149, %v3150
    %v3152 = vsel %vm2112, %v3084, 0.0
    %v3153 = vadd.f32 %v3151, %v3152
    %v3154 = vsel %vm2112, %v3085, 0.0
    %v3155 = vadd.f32 %v3153, %v3154
    %v3156 = vsel %vm2112, %v3086, 0.0
    %v3157 = vadd.f32 %v3155, %v3156
    %v3158 = vsel %vm2112, %v3087, 0.0
    %v3159 = vadd.f32 %v3157, %v3158
    %v3160 = vsel %vm2112, %v3088, 0.0
    %v3161 = vadd.f32 %v3159, %v3160
    %v3162 = vsel %vm2112, %v3089, 0.0
    %v3163 = vadd.f32 %v3161, %v3162
    %v3164 = vsel %vm2112, %v3090, 0.0
    %v3165 = vadd.f32 %v3163, %v3164
    %v3166 = vsel %vm2112, %v3091, 0.0
    %v3167 = vadd.f32 %v3165, %v3166
    %v3168 = vsel %vm2112, %v3092, 0.0
    %v3169 = vadd.f32 %v3167, %v3168
    %v3170 = vsel %vm2112, %v3093, 0.0
    %v3171 = vadd.f32 %v3169, %v3170
    %v3172 = vsel %vm2112, %v3094, 0.0
    %v3173 = vadd.f32 %v3171, %v3172
    %v3174 = vsel %vm2112, %v3095, 0.0
    %v3175 = vadd.f32 %v3173, %v3174
    %v3176 = vsel %vm2112, %v3096, 0.0
    %v3177 = vadd.f32 %v3175, %v3176
    %v3178 = vsel %vm2112, %v3097, 0.0
    %v3179 = vadd.f32 %v3177, %v3178
    %v3180 = vsel %vm2112, %v3098, 0.0
    %v3181 = vadd.f32 %v3179, %v3180
    %v3182 = vsel %vm2112, %v3099, 0.0
    %v3183 = vadd.f32 %v3181, %v3182
    %v3184 = vsel %vm2112, %v3100, 0.0
    %v3185 = vadd.f32 %v3183, %v3184
    %v3186 = vsel %vm2112, %v3101, 0.0
    %v3187 = vadd.f32 %v3185, %v3186
    %v3188 = vsel %vm2112, %v3102, 0.0
    %v3189 = vadd.f32 %v3187, %v3188
    %v3190 = vsel %vm2112, %v3103, 0.0
    %v3191 = vadd.f32 %v3189, %v3190
    %v3192 = vsel %vm2112, %v3104, 0.0
    %v3193 = vadd.f32 %v3191, %v3192
    %v3194 = vsel %vm2112, %v3105, 0.0
    %v3195 = vadd.f32 %v3193, %v3194
    %v3196 = vsel %vm2112, %v3106, 0.0
    %v3197 = vadd.f32 %v3195, %v3196
    %v3198 = vsel %vm2112, %v3107, 0.0
    %v3199 = vadd.f32 %v3197, %v3198
    %v3200 = vsel %vm2112, %v3108, 0.0
    %v3201 = vadd.f32 %v3199, %v3200
    %v3202 = vsel %vm2112, %v3109, 0.0
    %v3203 = vadd.f32 %v3201, %v3202
    %v3204 = vsel %vm2112, %v3110, 0.0
    %v3205 = vadd.f32 %v3203, %v3204
    %v3206 = vsel %vm2112, %v3111, 0.0
    %v3207 = vadd.f32 %v3205, %v3206
    %v3208 = vsel %vm2112, %v3112, 0.0
    %v3209 = vadd.f32 %v3207, %v3208
    %v3210 = vsel %vm2112, %v3113, 0.0
    %v3211 = vadd.f32 %v3209, %v3210
    %v3212 = vsel %vm2112, %v3114, 0.0
    %v3213 = vadd.f32 %v3211, %v3212
    %v3214 = vsel %vm2112, %v3115, 0.0
    %v3215 = vadd.f32 %v3213, %v3214
    %v3216 = vsel %vm2112, %v3116, 0.0
    %v3217 = vadd.f32 %v3215, %v3216
    %v3218 = vsel %vm2112, %v3117, 0.0
    %v3219 = vadd.f32 %v3217, %v3218
    %v3220 = vsel %vm2112, %v3118, 0.0
    %v3221 = vadd.f32 %v3219, %v3220
    %v3222 = vsel %vm2112, %v3119, 0.0
    %v3223 = vadd.f32 %v3221, %v3222
    %v3224 = vsel %vm2112, %v3120, 0.0
    %v3225 = vadd.f32 %v3223, %v3224
    %v3226 = vsel %vm2112, %v3121, 0.0
    %v3227 = vadd.f32 %v3225, %v3226
    %v3228 = vsel %vm2112, %v3122, 0.0
    %v3229 = vadd.f32 %v3227, %v3228
    %v3230 = vsel %vm2112, %v3123, 0.0
    %v3231 = vadd.f32 %v3229, %v3230
    %v3232 = vsel %vm2112, %v3124, 0.0
    %v3233 = vadd.f32 %v3231, %v3232
    %v3234 = vsel %vm2112, %v3125, 0.0
    %v3235 = vadd.f32 %v3233, %v3234
    %v3236 = vsel %vm2112, %v3126, 0.0
    %v3237 = vadd.f32 %v3235, %v3236
    %v3238 = vsel %vm2112, %v3127, 0.0
    %v3239 = vadd.f32 %v3237, %v3238
    %v3240 = vsel %vm2112, %v3128, 0.0
    %v3241 = vadd.f32 %v3239, %v3240
    %v3242 = vsel %vm2112, %v3129, 0.0
    %v3243 = vadd.f32 %v3241, %v3242
    %v3244 = vsel %vm2112, %v3130, 0.0
    %v3245 = vadd.f32 %v3243, %v3244
    %v3246 = vsel %vm2112, %v3131, 0.0
    %v3247 = vadd.f32 %v3245, %v3246
    %v3248 = vsel %vm2112, %v3132, 0.0
    %v3249 = vadd.f32 %v3247, %v3248
    %v3250 = vsel %vm2112, %v3133, 0.0
    %v3251 = vadd.f32 %v3249, %v3250
    %v3252 = vsel %vm2112, %v3134, 0.0
    %v3253 = vadd.f32 %v3251, %v3252
    %v3254 = vsel %vm2112, %v3135, 0.0
    %v3255 = vadd.f32 %v3253, %v3254
    %v3256 = vsel %vm2112, %v3136, 0.0
    %v3257 = vadd.f32 %v3255, %v3256
    %v3258 = vsel %vm2112, %v3137, 0.0
    %v3259 = vadd.f32 %v3257, %v3258
    %v3260 = vsel %vm2112, %v3138, 0.0
    %v3261 = vadd.f32 %v3259, %v3260
    %v3262 = vsel %vm2112, %v3139, 0.0
    %v3263 = vadd.f32 %v3261, %v3262
    %v3264 = vsel %vm2112, %v3140, 0.0
    %v3265 = vadd.f32 %v3263, %v3264
    %v3266 = vsel %vm2112, %v3141, 0.0
    %v3267 = vadd.f32 %v3265, %v3266
    %v3268 = vsel %vm2112, %v3142, 0.0
    %v3269 = vadd.f32 %v3267, %v3268
    %v3270 = vsel %vm2112, %v3143, 0.0
    %v3271 = vadd.f32 %v3269, %v3270
    %v3272 = vadd.f32 %v3144, %v3271
    %3273 = vst.msk [vmem:[#allocation2] sm:$0xff] %vm2112, %v3272
    // Predicated region
    $region26: #{my_loss.7} parent=1 // pred_check
      %p3274 = pneg %p25
    $region27: #{my_loss.7} parent=1 // pred_check_branch
      %3276 = sbr.rel (%p3274) target = $region29
    $region28: #{my_loss.7} parent=1 // pred_region
      %v3277 = vld [vmem:[#allocation2] sm:$0xff]
      %v3278 = vsel %vm2112, %v3277, 0.0
      %3279 = vadd.xlane.f32.xlu0 %v3278
      %v3280 = vpop.xlane.xlu0 %3279
      %v3281 = vrot.slane %v3280, 4
      %v3282 = vadd.f32 %v3280, %v3281
      %v3283 = vrot.slane %v3282, 2
      %v3284 = vadd.f32 %v3282, %v3283
      %v3285 = vrot.slane %v3284, 1
      %v3286 = vadd.f32 %v3284, %v3285
      %s3287 = vtos %v3286
      %s3288 = scalar_lea.smem [#allocation3], 0
      %3289 = sst [smem:[%s3288]] %s3287
    $region29: #{my_loss.7} parent=1 // pred_fallthru
      _
    // Predicated region
    $region30: #{my_loss.7} parent=1 // pred_check
      _
    $region31: #{my_loss.7} parent=1 // pred_check_branch
      %3291 = sbr.rel (0) target = $region33
    $region32: #{my_loss.7} parent=1 // pred_region
      _
    $region33: #{my_loss.7} parent=1 // pred_fallthru
      _
    // Predicated region
    $region34: #{my_loss.7} parent=1 // pred_check
      _
    $region35: #{my_loss.7} parent=1 // pred_check_branch
      %3293 = sbr.rel (0) target = $region37
    $region36: #{my_loss.7} parent=1 // pred_region
      _
    $region37: #{my_loss.7} parent=1 // pred_fallthru
      _
    // Predicated region
    $region38: #{my_loss.7} parent=1 // pred_check
      _
    $region39: #{my_loss.7} parent=1 // pred_check_branch
      %3295 = sbr.rel (0) target = $region41
    $region40: #{my_loss.7} parent=1 // pred_region
      %s3297 = ssub.s32 16, 16
      %3298 = vsyncadd [#allocation4], %s3297
      %3301 = dma.smem_to_hbm [#allocation3], 16, %s7, [#allocation4]
    $region41: #{my_loss.7} parent=1 // pred_fallthru
      _
    // Predicated region
    $region42: #{my_loss.7} parent=1 // pred_check
      _
    $region43: #{my_loss.7} parent=1 // pred_check_branch
      %3303 = sbr.rel (0) target = $region45
    $region44: #{my_loss.7} parent=1 // pred_region
      _
    $region45: #{my_loss.7} parent=1 // pred_fallthru
      _
    // Predicated region
    $region46: #{my_loss.7} parent=1 // pred_check
      _
    $region47: #{my_loss.7} parent=1 // pred_check_branch
      %3305 = sbr.rel (0) target = $region49
    $region48: #{my_loss.7} parent=1 // pred_region
      _
    $region49: #{my_loss.7} parent=1 // pred_fallthru
      _
    // Predicated region
    $region50: #{my_loss.7} parent=1 // pred_check
      _
    $region51: #{my_loss.7} parent=1 // pred_check_branch
      %3307 = sbr.rel (0) target = $region53
    $region52: #{my_loss.7} parent=1 // pred_region
      %3308 = dma.done [#allocation4], 16
    $region53: #{my_loss.7} parent=1 // pred_fallthru
      _
    %3309 = sfence
    %3310 = vsyncpa [#allocation4], 1

// kernel: my_loss.8
$region0: #{my_loss.8}
  #allocation0 [shape = 'u32[]', space=smem, size = 0x4, offset = 0x4, fixed_abs, tag = 'smem constant byte address 0x4 - core index']
  #allocation1 [shape = 'u32[144,128]{1,0:T(1,128)}', space=vmem, size = 0x12000, scoped, tag = 'internal scratch']
  #allocation2 [shape = 'f32[8,16]{1,0:T(8,128)}', space=vmem, size = 0x1000, scoped, tag = 'scratch operand']
  %s0 = inlined_call_operand.vmem [shape: bf16[128,72], index: 0, kind: input, shape index: {}]
  %s1 = inlined_call_operand.vmem [shape: bf16[128,72], index: 1, kind: input, shape index: {}]
  %s2 = inlined_call_operand.vmem [shape: bf16[72,16], index: 2, kind: input, shape index: {}]
  %s3 = inlined_call_operand.vmem [shape: f32[1,16], index: 3, kind: input, shape index: {}]
  %s4 = inlined_call_operand.vmem [shape: f32[1,16], index: 4, kind: input, shape index: {}]
  %s5 = inlined_call_operand.vmem [shape: bf16[128,16], index: 5, kind: output, shape index: {0}]
  %s6 = inlined_call_operand.vmem [shape: bf16[128,16], index: 6, kind: output, shape index: {1}]
  %s7 = inlined_call_operand.hbm [shape: f32[1,1], index: 7, kind: output, shape index: {2}]
  %8 = xla_tuple %s5, %s6, %s7
  %s9 = sld [smem:[#allocation0]]
  $region54: #{my_loss.8} parent=0
    _
  %s11 = ssub.s32 1, %s9
  %s12 = scalar_select 0, %s11, %s9
  $region1: #{my_loss.8} parent=0
    #allocation3 [shape = 'u8[512]{0}', space=smem, size = 0x200, scoped, tag = 'output window, operand 2, single buffered']
    #allocation4 [shape = 's32[1]{0}', space=sflag, size = 0x4, scoped, tag = 'scoped memory for my_loss.8']
    %13 = vsyncpa [#allocation4], 0
    // Predicated region
    $region2: #{my_loss.8} parent=1 // pred_check
      _
    $region3: #{my_loss.8} parent=1 // pred_check_branch
      %15 = sbr.rel (0) target = $region5
    $region4: #{my_loss.8} parent=1 // pred_region
      _
    $region5: #{my_loss.8} parent=1 // pred_fallthru
      _
    // Predicated region
    $region6: #{my_loss.8} parent=1 // pred_check
      _
    $region7: #{my_loss.8} parent=1 // pred_check_branch
      %17 = sbr.rel (0) target = $region9
    $region8: #{my_loss.8} parent=1 // pred_region
      _
    $region9: #{my_loss.8} parent=1 // pred_fallthru
      _
    // Predicated region
    $region10: #{my_loss.8} parent=1 // pred_check
      _
    $region11: #{my_loss.8} parent=1 // pred_check_branch
      %19 = sbr.rel (0) target = $region13
    $region12: #{my_loss.8} parent=1 // pred_region
      _
    $region13: #{my_loss.8} parent=1 // pred_fallthru
      _
    // Predicated region
    $region14: #{my_loss.8} parent=1 // pred_check
      _
    $region15: #{my_loss.8} parent=1 // pred_check_branch
      %21 = sbr.rel (0) target = $region17
    $region16: #{my_loss.8} parent=1 // pred_region
      _
    $region17: #{my_loss.8} parent=1 // pred_fallthru
      _
    // Predicated region
    $region18: #{my_loss.8} parent=1 // pred_check
      _
    $region19: #{my_loss.8} parent=1 // pred_check_branch
      %23 = sbr.rel (0) target = $region21
    $region20: #{my_loss.8} parent=1 // pred_region
      _
    $region21: #{my_loss.8} parent=1 // pred_fallthru
      _
    %p25 = scmp.eq.s32.totalorder 0, 0
    // Predicated region
    $region22: #{my_loss.8} parent=1 // pred_check
      %p26 = pneg %p25
    $region23: #{my_loss.8} parent=1 // pred_check_branch
      %28 = sbr.rel (%p26) target = $region25
    $region24: #{my_loss.8} parent=1 // pred_region
      %vm29 = vcmask 130048
      %30 = vst.msk [vmem:[#allocation2] sm:$0xff] %vm29, 0.0
    $region25: #{my_loss.8} parent=1 // pred_fallthru
      _
    %v31 = vld [vmem:[%s2] sm:$0xf]
    %v32 = vld [vmem:[%s2 + $0x4] sm:$0xf]
    %v33 = vld [vmem:[%s2 + $0x8] sm:$0xf]
    %v34 = vld [vmem:[%s2 + $0xc] sm:$0xf]
    %v35 = vld [vmem:[%s2 + $0x10] sm:$0xf]
    %v36 = vld [vmem:[%s2 + $0x14] sm:$0xf]
    %v37 = vld [vmem:[%s2 + $0x18] sm:$0xf]
    %v38 = vld [vmem:[%s2 + $0x1c] sm:$0xf]
    %v39 = vld [vmem:[%s2 + $0x20] sm:$0xf]
    %v40 = vld [vmem:[%s3] sm:$0x1]
    %v41 = vld [vmem:[%s0] sm:$0xf]
    %v42 = vld [vmem:[%s0 + $0x4] sm:$0xf]
    %v43 = vld [vmem:[%s0 + $0x8] sm:$0xf]
    %v44 = vld [vmem:[%s0 + $0xc] sm:$0xf]
    %v45 = vld [vmem:[%s0 + $0x10] sm:$0xf]
    %v46 = vld [vmem:[%s0 + $0x14] sm:$0xf]
    %v47 = vld [vmem:[%s0 + $0x18] sm:$0xf]
    %v48 = vld [vmem:[%s0 + $0x1c] sm:$0xf]
    %v49 = vld [vmem:[%s0 + $0x20] sm:$0xf]
    %v50 = vld [vmem:[%s0 + $0x24] sm:$0xf]
    %v51 = vld [vmem:[%s0 + $0x28] sm:$0xf]
    %v52 = vld [vmem:[%s0 + $0x2c] sm:$0xf]
    %v53 = vld [vmem:[%s0 + $0x30] sm:$0xf]
    %v54 = vld [vmem:[%s0 + $0x34] sm:$0xf]
    %v55 = vld [vmem:[%s0 + $0x38] sm:$0xf]
    %v56 = vld [vmem:[%s0 + $0x3c] sm:$0xf]
    %v58 = vlaneseq
    %v59 = vshrl.u32 %v58, 7
    %v60 = vsub.s32 0, %v59
    %v61 = vrot.slane %v40, %v60
    %v79 = vunpack.c.l.b16 %v41
    %v80 = vunpack.c.l.b16 %v42
    %v81 = vunpack.c.l.b16 %v43
    %v82 = vunpack.c.l.b16 %v44
    %v83 = vunpack.c.l.b16 %v45
    %v84 = vunpack.c.l.b16 %v46
    %v85 = vunpack.c.l.b16 %v47
    %v86 = vunpack.c.l.b16 %v48
    %v87 = vunpack.c.l.b16 %v49
    %v88 = vunpack.c.l.b16 %v50
    %v89 = vunpack.c.l.b16 %v51
    %v90 = vunpack.c.l.b16 %v52
    %v91 = vunpack.c.l.b16 %v53
    %v92 = vunpack.c.l.b16 %v54
    %v93 = vunpack.c.l.b16 %v55
    %v94 = vunpack.c.l.b16 %v56
    %v95 = vpack.c.b16 %v80, %v79
    %v96 = vpack.c.b16 %v82, %v81
    %v97 = vpack.c.b16 %v84, %v83
    %v98 = vpack.c.b16 %v86, %v85
    %v99 = vpack.c.b16 %v88, %v87
    %v100 = vpack.c.b16 %v90, %v89
    %v101 = vpack.c.b16 %v92, %v91
    %v102 = vpack.c.b16 %v94, %v93
    %v112 = vunpack.c.l.b16 %v31
    %v113 = vunpack.c.l.b16 %v32
    %v114 = vunpack.c.l.b16 %v33
    %v115 = vunpack.c.l.b16 %v34
    %v116 = vunpack.c.l.b16 %v35
    %v117 = vunpack.c.l.b16 %v36
    %v118 = vunpack.c.l.b16 %v37
    %v119 = vunpack.c.l.b16 %v38
    %v120 = vunpack.c.l.b16 %v39
    %v121 = vpack.c.b16 %v113, %v112
    %v122 = vpack.c.b16 %v115, %v114
    %v123 = vpack.c.b16 %v117, %v116
    %v124 = vpack.c.b16 %v119, %v118
    %v125 = vpack.c.b16 %v120, %v120
    %vm130 = vcmask 588800
    %v132 = vsel %vm130, %v95, 0
    %v135 = vsel %vm130, %v96, 0
    %v138 = vsel %vm130, %v97, 0
    %v141 = vsel %vm130, %v98, 0
    %v144 = vsel %vm130, %v99, 0
    %v147 = vsel %vm130, %v100, 0
    %v150 = vsel %vm130, %v101, 0
    %v153 = vsel %vm130, %v102, 0
    %vm155 = vcmask 1043456
    %v157 = vsel %vm155, %v125, 0
    %159 = vmatprep.subr.bf16.mxu0 0
    %160 = vmatpush1.bf16.msra.mxu0 0
    %161 = vmatprep.subr.bf16.mxu0 0
    %162 = vmatpush1.bf16.msra.mxu0 0
    %163 = vmatprep.subr.bf16.mxu0 0
    %164 = vmatpush1.bf16.msra.mxu0 0
    %165 = vmatprep.subr.bf16.mxu0 0
    %166 = vmatpush1.bf16.msra.mxu0 %v157
    %167 = vmatprep.subr.bf16.mxu0 0
    %168 = vmatpush1.bf16.msra.mxu0 %v124
    %169 = vmatprep.subr.bf16.mxu0 0
    %170 = vmatpush1.bf16.msra.mxu0 %v123
    %171 = vmatprep.subr.bf16.mxu0 0
    %172 = vmatpush1.bf16.msra.mxu0 %v122
    %173 = vmatprep.subr.bf16.mxu0 0
    %174 = vmatpush1.bf16.msra.mxu0 %v121
    %175 = vmatprep.subr.bf16.mxu0 0
    %176 = vmatpush2.bf16.msra.mxu0 0
    %177 = vmatprep.subr.bf16.mxu0 0
    %178 = vmatpush2.bf16.msra.mxu0 0
    %179 = vmatprep.subr.bf16.mxu0 0
    %180 = vmatpush2.bf16.msra.mxu0 0
    %181 = vmatprep.subr.bf16.mxu0 0
    %182 = vmatpush2.bf16.msra.mxu0 0
    %183 = vmatprep.subr.bf16.mxu0 0
    %184 = vmatpush2.bf16.msra.mxu0 0
    %185 = vmatprep.subr.bf16.mxu0 0
    %186 = vmatpush2.bf16.msra.mxu0 0
    %187 = vmatprep.subr.bf16.mxu0 0
    %188 = vmatpush2.bf16.msra.mxu0 0
    %189 = vmatprep.subr.bf16.mxu0 0
    %190 = vmatpush2.bf16.msra.mxu0 0
    %191 = vmatprep.mubr.bf16.mxu0 0
    %192 = vmatmul.mubr.bf16.gmra.mxu0 %v132
    %v193 = vpop.f32.mrf.mxu0
    %v194 = vadd.f32 %v61, %v193
    %v195 = vpop.f32.mrf.mxu0
    %v196 = vpop.f32.mrf.mxu0
    %v197 = vadd.f32 %v61, %v196
    %v198 = vpop.f32.mrf.mxu0
    %199 = vmatprep.mubr.bf16.mxu0 0
    %200 = vmatmul.mubr.bf16.gmra.mxu0 %v135
    %v201 = vpop.f32.mrf.mxu0
    %v202 = vadd.f32 %v61, %v201
    %v203 = vpop.f32.mrf.mxu0
    %v204 = vpop.f32.mrf.mxu0
    %v205 = vadd.f32 %v61, %v204
    %v206 = vpop.f32.mrf.mxu0
    %207 = vmatprep.mubr.bf16.mxu0 0
    %208 = vmatmul.mubr.bf16.gmra.mxu0 %v138
    %v209 = vpop.f32.mrf.mxu0
    %v210 = vadd.f32 %v61, %v209
    %v211 = vpop.f32.mrf.mxu0
    %v212 = vpop.f32.mrf.mxu0
    %v213 = vadd.f32 %v61, %v212
    %v214 = vpop.f32.mrf.mxu0
    %215 = vmatprep.mubr.bf16.mxu0 0
    %216 = vmatmul.mubr.bf16.gmra.mxu0 %v141
    %v217 = vpop.f32.mrf.mxu0
    %v218 = vadd.f32 %v61, %v217
    %v219 = vpop.f32.mrf.mxu0
    %v220 = vpop.f32.mrf.mxu0
    %v221 = vadd.f32 %v61, %v220
    %v222 = vpop.f32.mrf.mxu0
    %223 = vmatprep.mubr.bf16.mxu0 0
    %224 = vmatmul.mubr.bf16.gmra.mxu0 %v144
    %v225 = vpop.f32.mrf.mxu0
    %v226 = vadd.f32 %v61, %v225
    %v227 = vpop.f32.mrf.mxu0
    %v228 = vpop.f32.mrf.mxu0
    %v229 = vadd.f32 %v61, %v228
    %v230 = vpop.f32.mrf.mxu0
    %231 = vmatprep.mubr.bf16.mxu0 0
    %232 = vmatmul.mubr.bf16.gmra.mxu0 %v147
    %v233 = vpop.f32.mrf.mxu0
    %v234 = vadd.f32 %v61, %v233
    %v235 = vpop.f32.mrf.mxu0
    %v236 = vpop.f32.mrf.mxu0
    %v237 = vadd.f32 %v61, %v236
    %v238 = vpop.f32.mrf.mxu0
    %239 = vmatprep.mubr.bf16.mxu0 0
    %240 = vmatmul.mubr.bf16.gmra.mxu0 %v150
    %v241 = vpop.f32.mrf.mxu0
    %v242 = vadd.f32 %v61, %v241
    %v243 = vpop.f32.mrf.mxu0
    %v244 = vpop.f32.mrf.mxu0
    %v245 = vadd.f32 %v61, %v244
    %v246 = vpop.f32.mrf.mxu0
    %247 = vmatprep.mubr.bf16.mxu0 0
    %248 = vmatmul.mubr.bf16.gmra.mxu0 %v153
    %v249 = vpop.f32.mrf.mxu0
    %v250 = vadd.f32 %v61, %v249
    %v251 = vpop.f32.mrf.mxu0
    %v252 = vpop.f32.mrf.mxu0
    %v253 = vadd.f32 %v61, %v252
    %v254 = vpop.f32.mrf.mxu0
    %255 = vdwg.mxu0
    %v256 = vmax.f32 %v194, 0.0
    %v257 = vmax.f32 %v197, 0.0
    %v258 = vmax.f32 %v202, 0.0
    %v259 = vmax.f32 %v205, 0.0
    %v260 = vmax.f32 %v210, 0.0
    %v261 = vmax.f32 %v213, 0.0
    %v262 = vmax.f32 %v218, 0.0
    %v263 = vmax.f32 %v221, 0.0
    %v264 = vmax.f32 %v226, 0.0
    %v265 = vmax.f32 %v229, 0.0
    %v266 = vmax.f32 %v234, 0.0
    %v267 = vmax.f32 %v237, 0.0
    %v268 = vmax.f32 %v242, 0.0
    %v269 = vmax.f32 %v245, 0.0
    %v270 = vmax.f32 %v250, 0.0
    %v271 = vmax.f32 %v253, 0.0
    %v272 = vld [vmem:[%s1] sm:$0xf]
    %v273 = vld [vmem:[%s1 + $0x4] sm:$0xf]
    %v274 = vld [vmem:[%s1 + $0x8] sm:$0xf]
    %v275 = vld [vmem:[%s1 + $0xc] sm:$0xf]
    %v276 = vld [vmem:[%s1 + $0x10] sm:$0xf]
    %v277 = vld [vmem:[%s1 + $0x14] sm:$0xf]
    %v278 = vld [vmem:[%s1 + $0x18] sm:$0xf]
    %v279 = vld [vmem:[%s1 + $0x1c] sm:$0xf]
    %v280 = vld [vmem:[%s1 + $0x20] sm:$0xf]
    %v281 = vld [vmem:[%s1 + $0x24] sm:$0xf]
    %v282 = vld [vmem:[%s1 + $0x28] sm:$0xf]
    %v283 = vld [vmem:[%s1 + $0x2c] sm:$0xf]
    %v284 = vld [vmem:[%s1 + $0x30] sm:$0xf]
    %v285 = vld [vmem:[%s1 + $0x34] sm:$0xf]
    %v286 = vld [vmem:[%s1 + $0x38] sm:$0xf]
    %v287 = vld [vmem:[%s1 + $0x3c] sm:$0xf]
    %v304 = vunpack.c.l.b16 %v272
    %v305 = vunpack.c.l.b16 %v273
    %v306 = vunpack.c.l.b16 %v274
    %v307 = vunpack.c.l.b16 %v275
    %v308 = vunpack.c.l.b16 %v276
    %v309 = vunpack.c.l.b16 %v277
    %v310 = vunpack.c.l.b16 %v278
    %v311 = vunpack.c.l.b16 %v279
    %v312 = vunpack.c.l.b16 %v280
    %v313 = vunpack.c.l.b16 %v281
    %v314 = vunpack.c.l.b16 %v282
    %v315 = vunpack.c.l.b16 %v283
    %v316 = vunpack.c.l.b16 %v284
    %v317 = vunpack.c.l.b16 %v285
    %v318 = vunpack.c.l.b16 %v286
    %v319 = vunpack.c.l.b16 %v287
    %v320 = vpack.c.b16 %v305, %v304
    %v321 = vpack.c.b16 %v307, %v306
    %v322 = vpack.c.b16 %v309, %v308
    %v323 = vpack.c.b16 %v311, %v310
    %v324 = vpack.c.b16 %v313, %v312
    %v325 = vpack.c.b16 %v315, %v314
    %v326 = vpack.c.b16 %v317, %v316
    %v327 = vpack.c.b16 %v319, %v318
    %v329 = vsel %vm130, %v320, 0
    %v332 = vsel %vm130, %v321, 0
    %v335 = vsel %vm130, %v322, 0
    %v338 = vsel %vm130, %v323, 0
    %v341 = vsel %vm130, %v324, 0
    %v344 = vsel %vm130, %v325, 0
    %v347 = vsel %vm130, %v326, 0
    %v350 = vsel %vm130, %v327, 0
    %352 = vmatprep.subr.bf16.mxu0 0
    %353 = vmatpush1.bf16.msra.mxu0 0
    %354 = vmatprep.subr.bf16.mxu0 0
    %355 = vmatpush1.bf16.msra.mxu0 0
    %356 = vmatprep.subr.bf16.mxu0 0
    %357 = vmatpush1.bf16.msra.mxu0 0
    %358 = vmatprep.subr.bf16.mxu0 0
    %359 = vmatpush1.bf16.msra.mxu0 %v157
    %360 = vmatprep.subr.bf16.mxu0 0
    %361 = vmatpush1.bf16.msra.mxu0 %v124
    %362 = vmatprep.subr.bf16.mxu0 0
    %363 = vmatpush1.bf16.msra.mxu0 %v123
    %364 = vmatprep.subr.bf16.mxu0 0
    %365 = vmatpush1.bf16.msra.mxu0 %v122
    %366 = vmatprep.subr.bf16.mxu0 0
    %367 = vmatpush1.bf16.msra.mxu0 %v121
    %368 = vmatprep.subr.bf16.mxu0 0
    %369 = vmatpush2.bf16.msra.mxu0 0
    %370 = vmatprep.subr.bf16.mxu0 0
    %371 = vmatpush2.bf16.msra.mxu0 0
    %372 = vmatprep.subr.bf16.mxu0 0
    %373 = vmatpush2.bf16.msra.mxu0 0
    %374 = vmatprep.subr.bf16.mxu0 0
    %375 = vmatpush2.bf16.msra.mxu0 0
    %376 = vmatprep.subr.bf16.mxu0 0
    %377 = vmatpush2.bf16.msra.mxu0 0
    %378 = vmatprep.subr.bf16.mxu0 0
    %379 = vmatpush2.bf16.msra.mxu0 0
    %380 = vmatprep.subr.bf16.mxu0 0
    %381 = vmatpush2.bf16.msra.mxu0 0
    %382 = vmatprep.subr.bf16.mxu0 0
    %383 = vmatpush2.bf16.msra.mxu0 0
    %384 = vmatprep.mubr.bf16.mxu0 0
    %385 = vmatmul.mubr.bf16.gmra.mxu0 %v329
    %v386 = vpop.f32.mrf.mxu0
    %v387 = vadd.f32 %v61, %v386
    %v388 = vpop.f32.mrf.mxu0
    %v389 = vpop.f32.mrf.mxu0
    %v390 = vadd.f32 %v61, %v389
    %v391 = vpop.f32.mrf.mxu0
    %392 = vmatprep.mubr.bf16.mxu0 0
    %393 = vmatmul.mubr.bf16.gmra.mxu0 %v332
    %v394 = vpop.f32.mrf.mxu0
    %v395 = vadd.f32 %v61, %v394
    %v396 = vpop.f32.mrf.mxu0
    %v397 = vpop.f32.mrf.mxu0
    %v398 = vadd.f32 %v61, %v397
    %v399 = vpop.f32.mrf.mxu0
    %400 = vmatprep.mubr.bf16.mxu0 0
    %401 = vmatmul.mubr.bf16.gmra.mxu0 %v335
    %v402 = vpop.f32.mrf.mxu0
    %v403 = vadd.f32 %v61, %v402
    %v404 = vpop.f32.mrf.mxu0
    %v405 = vpop.f32.mrf.mxu0
    %v406 = vadd.f32 %v61, %v405
    %v407 = vpop.f32.mrf.mxu0
    %408 = vmatprep.mubr.bf16.mxu0 0
    %409 = vmatmul.mubr.bf16.gmra.mxu0 %v338
    %v410 = vpop.f32.mrf.mxu0
    %v411 = vadd.f32 %v61, %v410
    %v412 = vpop.f32.mrf.mxu0
    %v413 = vpop.f32.mrf.mxu0
    %v414 = vadd.f32 %v61, %v413
    %v415 = vpop.f32.mrf.mxu0
    %416 = vmatprep.mubr.bf16.mxu0 0
    %417 = vmatmul.mubr.bf16.gmra.mxu0 %v341
    %v418 = vpop.f32.mrf.mxu0
    %v419 = vadd.f32 %v61, %v418
    %v420 = vpop.f32.mrf.mxu0
    %v421 = vpop.f32.mrf.mxu0
    %v422 = vadd.f32 %v61, %v421
    %v423 = vpop.f32.mrf.mxu0
    %424 = vmatprep.mubr.bf16.mxu0 0
    %425 = vmatmul.mubr.bf16.gmra.mxu0 %v344
    %v426 = vpop.f32.mrf.mxu0
    %v427 = vadd.f32 %v61, %v426
    %v428 = vpop.f32.mrf.mxu0
    %v429 = vpop.f32.mrf.mxu0
    %v430 = vadd.f32 %v61, %v429
    %v431 = vpop.f32.mrf.mxu0
    %432 = vmatprep.mubr.bf16.mxu0 0
    %433 = vmatmul.mubr.bf16.gmra.mxu0 %v347
    %v434 = vpop.f32.mrf.mxu0
    %v435 = vadd.f32 %v61, %v434
    %v436 = vpop.f32.mrf.mxu0
    %v437 = vpop.f32.mrf.mxu0
    %v438 = vadd.f32 %v61, %v437
    %v439 = vpop.f32.mrf.mxu0
    %440 = vmatprep.mubr.bf16.mxu0 0
    %441 = vmatmul.mubr.bf16.gmra.mxu0 %v350
    %v442 = vpop.f32.mrf.mxu0
    %v443 = vadd.f32 %v61, %v442
    %v444 = vpop.f32.mrf.mxu0
    %v445 = vpop.f32.mrf.mxu0
    %v446 = vadd.f32 %v61, %v445
    %v447 = vpop.f32.mrf.mxu0
    %448 = vdwg.mxu0
    %v449 = vmax.f32 %v387, 0.0
    %v450 = vmax.f32 %v390, 0.0
    %v451 = vmax.f32 %v395, 0.0
    %v452 = vmax.f32 %v398, 0.0
    %v453 = vmax.f32 %v403, 0.0
    %v454 = vmax.f32 %v406, 0.0
    %v455 = vmax.f32 %v411, 0.0
    %v456 = vmax.f32 %v414, 0.0
    %v457 = vmax.f32 %v419, 0.0
    %v458 = vmax.f32 %v422, 0.0
    %v459 = vmax.f32 %v427, 0.0
    %v460 = vmax.f32 %v430, 0.0
    %v461 = vmax.f32 %v435, 0.0
    %v462 = vmax.f32 %v438, 0.0
    %v463 = vmax.f32 %v443, 0.0
    %v464 = vmax.f32 %v446, 0.0
    %v465 = vpack.c.bf16 %v257, %v256
    %v466 = vpack.c.bf16 %v259, %v258
    %v467 = vpack.c.bf16 %v261, %v260
    %v468 = vpack.c.bf16 %v263, %v262
    %v469 = vpack.c.bf16 %v265, %v264
    %v470 = vpack.c.bf16 %v267, %v266
    %v471 = vpack.c.bf16 %v269, %v268
    %v472 = vpack.c.bf16 %v271, %v270
    %v481 = vunpack.c.l.b16 %v465
    %v482 = vunpack.c.h.b16 %v465
    %v483 = vunpack.c.l.b16 %v466
    %v484 = vunpack.c.h.b16 %v466
    %v485 = vunpack.c.l.b16 %v467
    %v486 = vunpack.c.h.b16 %v467
    %v487 = vunpack.c.l.b16 %v468
    %v488 = vunpack.c.h.b16 %v468
    %v489 = vunpack.c.l.b16 %v469
    %v490 = vunpack.c.h.b16 %v469
    %v491 = vunpack.c.l.b16 %v470
    %v492 = vunpack.c.h.b16 %v470
    %v493 = vunpack.c.l.b16 %v471
    %v494 = vunpack.c.h.b16 %v471
    %v495 = vunpack.c.l.b16 %v472
    %v496 = vunpack.c.h.b16 %v472
    %v497 = vpack.c.b16 %v481, %v481
    %v498 = vpack.c.b16 %v482, %v482
    %v499 = vpack.c.b16 %v483, %v483
    %v500 = vpack.c.b16 %v484, %v484
    %v501 = vpack.c.b16 %v485, %v485
    %v502 = vpack.c.b16 %v486, %v486
    %v503 = vpack.c.b16 %v487, %v487
    %v504 = vpack.c.b16 %v488, %v488
    %v505 = vpack.c.b16 %v489, %v489
    %v506 = vpack.c.b16 %v490, %v490
    %v507 = vpack.c.b16 %v491, %v491
    %v508 = vpack.c.b16 %v492, %v492
    %v509 = vpack.c.b16 %v493, %v493
    %v510 = vpack.c.b16 %v494, %v494
    %v511 = vpack.c.b16 %v495, %v495
    %v512 = vpack.c.b16 %v496, %v496
    %vm529 = vcmask 125952
    %530 = vst.msk [vmem:[%s5] sm:$0xf] %vm529, %v497
    %531 = vst.msk [vmem:[%s5 + $0x4] sm:$0xf] %vm529, %v498
    %532 = vst.msk [vmem:[%s5 + $0x8] sm:$0xf] %vm529, %v499
    %533 = vst.msk [vmem:[%s5 + $0xc] sm:$0xf] %vm529, %v500
    %534 = vst.msk [vmem:[%s5 + $0x10] sm:$0xf] %vm529, %v501
    %535 = vst.msk [vmem:[%s5 + $0x14] sm:$0xf] %vm529, %v502
    %536 = vst.msk [vmem:[%s5 + $0x18] sm:$0xf] %vm529, %v503
    %537 = vst.msk [vmem:[%s5 + $0x1c] sm:$0xf] %vm529, %v504
    %538 = vst.msk [vmem:[%s5 + $0x20] sm:$0xf] %vm529, %v505
    %539 = vst.msk [vmem:[%s5 + $0x24] sm:$0xf] %vm529, %v506
    %540 = vst.msk [vmem:[%s5 + $0x28] sm:$0xf] %vm529, %v507
    %541 = vst.msk [vmem:[%s5 + $0x2c] sm:$0xf] %vm529, %v508
    %542 = vst.msk [vmem:[%s5 + $0x30] sm:$0xf] %vm529, %v509
    %543 = vst.msk [vmem:[%s5 + $0x34] sm:$0xf] %vm529, %v510
    %544 = vst.msk [vmem:[%s5 + $0x38] sm:$0xf] %vm529, %v511
    %545 = vst.msk [vmem:[%s5 + $0x3c] sm:$0xf] %vm529, %v512
    %v546 = vpack.c.bf16 %v450, %v449
    %v547 = vpack.c.bf16 %v452, %v451
    %v548 = vpack.c.bf16 %v454, %v453
    %v549 = vpack.c.bf16 %v456, %v455
    %v550 = vpack.c.bf16 %v458, %v457
    %v551 = vpack.c.bf16 %v460, %v459
    %v552 = vpack.c.bf16 %v462, %v461
    %v553 = vpack.c.bf16 %v464, %v463
    %v562 = vunpack.c.l.b16 %v546
    %v563 = vunpack.c.h.b16 %v546
    %v564 = vunpack.c.l.b16 %v547
    %v565 = vunpack.c.h.b16 %v547
    %v566 = vunpack.c.l.b16 %v548
    %v567 = vunpack.c.h.b16 %v548
    %v568 = vunpack.c.l.b16 %v549
    %v569 = vunpack.c.h.b16 %v549
    %v570 = vunpack.c.l.b16 %v550
    %v571 = vunpack.c.h.b16 %v550
    %v572 = vunpack.c.l.b16 %v551
    %v573 = vunpack.c.h.b16 %v551
    %v574 = vunpack.c.l.b16 %v552
    %v575 = vunpack.c.h.b16 %v552
    %v576 = vunpack.c.l.b16 %v553
    %v577 = vunpack.c.h.b16 %v553
    %v578 = vpack.c.b16 %v562, %v562
    %v579 = vpack.c.b16 %v563, %v563
    %v580 = vpack.c.b16 %v564, %v564
    %v581 = vpack.c.b16 %v565, %v565
    %v582 = vpack.c.b16 %v566, %v566
    %v583 = vpack.c.b16 %v567, %v567
    %v584 = vpack.c.b16 %v568, %v568
    %v585 = vpack.c.b16 %v569, %v569
    %v586 = vpack.c.b16 %v570, %v570
    %v587 = vpack.c.b16 %v571, %v571
    %v588 = vpack.c.b16 %v572, %v572
    %v589 = vpack.c.b16 %v573, %v573
    %v590 = vpack.c.b16 %v574, %v574
    %v591 = vpack.c.b16 %v575, %v575
    %v592 = vpack.c.b16 %v576, %v576
    %v593 = vpack.c.b16 %v577, %v577
    %610 = vst.msk [vmem:[%s6] sm:$0xf] %vm529, %v578
    %611 = vst.msk [vmem:[%s6 + $0x4] sm:$0xf] %vm529, %v579
    %612 = vst.msk [vmem:[%s6 + $0x8] sm:$0xf] %vm529, %v580
    %613 = vst.msk [vmem:[%s6 + $0xc] sm:$0xf] %vm529, %v581
    %614 = vst.msk [vmem:[%s6 + $0x10] sm:$0xf] %vm529, %v582
    %615 = vst.msk [vmem:[%s6 + $0x14] sm:$0xf] %vm529, %v583
    %616 = vst.msk [vmem:[%s6 + $0x18] sm:$0xf] %vm529, %v584
    %617 = vst.msk [vmem:[%s6 + $0x1c] sm:$0xf] %vm529, %v585
    %618 = vst.msk [vmem:[%s6 + $0x20] sm:$0xf] %vm529, %v586
    %619 = vst.msk [vmem:[%s6 + $0x24] sm:$0xf] %vm529, %v587
    %620 = vst.msk [vmem:[%s6 + $0x28] sm:$0xf] %vm529, %v588
    %621 = vst.msk [vmem:[%s6 + $0x2c] sm:$0xf] %vm529, %v589
    %622 = vst.msk [vmem:[%s6 + $0x30] sm:$0xf] %vm529, %v590
    %623 = vst.msk [vmem:[%s6 + $0x34] sm:$0xf] %vm529, %v591
    %624 = vst.msk [vmem:[%s6 + $0x38] sm:$0xf] %vm529, %v592
    %625 = vst.msk [vmem:[%s6 + $0x3c] sm:$0xf] %vm529, %v593
    %v626 = vmul.f32 %v256, %v256
    %v627 = vmul.f32 %v257, %v257
    %v628 = vmul.f32 %v258, %v258
    %v629 = vmul.f32 %v259, %v259
    %v630 = vmul.f32 %v260, %v260
    %v631 = vmul.f32 %v261, %v261
    %v632 = vmul.f32 %v262, %v262
    %v633 = vmul.f32 %v263, %v263
    %v634 = vmul.f32 %v264, %v264
    %v635 = vmul.f32 %v265, %v265
    %v636 = vmul.f32 %v266, %v266
    %v637 = vmul.f32 %v267, %v267
    %v638 = vmul.f32 %v268, %v268
    %v639 = vmul.f32 %v269, %v269
    %v640 = vmul.f32 %v270, %v270
    %v641 = vmul.f32 %v271, %v271
    %vm642 = vcmask 130048
    %v643 = vsel %vm642, %v626, 0.0
    %644 = vadd.xlane.f32.xlu0 %v643
    %v645 = vpop.xlane.xlu0 %644
    %v646 = vsel %vm642, %v627, 0.0
    %647 = vadd.xlane.f32.xlu0 %v646
    %v648 = vpop.xlane.xlu0 %647
    %v649 = vsel %vm642, %v628, 0.0
    %650 = vadd.xlane.f32.xlu0 %v649
    %v651 = vpop.xlane.xlu0 %650
    %v652 = vsel %vm642, %v629, 0.0
    %653 = vadd.xlane.f32.xlu0 %v652
    %v654 = vpop.xlane.xlu0 %653
    %v655 = vsel %vm642, %v630, 0.0
    %656 = vadd.xlane.f32.xlu0 %v655
    %v657 = vpop.xlane.xlu0 %656
    %v658 = vsel %vm642, %v631, 0.0
    %659 = vadd.xlane.f32.xlu0 %v658
    %v660 = vpop.xlane.xlu0 %659
    %v661 = vsel %vm642, %v632, 0.0
    %662 = vadd.xlane.f32.xlu0 %v661
    %v663 = vpop.xlane.xlu0 %662
    %v664 = vsel %vm642, %v633, 0.0
    %665 = vadd.xlane.f32.xlu0 %v664
    %v666 = vpop.xlane.xlu0 %665
    %v667 = vsel %vm642, %v634, 0.0
    %668 = vadd.xlane.f32.xlu0 %v667
    %v669 = vpop.xlane.xlu0 %668
    %v670 = vsel %vm642, %v635, 0.0
    %671 = vadd.xlane.f32.xlu0 %v670
    %v672 = vpop.xlane.xlu0 %671
    %v673 = vsel %vm642, %v636, 0.0
    %674 = vadd.xlane.f32.xlu0 %v673
    %v675 = vpop.xlane.xlu0 %674
    %v676 = vsel %vm642, %v637, 0.0
    %677 = vadd.xlane.f32.xlu0 %v676
    %v678 = vpop.xlane.xlu0 %677
    %v679 = vsel %vm642, %v638, 0.0
    %680 = vadd.xlane.f32.xlu0 %v679
    %v681 = vpop.xlane.xlu0 %680
    %v682 = vsel %vm642, %v639, 0.0
    %683 = vadd.xlane.f32.xlu0 %v682
    %v684 = vpop.xlane.xlu0 %683
    %v685 = vsel %vm642, %v640, 0.0
    %686 = vadd.xlane.f32.xlu0 %v685
    %v687 = vpop.xlane.xlu0 %686
    %v688 = vsel %vm642, %v641, 0.0
    %689 = vadd.xlane.f32.xlu0 %v688
    %v690 = vpop.xlane.xlu0 %689
    %v691 = vadd.f32 %v645, 1e-12
    %v692 = vadd.f32 %v648, 1e-12
    %v693 = vadd.f32 %v651, 1e-12
    %v694 = vadd.f32 %v654, 1e-12
    %v695 = vadd.f32 %v657, 1e-12
    %v696 = vadd.f32 %v660, 1e-12
    %v697 = vadd.f32 %v663, 1e-12
    %v698 = vadd.f32 %v666, 1e-12
    %v699 = vadd.f32 %v669, 1e-12
    %v700 = vadd.f32 %v672, 1e-12
    %v701 = vadd.f32 %v675, 1e-12
    %v702 = vadd.f32 %v678, 1e-12
    %v703 = vadd.f32 %v681, 1e-12
    %v704 = vadd.f32 %v684, 1e-12
    %v705 = vadd.f32 %v687, 1e-12
    %v706 = vadd.f32 %v690, 1e-12
    %v707 = vrsqrt.pop %v691
    %v708 = vrsqrt.pop %v692
    %v709 = vrsqrt.pop %v693
    %v710 = vrsqrt.pop %v694
    %v711 = vrsqrt.pop %v695
    %v712 = vrsqrt.pop %v696
    %v713 = vrsqrt.pop %v697
    %v714 = vrsqrt.pop %v698
    %v715 = vrsqrt.pop %v699
    %v716 = vrsqrt.pop %v700
    %v717 = vrsqrt.pop %v701
    %v718 = vrsqrt.pop %v702
    %v719 = vrsqrt.pop %v703
    %v720 = vrsqrt.pop %v704
    %v721 = vrsqrt.pop %v705
    %v722 = vrsqrt.pop %v706
    %v723 = vmul.f32 %v256, %v707
    %v724 = vmul.f32 %v257, %v708
    %v725 = vmul.f32 %v258, %v709
    %v726 = vmul.f32 %v259, %v710
    %v727 = vmul.f32 %v260, %v711
    %v728 = vmul.f32 %v261, %v712
    %v729 = vmul.f32 %v262, %v713
    %v730 = vmul.f32 %v263, %v714
    %v731 = vmul.f32 %v264, %v715
    %v732 = vmul.f32 %v265, %v716
    %v733 = vmul.f32 %v266, %v717
    %v734 = vmul.f32 %v267, %v718
    %v735 = vmul.f32 %v268, %v719
    %v736 = vmul.f32 %v269, %v720
    %v737 = vmul.f32 %v270, %v721
    %v738 = vmul.f32 %v271, %v722
    %v739 = vmul.f32 %v449, %v449
    %v740 = vmul.f32 %v450, %v450
    %v741 = vmul.f32 %v451, %v451
    %v742 = vmul.f32 %v452, %v452
    %v743 = vmul.f32 %v453, %v453
    %v744 = vmul.f32 %v454, %v454
    %v745 = vmul.f32 %v455, %v455
    %v746 = vmul.f32 %v456, %v456
    %v747 = vmul.f32 %v457, %v457
    %v748 = vmul.f32 %v458, %v458
    %v749 = vmul.f32 %v459, %v459
    %v750 = vmul.f32 %v460, %v460
    %v751 = vmul.f32 %v461, %v461
    %v752 = vmul.f32 %v462, %v462
    %v753 = vmul.f32 %v463, %v463
    %v754 = vmul.f32 %v464, %v464
    %v755 = vsel %vm642, %v739, 0.0
    %756 = vadd.xlane.f32.xlu0 %v755
    %v757 = vpop.xlane.xlu0 %756
    %v758 = vsel %vm642, %v740, 0.0
    %759 = vadd.xlane.f32.xlu0 %v758
    %v760 = vpop.xlane.xlu0 %759
    %v761 = vsel %vm642, %v741, 0.0
    %762 = vadd.xlane.f32.xlu0 %v761
    %v763 = vpop.xlane.xlu0 %762
    %v764 = vsel %vm642, %v742, 0.0
    %765 = vadd.xlane.f32.xlu0 %v764
    %v766 = vpop.xlane.xlu0 %765
    %v767 = vsel %vm642, %v743, 0.0
    %768 = vadd.xlane.f32.xlu0 %v767
    %v769 = vpop.xlane.xlu0 %768
    %v770 = vsel %vm642, %v744, 0.0
    %771 = vadd.xlane.f32.xlu0 %v770
    %v772 = vpop.xlane.xlu0 %771
    %v773 = vsel %vm642, %v745, 0.0
    %774 = vadd.xlane.f32.xlu0 %v773
    %v775 = vpop.xlane.xlu0 %774
    %v776 = vsel %vm642, %v746, 0.0
    %777 = vadd.xlane.f32.xlu0 %v776
    %v778 = vpop.xlane.xlu0 %777
    %v779 = vsel %vm642, %v747, 0.0
    %780 = vadd.xlane.f32.xlu0 %v779
    %v781 = vpop.xlane.xlu0 %780
    %v782 = vsel %vm642, %v748, 0.0
    %783 = vadd.xlane.f32.xlu0 %v782
    %v784 = vpop.xlane.xlu0 %783
    %v785 = vsel %vm642, %v749, 0.0
    %786 = vadd.xlane.f32.xlu0 %v785
    %v787 = vpop.xlane.xlu0 %786
    %v788 = vsel %vm642, %v750, 0.0
    %789 = vadd.xlane.f32.xlu0 %v788
    %v790 = vpop.xlane.xlu0 %789
    %v791 = vsel %vm642, %v751, 0.0
    %792 = vadd.xlane.f32.xlu0 %v791
    %v793 = vpop.xlane.xlu0 %792
    %v794 = vsel %vm642, %v752, 0.0
    %795 = vadd.xlane.f32.xlu0 %v794
    %v796 = vpop.xlane.xlu0 %795
    %v797 = vsel %vm642, %v753, 0.0
    %798 = vadd.xlane.f32.xlu0 %v797
    %v799 = vpop.xlane.xlu0 %798
    %v800 = vsel %vm642, %v754, 0.0
    %801 = vadd.xlane.f32.xlu0 %v800
    %v802 = vpop.xlane.xlu0 %801
    %v803 = vadd.f32 %v757, 1e-12
    %v804 = vadd.f32 %v760, 1e-12
    %v805 = vadd.f32 %v763, 1e-12
    %v806 = vadd.f32 %v766, 1e-12
    %v807 = vadd.f32 %v769, 1e-12
    %v808 = vadd.f32 %v772, 1e-12
    %v809 = vadd.f32 %v775, 1e-12
    %v810 = vadd.f32 %v778, 1e-12
    %v811 = vadd.f32 %v781, 1e-12
    %v812 = vadd.f32 %v784, 1e-12
    %v813 = vadd.f32 %v787, 1e-12
    %v814 = vadd.f32 %v790, 1e-12
    %v815 = vadd.f32 %v793, 1e-12
    %v816 = vadd.f32 %v796, 1e-12
    %v817 = vadd.f32 %v799, 1e-12
    %v818 = vadd.f32 %v802, 1e-12
    %v819 = vrsqrt.pop %v803
    %v820 = vrsqrt.pop %v804
    %v821 = vrsqrt.pop %v805
    %v822 = vrsqrt.pop %v806
    %v823 = vrsqrt.pop %v807
    %v824 = vrsqrt.pop %v808
    %v825 = vrsqrt.pop %v809
    %v826 = vrsqrt.pop %v810
    %v827 = vrsqrt.pop %v811
    %v828 = vrsqrt.pop %v812
    %v829 = vrsqrt.pop %v813
    %v830 = vrsqrt.pop %v814
    %v831 = vrsqrt.pop %v815
    %v832 = vrsqrt.pop %v816
    %v833 = vrsqrt.pop %v817
    %v834 = vrsqrt.pop %v818
    %v835 = vmul.f32 %v449, %v819
    %v836 = vmul.f32 %v450, %v820
    %v837 = vmul.f32 %v451, %v821
    %v838 = vmul.f32 %v452, %v822
    %v839 = vmul.f32 %v453, %v823
    %v840 = vmul.f32 %v454, %v824
    %v841 = vmul.f32 %v455, %v825
    %v842 = vmul.f32 %v456, %v826
    %v843 = vmul.f32 %v457, %v827
    %v844 = vmul.f32 %v458, %v828
    %v845 = vmul.f32 %v459, %v829
    %v846 = vmul.f32 %v460, %v830
    %v847 = vmul.f32 %v461, %v831
    %v848 = vmul.f32 %v462, %v832
    %v849 = vmul.f32 %v463, %v833
    %v850 = vmul.f32 %v464, %v834
    %v851 = vsub.f32 %v723, %v835
    %v852 = vsub.f32 %v724, %v836
    %v853 = vsub.f32 %v725, %v837
    %v854 = vsub.f32 %v726, %v838
    %v855 = vsub.f32 %v727, %v839
    %v856 = vsub.f32 %v728, %v840
    %v857 = vsub.f32 %v729, %v841
    %v858 = vsub.f32 %v730, %v842
    %v859 = vsub.f32 %v731, %v843
    %v860 = vsub.f32 %v732, %v844
    %v861 = vsub.f32 %v733, %v845
    %v862 = vsub.f32 %v734, %v846
    %v863 = vsub.f32 %v735, %v847
    %v864 = vsub.f32 %v736, %v848
    %v865 = vsub.f32 %v737, %v849
    %v866 = vsub.f32 %v738, %v850
    %v867 = vmul.f32 %v851, %v851
    %v868 = vmul.f32 %v852, %v852
    %v869 = vmul.f32 %v853, %v853
    %v870 = vmul.f32 %v854, %v854
    %v871 = vmul.f32 %v855, %v855
    %v872 = vmul.f32 %v856, %v856
    %v873 = vmul.f32 %v857, %v857
    %v874 = vmul.f32 %v858, %v858
    %v875 = vmul.f32 %v859, %v859
    %v876 = vmul.f32 %v860, %v860
    %v877 = vmul.f32 %v861, %v861
    %v878 = vmul.f32 %v862, %v862
    %v879 = vmul.f32 %v863, %v863
    %v880 = vmul.f32 %v864, %v864
    %v881 = vmul.f32 %v865, %v865
    %v882 = vmul.f32 %v866, %v866
    %v883 = vld [vmem:[%s4] sm:$0x1]
    %v885 = vlaneseq
    %v886 = vshrl.u32 %v885, 7
    %v887 = vsub.s32 0, %v886
    %v888 = vrot.slane %v883, %v887
    %v890 = vmul.f32 %v867, %v888
    %v891 = vmul.f32 %v868, %v888
    %v892 = vmul.f32 %v869, %v888
    %v893 = vmul.f32 %v870, %v888
    %v894 = vmul.f32 %v871, %v888
    %v895 = vmul.f32 %v872, %v888
    %v896 = vmul.f32 %v873, %v888
    %v897 = vmul.f32 %v874, %v888
    %v898 = vmul.f32 %v875, %v888
    %v899 = vmul.f32 %v876, %v888
    %v900 = vmul.f32 %v877, %v888
    %v901 = vmul.f32 %v878, %v888
    %v902 = vmul.f32 %v879, %v888
    %v903 = vmul.f32 %v880, %v888
    %v904 = vmul.f32 %v881, %v888
    %v905 = vmul.f32 %v882, %v888
    %v906 = vld [vmem:[#allocation2] sm:$0xff]
    %v907 = vsel %vm642, %v890, 0.0
    %v908 = vsel %vm642, %v891, 0.0
    %v909 = vadd.f32 %v907, %v908
    %v910 = vsel %vm642, %v892, 0.0
    %v911 = vadd.f32 %v909, %v910
    %v912 = vsel %vm642, %v893, 0.0
    %v913 = vadd.f32 %v911, %v912
    %v914 = vsel %vm642, %v894, 0.0
    %v915 = vadd.f32 %v913, %v914
    %v916 = vsel %vm642, %v895, 0.0
    %v917 = vadd.f32 %v915, %v916
    %v918 = vsel %vm642, %v896, 0.0
    %v919 = vadd.f32 %v917, %v918
    %v920 = vsel %vm642, %v897, 0.0
    %v921 = vadd.f32 %v919, %v920
    %v922 = vsel %vm642, %v898, 0.0
    %v923 = vadd.f32 %v921, %v922
    %v924 = vsel %vm642, %v899, 0.0
    %v925 = vadd.f32 %v923, %v924
    %v926 = vsel %vm642, %v900, 0.0
    %v927 = vadd.f32 %v925, %v926
    %v928 = vsel %vm642, %v901, 0.0
    %v929 = vadd.f32 %v927, %v928
    %v930 = vsel %vm642, %v902, 0.0
    %v931 = vadd.f32 %v929, %v930
    %v932 = vsel %vm642, %v903, 0.0
    %v933 = vadd.f32 %v931, %v932
    %v934 = vsel %vm642, %v904, 0.0
    %v935 = vadd.f32 %v933, %v934
    %v936 = vsel %vm642, %v905, 0.0
    %v937 = vadd.f32 %v935, %v936
    %v938 = vadd.f32 %v906, %v937
    %939 = vst.msk [vmem:[#allocation2] sm:$0xff] %vm642, %v938
    // Predicated region
    $region26: #{my_loss.8} parent=1 // pred_check
      %p940 = pneg %p25
    $region27: #{my_loss.8} parent=1 // pred_check_branch
      %942 = sbr.rel (%p940) target = $region29
    $region28: #{my_loss.8} parent=1 // pred_region
      %v943 = vld [vmem:[#allocation2] sm:$0xff]
      %v944 = vsel %vm642, %v943, 0.0
      %945 = vadd.xlane.f32.xlu0 %v944
      %v946 = vpop.xlane.xlu0 %945
      %v947 = vrot.slane %v946, 4
      %v948 = vadd.f32 %v946, %v947
      %v949 = vrot.slane %v948, 2
      %v950 = vadd.f32 %v948, %v949
      %v951 = vrot.slane %v950, 1
      %v952 = vadd.f32 %v950, %v951
      %s953 = vtos %v952
      %s954 = scalar_lea.smem [#allocation3], 0
      %955 = sst [smem:[%s954]] %s953
    $region29: #{my_loss.8} parent=1 // pred_fallthru
      _
    // Predicated region
    $region30: #{my_loss.8} parent=1 // pred_check
      _
    $region31: #{my_loss.8} parent=1 // pred_check_branch
      %957 = sbr.rel (0) target = $region33
    $region32: #{my_loss.8} parent=1 // pred_region
      _
    $region33: #{my_loss.8} parent=1 // pred_fallthru
      _
    // Predicated region
    $region34: #{my_loss.8} parent=1 // pred_check
      _
    $region35: #{my_loss.8} parent=1 // pred_check_branch
      %959 = sbr.rel (0) target = $region37
    $region36: #{my_loss.8} parent=1 // pred_region
      _
    $region37: #{my_loss.8} parent=1 // pred_fallthru
      _
    // Predicated region
    $region38: #{my_loss.8} parent=1 // pred_check
      _
    $region39: #{my_loss.8} parent=1 // pred_check_branch
      %961 = sbr.rel (0) target = $region41
    $region40: #{my_loss.8} parent=1 // pred_region
      %s963 = ssub.s32 16, 16
      %964 = vsyncadd [#allocation4], %s963
      %967 = dma.smem_to_hbm [#allocation3], 16, %s7, [#allocation4]
    $region41: #{my_loss.8} parent=1 // pred_fallthru
      _
    // Predicated region
    $region42: #{my_loss.8} parent=1 // pred_check
      _
    $region43: #{my_loss.8} parent=1 // pred_check_branch
      %969 = sbr.rel (0) target = $region45
    $region44: #{my_loss.8} parent=1 // pred_region
      _
    $region45: #{my_loss.8} parent=1 // pred_fallthru
      _
    // Predicated region
    $region46: #{my_loss.8} parent=1 // pred_check
      _
    $region47: #{my_loss.8} parent=1 // pred_check_branch
      %971 = sbr.rel (0) target = $region49
    $region48: #{my_loss.8} parent=1 // pred_region
      _
    $region49: #{my_loss.8} parent=1 // pred_fallthru
      _
    // Predicated region
    $region50: #{my_loss.8} parent=1 // pred_check
      _
    $region51: #{my_loss.8} parent=1 // pred_check_branch
      %973 = sbr.rel (0) target = $region53
    $region52: #{my_loss.8} parent=1 // pred_region
      %974 = dma.done [#allocation4], 16
    $region53: #{my_loss.8} parent=1 // pred_fallthru
      _
    %975 = sfence
    %976 = vsyncpa [#allocation4], 1

// kernel: my_loss.5
$region0: #{my_loss.5}
  #allocation0 [shape = 'u32[]', space=smem, size = 0x4, offset = 0x4, fixed_abs, tag = 'smem constant byte address 0x4 - core index']
  #allocation1 [shape = 'u32[144,128]{1,0:T(1,128)}', space=vmem, size = 0x12000, scoped, tag = 'internal scratch']
  %s0 = inlined_call_operand.vmem [shape: f32[12,128], index: 0, kind: input, shape index: {}]
  %s1 = inlined_call_operand.vmem [shape: f32[12,128], index: 1, kind: input, shape index: {}]
  %s2 = inlined_call_operand.vmem [shape: f32[1,8,128], index: 2, kind: output, shape index: {}]
  %s3 = sld [smem:[#allocation0]]
  $region18: #{my_loss.5} parent=0
    _
  %s5 = ssub.s32 1, %s3
  %s6 = scalar_select 0, %s5, %s3
  // Predicated region
  $region2: #{my_loss.5} parent=0 // pred_check
    _
  $region3: #{my_loss.5} parent=0 // pred_check_branch
    %8 = sbr.rel (0) target = $region5
  $region4: #{my_loss.5} parent=0 // pred_region
    _
  $region5: #{my_loss.5} parent=0 // pred_fallthru
    _
  // Predicated region
  $region6: #{my_loss.5} parent=0 // pred_check
    _
  $region7: #{my_loss.5} parent=0 // pred_check_branch
    %10 = sbr.rel (0) target = $region9
  $region8: #{my_loss.5} parent=0 // pred_region
    _
  $region9: #{my_loss.5} parent=0 // pred_fallthru
    _
  %v11 = vld [vmem:[%s0] sm:$0xff]
  %v12 = vld [vmem:[%s0 + $0x8] sm:$0xff]
  %v13 = vld [vmem:[%s1] sm:$0xff]
  %v14 = vld [vmem:[%s1 + $0x8] sm:$0xff]
  %v15 = vsub.f32 %v11, %v13
  %v16 = vsub.f32 %v12, %v14
  %v17 = vand.u32 2147483647, %v15
  %v18 = vand.u32 2147483647, %v16
  %s19 = smul.u32 0, 16
  %v20 = vlaneseq
  %v21 = vshrl.u32 %v20, 7
  %v22 = vadd.s32 %v21, 8
  %v23 = vstv %s19
  %v24 = vadd.s32 %v23, %v21
  %v25 = vadd.s32 %v23, %v22
  %vm26 = vcmp.lt.s32.totalorder %v24, 12
  %vm27 = vcmp.lt.s32.totalorder %v25, 12
  %v28 = vsel %vm26, 1, 0
  %v29 = vsel %vm27, 1, 0
  %vm30 = vcmp.eq.s32.totalorder %v28, 1
  %vm31 = vcmp.eq.s32.totalorder %v29, 1
  %v32 = vsel %vm30, %v17, 0.0
  %v33 = vsel %vm31, %v18, 0.0
  %v34 = vadd.f32 %v32, %v33
  %35 = vst [vmem:[%s2] sm:$0xff] %v34
  // Predicated region
  $region10: #{my_loss.5} parent=0 // pred_check
    _
  $region11: #{my_loss.5} parent=0 // pred_check_branch
    %37 = sbr.rel (0) target = $region13
  $region12: #{my_loss.5} parent=0 // pred_region
    _
  $region13: #{my_loss.5} parent=0 // pred_fallthru
    _
  // Predicated region
  $region14: #{my_loss.5} parent=0 // pred_check
    _
  $region15: #{my_loss.5} parent=0 // pred_check_branch
    %39 = sbr.rel (0) target = $region17
  $region16: #{my_loss.5} parent=0 // pred_region
    _
  $region17: #{my_loss.5} parent=0 // pred_fallthru
    _

// kernel: my_loss.6
$region0: #{my_loss.6}
  #allocation0 [shape = 'u32[]', space=smem, size = 0x4, offset = 0x4, fixed_abs, tag = 'smem constant byte address 0x4 - core index']
  #allocation1 [shape = 'u32[144,128]{1,0:T(1,128)}', space=vmem, size = 0x12000, scoped, tag = 'internal scratch']
  %s0 = inlined_call_operand.vmem [shape: f32[1,16], index: 0, kind: input, shape index: {}]
  %s1 = inlined_call_operand.vmem [shape: f32[1,16], index: 1, kind: input, shape index: {}]
  %s2 = inlined_call_operand.vmem [shape: f32[1,64], index: 2, kind: input, shape index: {}]
  %s3 = inlined_call_operand.vmem [shape: f32[1,64], index: 3, kind: input, shape index: {}]
  %s4 = inlined_call_operand.hbm [shape: f32[1,1], index: 4, kind: output, shape index: {0}]
  %s5 = inlined_call_operand.hbm [shape: f32[1,1], index: 5, kind: output, shape index: {1}]
  %6 = xla_tuple %s4, %s5
  %s7 = sld [smem:[#allocation0]]
  $region34: #{my_loss.6} parent=0
    _
  %s9 = ssub.s32 1, %s7
  %s10 = scalar_select 0, %s9, %s7
  $region1: #{my_loss.6} parent=0
    #allocation2 [shape = 'u8[512]{0}', space=smem, size = 0x200, scoped, tag = 'output window, operand 0, single buffered']
    #allocation3 [shape = 's32[1]{0}', space=sflag, size = 0x4, scoped, tag = 'scoped memory for my_loss.6']
    #allocation4 [shape = 'u8[512]{0}', space=smem, size = 0x200, scoped, tag = 'output window, operand 1, single buffered']
    #allocation5 [shape = 's32[1]{0}', space=sflag, size = 0x4, scoped, tag = 'scoped memory for my_loss.6']
    %11 = vsyncpa [#allocation3], 0
    %12 = vsyncpa [#allocation5], 0
    // Predicated region
    $region2: #{my_loss.6} parent=1 // pred_check
      _
    $region3: #{my_loss.6} parent=1 // pred_check_branch
      %14 = sbr.rel (0) target = $region5
    $region4: #{my_loss.6} parent=1 // pred_region
      _
    $region5: #{my_loss.6} parent=1 // pred_fallthru
      _
    // Predicated region
    $region6: #{my_loss.6} parent=1 // pred_check
      _
    $region7: #{my_loss.6} parent=1 // pred_check_branch
      %16 = sbr.rel (0) target = $region9
    $region8: #{my_loss.6} parent=1 // pred_region
      _
    $region9: #{my_loss.6} parent=1 // pred_fallthru
      _
    // Predicated region
    $region10: #{my_loss.6} parent=1 // pred_check
      _
    $region11: #{my_loss.6} parent=1 // pred_check_branch
      %18 = sbr.rel (0) target = $region13
    $region12: #{my_loss.6} parent=1 // pred_region
      _
    $region13: #{my_loss.6} parent=1 // pred_fallthru
      _
    // Predicated region
    $region14: #{my_loss.6} parent=1 // pred_check
      _
    $region15: #{my_loss.6} parent=1 // pred_check_branch
      %20 = sbr.rel (0) target = $region17
    $region16: #{my_loss.6} parent=1 // pred_region
      _
    $region17: #{my_loss.6} parent=1 // pred_fallthru
      _
    %v21 = vld [vmem:[%s0] sm:$0x1]
    %v22 = vld [vmem:[%s1] sm:$0x1]
    %v23 = vsub.f32 %v21, %v22
    %v24 = vand.u32 2147483647, %v23
    %vm25 = vcmask 122880
    %v26 = vsel %vm25, %v24, 0.0
    %27 = vadd.xlane.f32.xlu0 %v26
    %v28 = vpop.xlane.xlu0 %27
    %v29 = vrot.slane %v28, 4
    %v30 = vadd.f32 %v28, %v29
    %v31 = vrot.slane %v30, 2
    %v32 = vadd.f32 %v30, %v31
    %v33 = vrot.slane %v32, 1
    %v34 = vadd.f32 %v32, %v33
    %s35 = vtos %v34
    %s36 = scalar_lea.smem [#allocation2], 0
    %37 = sst [smem:[%s36]] %s35
    %v38 = vld [vmem:[%s3] sm:$0x1]
    %v39 = vld [vmem:[%s2] sm:$0x1]
    %v40 = vadd.f32 %v38, 1.0
    %v41 = vmul.f32 %v39, %v39
    %v42 = vsub.f32 %v40, %v41
    %v43 = vmul.f32 %v38, 1.442695
    %v44 = vpow.pop %v43
    %v45 = vsub.f32 %v42, %v44
    %vm46 = vcmask 516096
    %v47 = vsel %vm46, %v45, 0.0
    %48 = vadd.xlane.f32.xlu0 %v47
    %v49 = vpop.xlane.xlu0 %48
    %v50 = vrot.slane %v49, 4
    %v51 = vadd.f32 %v49, %v50
    %v52 = vrot.slane %v51, 2
    %v53 = vadd.f32 %v51, %v52
    %v54 = vrot.slane %v53, 1
    %v55 = vadd.f32 %v53, %v54
    %s56 = vtos %v55
    %s57 = scalar_lea.smem [#allocation4], 0
    %58 = sst [smem:[%s57]] %s56
    // Predicated region
    $region18: #{my_loss.6} parent=1 // pred_check
      _
    $region19: #{my_loss.6} parent=1 // pred_check_branch
      %60 = sbr.rel (0) target = $region21
    $region20: #{my_loss.6} parent=1 // pred_region
      %s62 = ssub.s32 16, 16
      %63 = vsyncadd [#allocation3], %s62
      %66 = dma.smem_to_hbm [#allocation2], 16, %s4, [#allocation3]
    $region21: #{my_loss.6} parent=1 // pred_fallthru
      _
    // Predicated region
    $region22: #{my_loss.6} parent=1 // pred_check
      _
    $region23: #{my_loss.6} parent=1 // pred_check_branch
      %68 = sbr.rel (0) target = $region25
    $region24: #{my_loss.6} parent=1 // pred_region
      %s70 = ssub.s32 16, 16
      %71 = vsyncadd [#allocation5], %s70
      %74 = dma.smem_to_hbm [#allocation4], 16, %s5, [#allocation5]
    $region25: #{my_loss.6} parent=1 // pred_fallthru
      _
    // Predicated region
    $region26: #{my_loss.6} parent=1 // pred_check
      _
    $region27: #{my_loss.6} parent=1 // pred_check_branch
      %76 = sbr.rel (0) target = $region29
    $region28: #{my_loss.6} parent=1 // pred_region
      %77 = dma.done [#allocation3], 16
    $region29: #{my_loss.6} parent=1 // pred_fallthru
      _
    // Predicated region
    $region30: #{my_loss.6} parent=1 // pred_check
      _
    $region31: #{my_loss.6} parent=1 // pred_check_branch
      %79 = sbr.rel (0) target = $region33
    $region32: #{my_loss.6} parent=1 // pred_region
      %80 = dma.done [#allocation5], 16
    $region33: #{my_loss.6} parent=1 // pred_fallthru
      _
    %81 = sfence
    %82 = vsyncpa [#allocation3], 1
    %83 = vsyncpa [#allocation5], 1

// kernel: my_loss.9
$region0: #{my_loss.9}
  #allocation0 [shape = 'u32[]', space=smem, size = 0x4, offset = 0x4, fixed_abs, tag = 'smem constant byte address 0x4 - core index']
  #allocation1 [shape = 'u32[144,128]{1,0:T(1,128)}', space=vmem, size = 0x12000, scoped, tag = 'internal scratch']
  #allocation2 [shape = 'f32[8,32]{1,0:T(8,128)}', space=vmem, size = 0x1000, scoped, tag = 'scratch operand']
  %s0 = inlined_call_operand.vmem [shape: bf16[32,144], index: 0, kind: input, shape index: {}]
  %s1 = inlined_call_operand.vmem [shape: bf16[32,144], index: 1, kind: input, shape index: {}]
  %s2 = inlined_call_operand.vmem [shape: bf16[144,32], index: 2, kind: input, shape index: {}]
  %s3 = inlined_call_operand.vmem [shape: f32[1,32], index: 3, kind: input, shape index: {}]
  %s4 = inlined_call_operand.vmem [shape: f32[1,32], index: 4, kind: input, shape index: {}]
  %s5 = inlined_call_operand.hbm [shape: bf16[32,32], index: 5, kind: output, shape index: {0}]
  %s6 = inlined_call_operand.hbm [shape: bf16[32,32], index: 6, kind: output, shape index: {1}]
  %s7 = inlined_call_operand.hbm [shape: f32[1,1], index: 7, kind: output, shape index: {2}]
  %8 = xla_tuple %s5, %s6, %s7
  %s9 = sld [smem:[#allocation0]]
  $region54: #{my_loss.9} parent=0
    _
  %s11 = ssub.s32 1, %s9
  %s12 = scalar_select 0, %s11, %s9
  $region1: #{my_loss.9} parent=0
    #allocation3 [shape = 'u8[8192]{0}', space=vmem, size = 0x2000, scoped, tag = 'output window, operand 0, single buffered']
    #allocation4 [shape = 's32[1]{0}', space=sflag, size = 0x4, scoped, tag = 'scoped memory for my_loss.9']
    #allocation5 [shape = 's32[1]{0}', space=sflag, size = 0x4, scoped, tag = 'scoped memory for my_loss.9']
    #allocation6 [shape = 'u8[8192]{0}', space=vmem, size = 0x2000, scoped, tag = 'output window, operand 1, single buffered']
    #allocation7 [shape = 's32[1]{0}', space=sflag, size = 0x4, scoped, tag = 'scoped memory for my_loss.9']
    #allocation8 [shape = 'u8[512]{0}', space=smem, size = 0x200, scoped, tag = 'output window, operand 2, single buffered']
    %13 = vsyncpa [#allocation4], 0
    %14 = vsyncpa [#allocation7], 0
    %15 = vsyncpa [#allocation5], 0
    // Predicated region
    $region2: #{my_loss.9} parent=1 // pred_check
      _
    $region3: #{my_loss.9} parent=1 // pred_check_branch
      %17 = sbr.rel (0) target = $region5
    $region4: #{my_loss.9} parent=1 // pred_region
      _
    $region5: #{my_loss.9} parent=1 // pred_fallthru
      _
    // Predicated region
    $region6: #{my_loss.9} parent=1 // pred_check
      _
    $region7: #{my_loss.9} parent=1 // pred_check_branch
      %19 = sbr.rel (0) target = $region9
    $region8: #{my_loss.9} parent=1 // pred_region
      _
    $region9: #{my_loss.9} parent=1 // pred_fallthru
      _
    // Predicated region
    $region10: #{my_loss.9} parent=1 // pred_check
      _
    $region11: #{my_loss.9} parent=1 // pred_check_branch
      %21 = sbr.rel (0) target = $region13
    $region12: #{my_loss.9} parent=1 // pred_region
      _
    $region13: #{my_loss.9} parent=1 // pred_fallthru
      _
    // Predicated region
    $region14: #{my_loss.9} parent=1 // pred_check
      _
    $region15: #{my_loss.9} parent=1 // pred_check_branch
      %23 = sbr.rel (0) target = $region17
    $region16: #{my_loss.9} parent=1 // pred_region
      _
    $region17: #{my_loss.9} parent=1 // pred_fallthru
      _
    // Predicated region
    $region18: #{my_loss.9} parent=1 // pred_check
      _
    $region19: #{my_loss.9} parent=1 // pred_check_branch
      %25 = sbr.rel (0) target = $region21
    $region20: #{my_loss.9} parent=1 // pred_region
      _
    $region21: #{my_loss.9} parent=1 // pred_fallthru
      _
    %p27 = scmp.eq.s32.totalorder 0, 0
    // Predicated region
    $region22: #{my_loss.9} parent=1 // pred_check
      %p28 = pneg %p27
    $region23: #{my_loss.9} parent=1 // pred_check_branch
      %30 = sbr.rel (%p28) target = $region25
    $region24: #{my_loss.9} parent=1 // pred_region
      %vm31 = vcmask 261120
      %32 = vst.msk [vmem:[#allocation2] sm:$0xff] %vm31, 0.0
    $region25: #{my_loss.9} parent=1 // pred_fallthru
      _
    %v33 = vld [vmem:[%s2] sm:$0xf]
    %v34 = vld [vmem:[%s2 + $0x4] sm:$0xf]
    %v35 = vld [vmem:[%s2 + $0x8] sm:$0xf]
    %v36 = vld [vmem:[%s2 + $0xc] sm:$0xf]
    %v37 = vld [vmem:[%s2 + $0x10] sm:$0xf]
    %v38 = vld [vmem:[%s2 + $0x14] sm:$0xf]
    %v39 = vld [vmem:[%s2 + $0x18] sm:$0xf]
    %v40 = vld [vmem:[%s2 + $0x1c] sm:$0xf]
    %v41 = vld [vmem:[%s2 + $0x20] sm:$0xf]
    %v42 = vld [vmem:[%s2 + $0x24] sm:$0xf]
    %v43 = vld [vmem:[%s2 + $0x28] sm:$0xf]
    %v44 = vld [vmem:[%s2 + $0x2c] sm:$0xf]
    %v45 = vld [vmem:[%s2 + $0x30] sm:$0xf]
    %v46 = vld [vmem:[%s2 + $0x34] sm:$0xf]
    %v47 = vld [vmem:[%s2 + $0x38] sm:$0xf]
    %v48 = vld [vmem:[%s2 + $0x3c] sm:$0xf]
    %v49 = vld [vmem:[%s2 + $0x40] sm:$0xf]
    %v50 = vld [vmem:[%s2 + $0x44] sm:$0xf]
    %v51 = vld [vmem:[%s3] sm:$0x1]
    %v52 = vld [vmem:[%s0] sm:$0xff]
    %v53 = vld [vmem:[%s0 + $0x8] sm:$0xff]
    %v54 = vld [vmem:[%s0 + $0x10] sm:$0xff]
    %v55 = vld [vmem:[%s0 + $0x18] sm:$0xff]
    %v57 = vlaneseq
    %v58 = vshrl.u32 %v57, 7
    %v59 = vsub.s32 0, %v58
    %v60 = vrot.slane %v51, %v59
    %v66 = vunpack.c.l.b16 %v52
    %v67 = vunpack.c.h.b16 %v52
    %v68 = vunpack.c.l.b16 %v53
    %v69 = vunpack.c.h.b16 %v53
    %v70 = vunpack.c.l.b16 %v54
    %v71 = vunpack.c.h.b16 %v54
    %v72 = vunpack.c.l.b16 %v55
    %v73 = vunpack.c.h.b16 %v55
    %v74 = vpack.c.b16 %v68, %v66
    %v75 = vpack.c.b16 %v69, %v67
    %v76 = vpack.c.b16 %v72, %v70
    %v77 = vpack.c.b16 %v73, %v71
    %v98 = vunpack.c.l.b16 %v33
    %v99 = vunpack.c.l.b16 %v34
    %v100 = vunpack.c.l.b16 %v35
    %v101 = vunpack.c.l.b16 %v36
    %v102 = vunpack.c.l.b16 %v37
    %v103 = vunpack.c.l.b16 %v38
    %v104 = vunpack.c.l.b16 %v39
    %v105 = vunpack.c.l.b16 %v40
    %v106 = vunpack.c.l.b16 %v41
    %v107 = vunpack.c.l.b16 %v42
    %v108 = vunpack.c.l.b16 %v43
    %v109 = vunpack.c.l.b16 %v44
    %v110 = vunpack.c.l.b16 %v45
    %v111 = vunpack.c.l.b16 %v46
    %v112 = vunpack.c.l.b16 %v47
    %v113 = vunpack.c.l.b16 %v48
    %v114 = vunpack.c.l.b16 %v49
    %v115 = vunpack.c.l.b16 %v50
    %v116 = vpack.c.b16 %v99, %v98
    %v117 = vpack.c.b16 %v101, %v100
    %v118 = vpack.c.b16 %v103, %v102
    %v119 = vpack.c.b16 %v105, %v104
    %v120 = vpack.c.b16 %v107, %v106
    %v121 = vpack.c.b16 %v109, %v108
    %v122 = vpack.c.b16 %v111, %v110
    %v123 = vpack.c.b16 %v113, %v112
    %v124 = vpack.c.b16 %v115, %v114
    %vm134 = vcmask 130048
    %v136 = vsel %vm134, %v75, 0
    %v139 = vsel %vm134, %v77, 0
    %141 = vmatprep.subr.bf16.mxu0 0
    %142 = vmatpush1.bf16.msra.mxu0 %v123
    %143 = vmatprep.subr.bf16.mxu0 0
    %144 = vmatpush1.bf16.msra.mxu0 %v122
    %145 = vmatprep.subr.bf16.mxu0 0
    %146 = vmatpush1.bf16.msra.mxu0 %v121
    %147 = vmatprep.subr.bf16.mxu0 0
    %148 = vmatpush1.bf16.msra.mxu0 %v120
    %149 = vmatprep.subr.bf16.mxu0 0
    %150 = vmatpush1.bf16.msra.mxu0 %v119
    %151 = vmatprep.subr.bf16.mxu0 0
    %152 = vmatpush1.bf16.msra.mxu0 %v118
    %153 = vmatprep.subr.bf16.mxu0 0
    %154 = vmatpush1.bf16.msra.mxu0 %v117
    %155 = vmatprep.subr.bf16.mxu0 0
    %156 = vmatpush1.bf16.msra.mxu0 %v116
    %157 = vmatprep.subr.bf16.mxu0 0
    %158 = vmatpush2.bf16.msra.mxu0 0
    %159 = vmatprep.subr.bf16.mxu0 0
    %160 = vmatpush2.bf16.msra.mxu0 0
    %161 = vmatprep.subr.bf16.mxu0 0
    %162 = vmatpush2.bf16.msra.mxu0 0
    %163 = vmatprep.subr.bf16.mxu0 0
    %164 = vmatpush2.bf16.msra.mxu0 0
    %165 = vmatprep.subr.bf16.mxu0 0
    %166 = vmatpush2.bf16.msra.mxu0 0
    %167 = vmatprep.subr.bf16.mxu0 0
    %168 = vmatpush2.bf16.msra.mxu0 0
    %169 = vmatprep.subr.bf16.mxu0 0
    %170 = vmatpush2.bf16.msra.mxu0 0
    %171 = vmatprep.subr.bf16.mxu0 0
    %172 = vmatpush2.bf16.msra.mxu0 %v124
    %173 = vmatprep.mubr.bf16.mxu0 %v136
    %174 = vmatmul.mubr.bf16.gmra.mxu0 %v74
    %v175 = vpop.f32.mrf.mxu0
    %v176 = vadd.f32 %v60, %v175
    %v177 = vpop.f32.mrf.mxu0
    %v178 = vpop.f32.mrf.mxu0
    %v179 = vadd.f32 %v60, %v178
    %v180 = vpop.f32.mrf.mxu0
    %181 = vmatprep.mubr.bf16.mxu0 %v139
    %182 = vmatmul.mubr.bf16.gmra.mxu0 %v76
    %v183 = vpop.f32.mrf.mxu0
    %v184 = vadd.f32 %v60, %v183
    %v185 = vpop.f32.mrf.mxu0
    %v186 = vpop.f32.mrf.mxu0
    %v187 = vadd.f32 %v60, %v186
    %v188 = vpop.f32.mrf.mxu0
    %189 = vdwg.mxu0
    %v190 = vmax.f32 %v176, 0.0
    %v191 = vmax.f32 %v179, 0.0
    %v192 = vmax.f32 %v184, 0.0
    %v193 = vmax.f32 %v187, 0.0
    %v194 = vld [vmem:[%s1] sm:$0xff]
    %v195 = vld [vmem:[%s1 + $0x8] sm:$0xff]
    %v196 = vld [vmem:[%s1 + $0x10] sm:$0xff]
    %v197 = vld [vmem:[%s1 + $0x18] sm:$0xff]
    %v202 = vunpack.c.l.b16 %v194
    %v203 = vunpack.c.h.b16 %v194
    %v204 = vunpack.c.l.b16 %v195
    %v205 = vunpack.c.h.b16 %v195
    %v206 = vunpack.c.l.b16 %v196
    %v207 = vunpack.c.h.b16 %v196
    %v208 = vunpack.c.l.b16 %v197
    %v209 = vunpack.c.h.b16 %v197
    %v210 = vpack.c.b16 %v204, %v202
    %v211 = vpack.c.b16 %v205, %v203
    %v212 = vpack.c.b16 %v208, %v206
    %v213 = vpack.c.b16 %v209, %v207
    %v217 = vsel %vm134, %v211, 0
    %v220 = vsel %vm134, %v213, 0
    %222 = vmatprep.subr.bf16.mxu0 0
    %223 = vmatpush1.bf16.msra.mxu0 %v123
    %224 = vmatprep.subr.bf16.mxu0 0
    %225 = vmatpush1.bf16.msra.mxu0 %v122
    %226 = vmatprep.subr.bf16.mxu0 0
    %227 = vmatpush1.bf16.msra.mxu0 %v121
    %228 = vmatprep.subr.bf16.mxu0 0
    %229 = vmatpush1.bf16.msra.mxu0 %v120
    %230 = vmatprep.subr.bf16.mxu0 0
    %231 = vmatpush1.bf16.msra.mxu0 %v119
    %232 = vmatprep.subr.bf16.mxu0 0
    %233 = vmatpush1.bf16.msra.mxu0 %v118
    %234 = vmatprep.subr.bf16.mxu0 0
    %235 = vmatpush1.bf16.msra.mxu0 %v117
    %236 = vmatprep.subr.bf16.mxu0 0
    %237 = vmatpush1.bf16.msra.mxu0 %v116
    %238 = vmatprep.subr.bf16.mxu0 0
    %239 = vmatpush2.bf16.msra.mxu0 0
    %240 = vmatprep.subr.bf16.mxu0 0
    %241 = vmatpush2.bf16.msra.mxu0 0
    %242 = vmatprep.subr.bf16.mxu0 0
    %243 = vmatpush2.bf16.msra.mxu0 0
    %244 = vmatprep.subr.bf16.mxu0 0
    %245 = vmatpush2.bf16.msra.mxu0 0
    %246 = vmatprep.subr.bf16.mxu0 0
    %247 = vmatpush2.bf16.msra.mxu0 0
    %248 = vmatprep.subr.bf16.mxu0 0
    %249 = vmatpush2.bf16.msra.mxu0 0
    %250 = vmatprep.subr.bf16.mxu0 0
    %251 = vmatpush2.bf16.msra.mxu0 0
    %252 = vmatprep.subr.bf16.mxu0 0
    %253 = vmatpush2.bf16.msra.mxu0 %v124
    %254 = vmatprep.mubr.bf16.mxu0 %v217
    %255 = vmatmul.mubr.bf16.gmra.mxu0 %v210
    %v256 = vpop.f32.mrf.mxu0
    %v257 = vadd.f32 %v60, %v256
    %v258 = vpop.f32.mrf.mxu0
    %v259 = vpop.f32.mrf.mxu0
    %v260 = vadd.f32 %v60, %v259
    %v261 = vpop.f32.mrf.mxu0
    %262 = vmatprep.mubr.bf16.mxu0 %v220
    %263 = vmatmul.mubr.bf16.gmra.mxu0 %v212
    %v264 = vpop.f32.mrf.mxu0
    %v265 = vadd.f32 %v60, %v264
    %v266 = vpop.f32.mrf.mxu0
    %v267 = vpop.f32.mrf.mxu0
    %v268 = vadd.f32 %v60, %v267
    %v269 = vpop.f32.mrf.mxu0
    %270 = vdwg.mxu0
    %v271 = vmax.f32 %v257, 0.0
    %v272 = vmax.f32 %v260, 0.0
    %v273 = vmax.f32 %v265, 0.0
    %v274 = vmax.f32 %v268, 0.0
    %v275 = vpack.c.bf16 %v191, %v190
    %v276 = vpack.c.bf16 %v193, %v192
    %v279 = vunpack.c.l.b16 %v275
    %v280 = vunpack.c.h.b16 %v275
    %v281 = vunpack.c.l.b16 %v276
    %v282 = vunpack.c.h.b16 %v276
    %v283 = vpack.c.b16 %v279, %v279
    %v284 = vpack.c.b16 %v280, %v280
    %v285 = vpack.c.b16 %v281, %v281
    %v286 = vpack.c.b16 %v282, %v282
    %vm291 = vcmask 257024
    %292 = vst.msk [vmem:[#allocation3] sm:$0xf] %vm291, %v283
    %293 = vst.msk [vmem:[#allocation3 + $0x4] sm:$0xf] %vm291, %v284
    %294 = vst.msk [vmem:[#allocation3 + $0x8] sm:$0xf] %vm291, %v285
    %295 = vst.msk [vmem:[#allocation3 + $0xc] sm:$0xf] %vm291, %v286
    %v296 = vpack.c.bf16 %v272, %v271
    %v297 = vpack.c.bf16 %v274, %v273
    %v300 = vunpack.c.l.b16 %v296
    %v301 = vunpack.c.h.b16 %v296
    %v302 = vunpack.c.l.b16 %v297
    %v303 = vunpack.c.h.b16 %v297
    %v304 = vpack.c.b16 %v300, %v300
    %v305 = vpack.c.b16 %v301, %v301
    %v306 = vpack.c.b16 %v302, %v302
    %v307 = vpack.c.b16 %v303, %v303
    %312 = vst.msk [vmem:[#allocation6] sm:$0xf] %vm291, %v304
    %313 = vst.msk [vmem:[#allocation6 + $0x4] sm:$0xf] %vm291, %v305
    %314 = vst.msk [vmem:[#allocation6 + $0x8] sm:$0xf] %vm291, %v306
    %315 = vst.msk [vmem:[#allocation6 + $0xc] sm:$0xf] %vm291, %v307
    %v316 = vmul.f32 %v190, %v190
    %v317 = vmul.f32 %v191, %v191
    %v318 = vmul.f32 %v192, %v192
    %v319 = vmul.f32 %v193, %v193
    %vm320 = vcmask 261120
    %v321 = vsel %vm320, %v316, 0.0
    %322 = vadd.xlane.f32.xlu0 %v321
    %v323 = vpop.xlane.xlu0 %322
    %v324 = vsel %vm320, %v317, 0.0
    %325 = vadd.xlane.f32.xlu0 %v324
    %v326 = vpop.xlane.xlu0 %325
    %v327 = vsel %vm320, %v318, 0.0
    %328 = vadd.xlane.f32.xlu0 %v327
    %v329 = vpop.xlane.xlu0 %328
    %v330 = vsel %vm320, %v319, 0.0
    %331 = vadd.xlane.f32.xlu0 %v330
    %v332 = vpop.xlane.xlu0 %331
    %v333 = vadd.f32 %v323, 1e-12
    %v334 = vadd.f32 %v326, 1e-12
    %v335 = vadd.f32 %v329, 1e-12
    %v336 = vadd.f32 %v332, 1e-12
    %v337 = vrsqrt.pop %v333
    %v338 = vrsqrt.pop %v334
    %v339 = vrsqrt.pop %v335
    %v340 = vrsqrt.pop %v336
    %v341 = vmul.f32 %v190, %v337
    %v342 = vmul.f32 %v191, %v338
    %v343 = vmul.f32 %v192, %v339
    %v344 = vmul.f32 %v193, %v340
    %v345 = vmul.f32 %v271, %v271
    %v346 = vmul.f32 %v272, %v272
    %v347 = vmul.f32 %v273, %v273
    %v348 = vmul.f32 %v274, %v274
    %v349 = vsel %vm320, %v345, 0.0
    %350 = vadd.xlane.f32.xlu0 %v349
    %v351 = vpop.xlane.xlu0 %350
    %v352 = vsel %vm320, %v346, 0.0
    %353 = vadd.xlane.f32.xlu0 %v352
    %v354 = vpop.xlane.xlu0 %353
    %v355 = vsel %vm320, %v347, 0.0
    %356 = vadd.xlane.f32.xlu0 %v355
    %v357 = vpop.xlane.xlu0 %356
    %v358 = vsel %vm320, %v348, 0.0
    %359 = vadd.xlane.f32.xlu0 %v358
    %v360 = vpop.xlane.xlu0 %359
    %v361 = vadd.f32 %v351, 1e-12
    %v362 = vadd.f32 %v354, 1e-12
    %v363 = vadd.f32 %v357, 1e-12
    %v364 = vadd.f32 %v360, 1e-12
    %v365 = vrsqrt.pop %v361
    %v366 = vrsqrt.pop %v362
    %v367 = vrsqrt.pop %v363
    %v368 = vrsqrt.pop %v364
    %v369 = vmul.f32 %v271, %v365
    %v370 = vmul.f32 %v272, %v366
    %v371 = vmul.f32 %v273, %v367
    %v372 = vmul.f32 %v274, %v368
    %v373 = vsub.f32 %v341, %v369
    %v374 = vsub.f32 %v342, %v370
    %v375 = vsub.f32 %v343, %v371
    %v376 = vsub.f32 %v344, %v372
    %v377 = vmul.f32 %v373, %v373
    %v378 = vmul.f32 %v374, %v374
    %v379 = vmul.f32 %v375, %v375
    %v380 = vmul.f32 %v376, %v376
    %v381 = vld [vmem:[%s4] sm:$0x1]
    %v383 = vlaneseq
    %v384 = vshrl.u32 %v383, 7
    %v385 = vsub.s32 0, %v384
    %v386 = vrot.slane %v381, %v385
    %v388 = vmul.f32 %v377, %v386
    %v389 = vmul.f32 %v378, %v386
    %v390 = vmul.f32 %v379, %v386
    %v391 = vmul.f32 %v380, %v386
    %v392 = vld [vmem:[#allocation2] sm:$0xff]
    %v393 = vsel %vm320, %v388, 0.0
    %v394 = vsel %vm320, %v389, 0.0
    %v395 = vadd.f32 %v393, %v394
    %v396 = vsel %vm320, %v390, 0.0
    %v397 = vadd.f32 %v395, %v396
    %v398 = vsel %vm320, %v391, 0.0
    %v399 = vadd.f32 %v397, %v398
    %v400 = vadd.f32 %v392, %v399
    %401 = vst.msk [vmem:[#allocation2] sm:$0xff] %vm320, %v400
    // Predicated region
    $region26: #{my_loss.9} parent=1 // pred_check
      %p402 = pneg %p27
    $region27: #{my_loss.9} parent=1 // pred_check_branch
      %404 = sbr.rel (%p402) target = $region29
    $region28: #{my_loss.9} parent=1 // pred_region
      %v405 = vld [vmem:[#allocation2] sm:$0xff]
      %v406 = vsel %vm320, %v405, 0.0
      %407 = vadd.xlane.f32.xlu0 %v406
      %v408 = vpop.xlane.xlu0 %407
      %v409 = vrot.slane %v408, 4
      %v410 = vadd.f32 %v408, %v409
      %v411 = vrot.slane %v410, 2
      %v412 = vadd.f32 %v410, %v411
      %v413 = vrot.slane %v412, 1
      %v414 = vadd.f32 %v412, %v413
      %s415 = vtos %v414
      %s416 = scalar_lea.smem [#allocation8], 0
      %417 = sst [smem:[%s416]] %s415
    $region29: #{my_loss.9} parent=1 // pred_fallthru
      _
    // Predicated region
    $region30: #{my_loss.9} parent=1 // pred_check
      _
    $region31: #{my_loss.9} parent=1 // pred_check_branch
      %419 = sbr.rel (0) target = $region33
    $region32: #{my_loss.9} parent=1 // pred_region
      %s421 = ssub.s32 256, 256
      %422 = vsyncadd [#allocation4], %s421
      %s423 = sshll.u32 [#allocation3], 4
      %s424 = int_to_ptr.vmem [resolvable:$true] %s423
      %429 = dma.vmem_to_hbm [thread:$0]  %s424, 256, %s5, [#allocation4], 64, 64, 4
    $region33: #{my_loss.9} parent=1 // pred_fallthru
      _
    // Predicated region
    $region34: #{my_loss.9} parent=1 // pred_check
      _
    $region35: #{my_loss.9} parent=1 // pred_check_branch
      %431 = sbr.rel (0) target = $region37
    $region36: #{my_loss.9} parent=1 // pred_region
      %s433 = ssub.s32 256, 256
      %434 = vsyncadd [#allocation7], %s433
      %s435 = sshll.u32 [#allocation6], 4
      %s436 = int_to_ptr.vmem [resolvable:$true] %s435
      %441 = dma.vmem_to_hbm [thread:$0]  %s436, 256, %s6, [#allocation7], 64, 64, 4
    $region37: #{my_loss.9} parent=1 // pred_fallthru
      _
    // Predicated region
    $region38: #{my_loss.9} parent=1 // pred_check
      _
    $region39: #{my_loss.9} parent=1 // pred_check_branch
      %443 = sbr.rel (0) target = $region41
    $region40: #{my_loss.9} parent=1 // pred_region
      %s445 = ssub.s32 16, 16
      %446 = vsyncadd [#allocation5], %s445
      %449 = dma.smem_to_hbm [#allocation8], 16, %s7, [#allocation5]
    $region41: #{my_loss.9} parent=1 // pred_fallthru
      _
    // Predicated region
    $region42: #{my_loss.9} parent=1 // pred_check
      _
    $region43: #{my_loss.9} parent=1 // pred_check_branch
      %451 = sbr.rel (0) target = $region45
    $region44: #{my_loss.9} parent=1 // pred_region
      %452 = dma.done [#allocation4], 256
    $region45: #{my_loss.9} parent=1 // pred_fallthru
      _
    // Predicated region
    $region46: #{my_loss.9} parent=1 // pred_check
      _
    $region47: #{my_loss.9} parent=1 // pred_check_branch
      %454 = sbr.rel (0) target = $region49
    $region48: #{my_loss.9} parent=1 // pred_region
      %455 = dma.done [#allocation7], 256
    $region49: #{my_loss.9} parent=1 // pred_fallthru
      _
    // Predicated region
    $region50: #{my_loss.9} parent=1 // pred_check
      _
    $region51: #{my_loss.9} parent=1 // pred_check_branch
      %457 = sbr.rel (0) target = $region53
    $region52: #{my_loss.9} parent=1 // pred_region
      %458 = dma.done [#allocation5], 16
    $region53: #{my_loss.9} parent=1 // pred_fallthru
      _
    %459 = sfence
    %460 = vsyncpa [#allocation4], 1
    %461 = vsyncpa [#allocation7], 1
    %462 = vsyncpa [#allocation5], 1

</llo_original>
